<compile_context>
chip_gen: v7x
topology: tpu7x:2x2x1
jax: 0.10.0
libtpu: 0.0.40
codegen_flags: <defaults>
</compile_context>

<pallas_src>
import jax
import jax.numpy as jnp
from jax.experimental import pallas as pl
from jax.experimental.pallas import tpu as pltpu


# ----------------------------- Pallas kernel -------------------------------- #
def _cheb_layer(lbd_ref, x, w_wide, bias, K, cp):
    """relu( sum_k blockdiag(T_k) @ (x @ W_k) + bias ).

    Per-k weight blocks are zero-padded to `cp` (multiple of 128) lanes, so the
    xw column slices below are vreg-aligned views (no cross-lane copies).
    """
    xw = jnp.dot(x, w_wide, preferred_element_type=jnp.float32)       # (M, K*cp), f32 acc
    xw = xw.astype(lbd_ref.dtype)                                     # MXU input dtype
    acc = jnp.dot(lbd_ref[0], xw[:, :cp], preferred_element_type=jnp.float32)
    for k in range(1, K):                                             # K tiny accumulating MXU ops
        acc = acc + jnp.dot(lbd_ref[k], xw[:, k * cp:(k + 1) * cp],
                            preferred_element_type=jnp.float32)
    return jnp.maximum(acc + bias, 0.0)                               # f32 bias + ReLU epilogue


def chebnet_fused_kernel(lbd_ref, x_ref, w1_ref, b1_ref, w2_ref, b2_ref, o_ref):
    # lbd_ref : (K, M, M)     block-diagonal-over-batch Chebyshev stack, M = B_tile*Np
    # x_ref   : (M, C_in)     one batch tile (pre-flattened in the wrapper)
    # w1_ref  : (C_in, K*CP1) W1 with per-k blocks padded to CP1 lanes
    # b1_ref  : (1, CP1)
    # w2_ref  : (CP1, K*CP2)
    # b2_ref  : (1, CP2)
    # o_ref   : (M, CP2)      lane-dense padded output block
    K = lbd_ref.shape[0]
    cp1 = b1_ref.shape[-1]
    cp2 = b2_ref.shape[-1]

    x = x_ref[...]
    h = _cheb_layer(lbd_ref, x, w1_ref[...], b1_ref[...], K, cp1)     # (M, cp1) f32
    h = h.astype(x.dtype)                                             # compute dtype for layer-2 MXU
    o = _cheb_layer(lbd_ref, h, w2_ref[...], b2_ref[...], K, cp2)     # (M, cp2) f32
    o_ref[...] = o.astype(o_ref.dtype)


# ----------------------------- JAX glue (setup) ------------------------------ #
def get_laplacian(graph):
    # normalized Laplacian:  L = I - D^{-1/2} A D^{-1/2}  (guarded against zero degree)
    deg = jnp.sum(graph, axis=-1)
    d = jnp.where(deg > 0, deg, 1.0) ** -0.5
    d = jnp.where(deg > 0, d, 0.0)
    D = jnp.diag(d)
    n = graph.shape[0]
    return jnp.eye(n, dtype=graph.dtype) - D @ graph @ D


def cheb_polynomial(L, K):
    # stack (K, N, N): T_0 = I, T_1 = L, T_k = 2 L T_{k-1} - T_{k-2}
    n = L.shape[0]
    polys = [jnp.eye(n, dtype=jnp.float32)]
    if K > 1:
        polys.append(L.astype(jnp.float32))
    for _ in range(2, K):
        polys.append(2.0 * (L @ polys[-1]) - polys[-2])
    return jnp.stack(polys, axis=0)


def xavier_normal(key, shape_4d):
    # matches torch.nn.init.xavier_normal_ fan computation for (K+1, 1, Cin, Cout)
    Kp1, one, cin, cout = shape_4d
    receptive = cin * cout
    fan_in, fan_out = one * receptive, Kp1 * receptive
    std = (2.0 / (fan_in + fan_out)) ** 0.5
    return std * jax.random.normal(key, shape_4d, dtype=jnp.float32)


def _round_up(v, m):
    return -(-v // m) * m


def chebnet_forward(flow_x, graph, params, compute_dtype=jnp.float32):
    """flow_x: (B, N, H, T) -> (B, N, out_c, 1), mirroring ChebNet.forward."""
    B, N, H, _ = flow_x.shape
    x = flow_x[:, :, :, -1].reshape(B, N, H)          # last time step, in_c = H

    K = params["w1"].shape[0]                         # = cheb order + 1
    hid = params["w1"].shape[-1]
    out_c = params["w2"].shape[-1]

    # ---- tiling: fold the batch, keep >=2 parallel grid steps for v7x's 2 TCs ----
    num_tiles = 2 if B >= 2 else 1
    B_tile = -(-B // num_tiles)                       # ceil(B / num_tiles)
    B_pad = num_tiles * B_tile
    Np = _round_up(N, 8)                              # sublane-align node dim
    M = B_tile * Np                                   # rows per grid step
    cp1 = _round_up(hid, 128)                         # per-k lane blocks padded to 128
    cp2 = _round_up(out_c, 128)

    # ---- Laplacian / Chebyshev stack (tiny one-time plain-JAX setup) -------------
    L = get_laplacian(graph)
    mul_L = cheb_polynomial(L, K)                                   # (K, N, N)
    mul_L = jnp.pad(mul_L, ((0, 0), (0, Np - N), (0, Np - N)))      # zero-pad nodes
    eyeB = jnp.eye(B_tile, dtype=mul_L.dtype)
    l_bd = jnp.einsum("bc,knm->kbncm", eyeB, mul_L).reshape(K, M, M)  # block-diag over tile

    # ---- weight / bias layouts: per-k blocks padded to 128 lanes -----------------
    w1 = params["w1"][:, 0]                                         # (K, H, hid)
    w2 = params["w2"][:, 0]                                         # (K, hid, out_c)
    w1_wide = jnp.pad(w1, ((0, 0), (0, 0), (0, cp1 - hid)))
    w1_wide = w1_wide.transpose(1, 0, 2).reshape(H, K * cp1)        # [h, k*cp1+d] = W1[k,h,d]
    w2_wide = jnp.pad(w2, ((0, 0), (0, cp1 - hid), (0, cp2 - out_c)))
    w2_wide = w2_wide.transpose(1, 0, 2).reshape(cp1, K * cp2)      # [c, k*cp2+d] = W2[k,c,d]
    b1 = jnp.pad(params["b1"].reshape(1, hid), ((0, 0), (0, cp1 - hid))).astype(jnp.float32)
    b2 = jnp.pad(params["b2"].reshape(1, out_c), ((0, 0), (0, cp2 - out_c))).astype(jnp.float32)

    # ---- X as a single 2-D slab (one lane-era operand, no per-step 3-D squeeze) ---
    x_p = jnp.pad(x, ((0, B_pad - B), (0, Np - N), (0, 0)))
    x_flat = x_p.reshape(B_pad * Np, H)

    # MXU-input dtype (bf16 recommended on v6e/v7x when accuracy budget allows).
    l_bd = l_bd.astype(compute_dtype)
    x_flat = x_flat.astype(compute_dtype)
    w1_wide = w1_wide.astype(compute_dtype)
    w2_wide = w2_wide.astype(compute_dtype)

    operands = (l_bd, x_flat, w1_wide, b1, w2_wide, b2)
    flops = 2 * num_tiles * (M * H * K * cp1 + K * M * M * cp1
                             + M * cp1 * K * cp2 + K * M * M * cp2)
    bytes_accessed = sum(int(a.size) * a.dtype.itemsize for a in operands)
    bytes_accessed += B_pad * Np * cp2 * 4

    def build(single_buffer_invariants):
        # Grid-invariant operands: request single buffering (their index maps are
        # constant so the DMA is skipped after step 0; this halves their VMEM).
        inv = ({"pipeline_mode": pl.Buffered(1)} if single_buffer_invariants else {})
        in_specs = [
            pl.BlockSpec((K, M, M), lambda t: (0, 0, 0), **inv),   # Chebyshev stack (shared)
            pl.BlockSpec((M, H), lambda t: (t, 0)),                # one batch tile
            pl.BlockSpec((H, K * cp1), lambda t: (0, 0), **inv),   # layer-1 weights
            pl.BlockSpec((1, cp1), lambda t: (0, 0), **inv),       # layer-1 bias
            pl.BlockSpec((cp1, K * cp2), lambda t: (0, 0), **inv), # layer-2 weights
            pl.BlockSpec((1, cp2), lambda t: (0, 0), **inv),       # layer-2 bias
        ]
        return pl.pallas_call(
            chebnet_fused_kernel,
            out_shape=jax.ShapeDtypeStruct((B_pad * Np, cp2), jnp.float32),
            grid=(num_tiles,),
            in_specs=in_specs,
            out_specs=pl.BlockSpec((M, cp2), lambda t: (t, 0)),    # lane-dense (128) store
            compiler_params=pltpu.CompilerParams(
                dimension_semantics=("parallel",),                 # v7x: one tile per TC
                vmem_limit_bytes=32 * 1024 * 1024,                 # << v7x 64 MiB physical
            ),
            cost_estimate=pl.CostEstimate(
                flops=int(flops), transcendentals=0, bytes_accessed=int(bytes_accessed)),
        )

    try:
        out_flat = jax.block_until_ready(build(True)(*operands))
    except Exception:
        # pipeline_mode=pl.Buffered(1) unsupported in this build -> default double buffering.
        out_flat = build(False)(*operands)

    out = out_flat.reshape(B_pad, Np, cp2)[:B, :N, :out_c]
    return out[..., None]                                          # (B, N, out_c, 1)


# ----------------------------- pure-JAX reference ---------------------------- #
def chebnet_reference(flow_x, graph, params):
    B, N, H, _ = flow_x.shape
    x = flow_x[:, :, :, -1][..., None].reshape(B, N, -1)
    L = get_laplacian(graph)
    K = params["w1"].shape[0]
    mul_L = cheb_polynomial(L, K)[:, None]                         # (K,1,N,N)

    def conv(xin, w, b):
        r = jnp.einsum("kbnm,bmc->kbnc", jnp.broadcast_to(mul_L, (K, B, N, N)), xin)
        r = jnp.einsum("kbnc,kcd->kbnd", r, w[:, 0])
        return jax.nn.relu(jnp.sum(r, axis=0) + b)

    o1 = conv(x, params["w1"], params["b1"])
    o2 = conv(o1, params["w2"], params["b2"])
    return o2[..., None]


# ------------------------------------ main ----------------------------------- #
if __name__ == "__main__":
    key = jax.random.PRNGKey(0)
    kg, kx, kw1, kw2 = jax.random.split(key, 4)

    # small shapes consistent with the module (B=4 exercises the batch-tile fold: B_tile=2)
    B, N, H, T = 4, 16, 8, 3          # in_c = H = 8
    hid_c, out_c, Kcheb = 32, 8, 3    # ChebConv stores K+1 = 4 polynomials
    Kp1 = Kcheb + 1

    # symmetric positive adjacency (strictly positive degrees)
    a = jax.random.uniform(kg, (N, N), dtype=jnp.float32, minval=0.1, maxval=1.0)
    graph = 0.5 * (a + a.T)

    flow_x = jax.random.normal(kx, (B, N, H, T), dtype=jnp.float32)

    params = {
        "w1": xavier_normal(kw1, (Kp1, 1, H, hid_c)),
        "b1": jnp.zeros((1, 1, hid_c), dtype=jnp.float32),
        "w2": xavier_normal(kw2, (Kp1, 1, hid_c, out_c)),
        "b2": jnp.zeros((1, 1, out_c), dtype=jnp.float32),
    }

    # f32 compute so numerics match the PyTorch module; use jnp.bfloat16 on v6e/v7x
    # (keeping the f32 accumulation + f32 bias/ReLU epilogue) for ~2x MXU rate.
    out = jax.block_until_ready(chebnet_forward(flow_x, graph, params,
                                                compute_dtype=jnp.float32))
    ref = jax.block_until_ready(chebnet_reference(flow_x, graph, params))

    assert out.shape == (B, N, out_c, 1), out.shape
    assert jnp.allclose(out, ref, atol=1e-4, rtol=1e-4), float(jnp.max(jnp.abs(out - ref)))
    print("KERNEL_OK")
</pallas_src>

<mosaic_0001>
module attributes {stable_mosaic.version = 11 : i64} {
  func.func @chebnet_fused_kernel(%arg0: i32, %arg1: memref<4x32x32xf32, #tpu.memory_space<vmem>>, %arg2: memref<32x8xf32, #tpu.memory_space<vmem>>, %arg3: memref<8x512xf32, #tpu.memory_space<vmem>>, %arg4: memref<1x128xf32, #tpu.memory_space<vmem>>, %arg5: memref<128x512xf32, #tpu.memory_space<vmem>>, %arg6: memref<1x128xf32, #tpu.memory_space<vmem>>, %arg7: memref<32x128xf32, #tpu.memory_space<vmem>>) attributes {dimension_semantics = [#tpu.dimension_semantics<parallel>], iteration_bounds = array<i64: 2>, scalar_prefetch = 0 : i64, scratch_operands = 0 : i64, tpu.core_type = #tpu.core_type<tc>, window_params = [{pipeline_mode = #tpu.pipeline_mode<synchronous>, transform_indices = @transform_0, window_bounds = array<i64: 4, 32, 32>}, {transform_indices = @transform_1, window_bounds = array<i64: 32, 8>}, {pipeline_mode = #tpu.pipeline_mode<synchronous>, transform_indices = @transform_2, window_bounds = array<i64: 8, 512>}, {pipeline_mode = #tpu.pipeline_mode<synchronous>, transform_indices = @transform_3, window_bounds = array<i64: 1, 128>}, {pipeline_mode = #tpu.pipeline_mode<synchronous>, transform_indices = @transform_4, window_bounds = array<i64: 128, 512>}, {pipeline_mode = #tpu.pipeline_mode<synchronous>, transform_indices = @transform_5, window_bounds = array<i64: 1, 128>}, {transform_indices = @transform_6, window_bounds = array<i64: 32, 128>}]} {
    %c0 = arith.constant 0 : index
    %c0_0 = arith.constant 0 : index
    %0 = vector.load %arg2[%c0, %c0_0] : memref<32x8xf32, #tpu.memory_space<vmem>>, vector<32x8xf32>
    %c0_1 = arith.constant 0 : index
    %c0_2 = arith.constant 0 : index
    %1 = vector.load %arg3[%c0_1, %c0_2] : memref<8x512xf32, #tpu.memory_space<vmem>>, vector<8x512xf32>
    %c0_3 = arith.constant 0 : index
    %c0_4 = arith.constant 0 : index
    %2 = vector.load %arg4[%c0_3, %c0_4] : memref<1x128xf32, #tpu.memory_space<vmem>>, vector<1x128xf32>
    %cst = arith.constant dense<0.000000e+00> : vector<32x512xf32>
    %3 = tpu.matmul %0, %1, %cst {dimension_numbers = #tpu.dot_dimension_numbers<[1], [0], [0], [1], [0, 0, 1, 1], [], []>} : vector<32x8xf32>, vector<8x512xf32>, vector<32x512xf32> -> vector<32x512xf32>
    %c0_5 = arith.constant 0 : index
    %c0_6 = arith.constant 0 : index
    %c0_7 = arith.constant 0 : index
    %4 = vector.load %arg1[%c0_5, %c0_6, %c0_7] : memref<4x32x32xf32, #tpu.memory_space<vmem>>, vector<1x32x32xf32>
    %5 = vector.shape_cast %4 : vector<1x32x32xf32> to vector<32x32xf32>
    %6 = vector.extract_strided_slice %3 {offsets = [0, 0], sizes = [32, 128], strides = [1, 1]} : vector<32x512xf32> to vector<32x128xf32>
    %cst_8 = arith.constant dense<0.000000e+00> : vector<32x128xf32>
    %7 = tpu.matmul %5, %6, %cst_8 {dimension_numbers = #tpu.dot_dimension_numbers<[1], [0], [0], [1], [0, 0, 1, 1], [], []>} : vector<32x32xf32>, vector<32x128xf32>, vector<32x128xf32> -> vector<32x128xf32>
    %c1 = arith.constant 1 : index
    %c0_9 = arith.constant 0 : index
    %c0_10 = arith.constant 0 : index
    %8 = vector.load %arg1[%c1, %c0_9, %c0_10] : memref<4x32x32xf32, #tpu.memory_space<vmem>>, vector<1x32x32xf32>
    %9 = vector.shape_cast %8 : vector<1x32x32xf32> to vector<32x32xf32>
    %10 = vector.extract_strided_slice %3 {offsets = [0, 128], sizes = [32, 128], strides = [1, 1]} : vector<32x512xf32> to vector<32x128xf32>
    %cst_11 = arith.constant dense<0.000000e+00> : vector<32x128xf32>
    %11 = tpu.matmul %9, %10, %cst_11 {dimension_numbers = #tpu.dot_dimension_numbers<[1], [0], [0], [1], [0, 0, 1, 1], [], []>} : vector<32x32xf32>, vector<32x128xf32>, vector<32x128xf32> -> vector<32x128xf32>
    %12 = arith.addf %7, %11 : vector<32x128xf32>
    %c2 = arith.constant 2 : index
    %c0_12 = arith.constant 0 : index
    %c0_13 = arith.constant 0 : index
    %13 = vector.load %arg1[%c2, %c0_12, %c0_13] : memref<4x32x32xf32, #tpu.memory_space<vmem>>, vector<1x32x32xf32>
    %14 = vector.shape_cast %13 : vector<1x32x32xf32> to vector<32x32xf32>
    %15 = vector.extract_strided_slice %3 {offsets = [0, 256], sizes = [32, 128], strides = [1, 1]} : vector<32x512xf32> to vector<32x128xf32>
    %cst_14 = arith.constant dense<0.000000e+00> : vector<32x128xf32>
    %16 = tpu.matmul %14, %15, %cst_14 {dimension_numbers = #tpu.dot_dimension_numbers<[1], [0], [0], [1], [0, 0, 1, 1], [], []>} : vector<32x32xf32>, vector<32x128xf32>, vector<32x128xf32> -> vector<32x128xf32>
    %17 = arith.addf %12, %16 : vector<32x128xf32>
    %c3 = arith.constant 3 : index
    %c0_15 = arith.constant 0 : index
    %c0_16 = arith.constant 0 : index
    %18 = vector.load %arg1[%c3, %c0_15, %c0_16] : memref<4x32x32xf32, #tpu.memory_space<vmem>>, vector<1x32x32xf32>
    %19 = vector.shape_cast %18 : vector<1x32x32xf32> to vector<32x32xf32>
    %20 = vector.extract_strided_slice %3 {offsets = [0, 384], sizes = [32, 128], strides = [1, 1]} : vector<32x512xf32> to vector<32x128xf32>
    %cst_17 = arith.constant dense<0.000000e+00> : vector<32x128xf32>
    %21 = tpu.matmul %19, %20, %cst_17 {dimension_numbers = #tpu.dot_dimension_numbers<[1], [0], [0], [1], [0, 0, 1, 1], [], []>} : vector<32x32xf32>, vector<32x128xf32>, vector<32x128xf32> -> vector<32x128xf32>
    %22 = arith.addf %17, %21 : vector<32x128xf32>
    %23 = vector.broadcast %2 : vector<1x128xf32> to vector<32x128xf32>
    %24 = arith.addf %22, %23 : vector<32x128xf32>
    %cst_18 = arith.constant 0.000000e+00 : f32
    %25 = vector.broadcast %cst_18 : f32 to vector<32x128xf32>
    %26 = arith.maximumf %24, %25 : vector<32x128xf32>
    %c0_19 = arith.constant 0 : index
    %c0_20 = arith.constant 0 : index
    %27 = vector.load %arg5[%c0_19, %c0_20] : memref<128x512xf32, #tpu.memory_space<vmem>>, vector<128x512xf32>
    %c0_21 = arith.constant 0 : index
    %c0_22 = arith.constant 0 : index
    %28 = vector.load %arg6[%c0_21, %c0_22] : memref<1x128xf32, #tpu.memory_space<vmem>>, vector<1x128xf32>
    %cst_23 = arith.constant dense<0.000000e+00> : vector<32x512xf32>
    %29 = tpu.matmul %26, %27, %cst_23 {dimension_numbers = #tpu.dot_dimension_numbers<[1], [0], [0], [1], [0, 0, 1, 1], [], []>} : vector<32x128xf32>, vector<128x512xf32>, vector<32x512xf32> -> vector<32x512xf32>
    %c0_24 = arith.constant 0 : index
    %c0_25 = arith.constant 0 : index
    %c0_26 = arith.constant 0 : index
    %30 = vector.load %arg1[%c0_24, %c0_25, %c0_26] : memref<4x32x32xf32, #tpu.memory_space<vmem>>, vector<1x32x32xf32>
    %31 = vector.shape_cast %30 : vector<1x32x32xf32> to vector<32x32xf32>
    %32 = vector.extract_strided_slice %29 {offsets = [0, 0], sizes = [32, 128], strides = [1, 1]} : vector<32x512xf32> to vector<32x128xf32>
    %cst_27 = arith.constant dense<0.000000e+00> : vector<32x128xf32>
    %33 = tpu.matmul %31, %32, %cst_27 {dimension_numbers = #tpu.dot_dimension_numbers<[1], [0], [0], [1], [0, 0, 1, 1], [], []>} : vector<32x32xf32>, vector<32x128xf32>, vector<32x128xf32> -> vector<32x128xf32>
    %c1_28 = arith.constant 1 : index
    %c0_29 = arith.constant 0 : index
    %c0_30 = arith.constant 0 : index
    %34 = vector.load %arg1[%c1_28, %c0_29, %c0_30] : memref<4x32x32xf32, #tpu.memory_space<vmem>>, vector<1x32x32xf32>
    %35 = vector.shape_cast %34 : vector<1x32x32xf32> to vector<32x32xf32>
    %36 = vector.extract_strided_slice %29 {offsets = [0, 128], sizes = [32, 128], strides = [1, 1]} : vector<32x512xf32> to vector<32x128xf32>
    %cst_31 = arith.constant dense<0.000000e+00> : vector<32x128xf32>
    %37 = tpu.matmul %35, %36, %cst_31 {dimension_numbers = #tpu.dot_dimension_numbers<[1], [0], [0], [1], [0, 0, 1, 1], [], []>} : vector<32x32xf32>, vector<32x128xf32>, vector<32x128xf32> -> vector<32x128xf32>
    %38 = arith.addf %33, %37 : vector<32x128xf32>
    %c2_32 = arith.constant 2 : index
    %c0_33 = arith.constant 0 : index
    %c0_34 = arith.constant 0 : index
    %39 = vector.load %arg1[%c2_32, %c0_33, %c0_34] : memref<4x32x32xf32, #tpu.memory_space<vmem>>, vector<1x32x32xf32>
    %40 = vector.shape_cast %39 : vector<1x32x32xf32> to vector<32x32xf32>
    %41 = vector.extract_strided_slice %29 {offsets = [0, 256], sizes = [32, 128], strides = [1, 1]} : vector<32x512xf32> to vector<32x128xf32>
    %cst_35 = arith.constant dense<0.000000e+00> : vector<32x128xf32>
    %42 = tpu.matmul %40, %41, %cst_35 {dimension_numbers = #tpu.dot_dimension_numbers<[1], [0], [0], [1], [0, 0, 1, 1], [], []>} : vector<32x32xf32>, vector<32x128xf32>, vector<32x128xf32> -> vector<32x128xf32>
    %43 = arith.addf %38, %42 : vector<32x128xf32>
    %c3_36 = arith.constant 3 : index
    %c0_37 = arith.constant 0 : index
    %c0_38 = arith.constant 0 : index
    %44 = vector.load %arg1[%c3_36, %c0_37, %c0_38] : memref<4x32x32xf32, #tpu.memory_space<vmem>>, vector<1x32x32xf32>
    %45 = vector.shape_cast %44 : vector<1x32x32xf32> to vector<32x32xf32>
    %46 = vector.extract_strided_slice %29 {offsets = [0, 384], sizes = [32, 128], strides = [1, 1]} : vector<32x512xf32> to vector<32x128xf32>
    %cst_39 = arith.constant dense<0.000000e+00> : vector<32x128xf32>
    %47 = tpu.matmul %45, %46, %cst_39 {dimension_numbers = #tpu.dot_dimension_numbers<[1], [0], [0], [1], [0, 0, 1, 1], [], []>} : vector<32x32xf32>, vector<32x128xf32>, vector<32x128xf32> -> vector<32x128xf32>
    %48 = arith.addf %43, %47 : vector<32x128xf32>
    %49 = vector.broadcast %28 : vector<1x128xf32> to vector<32x128xf32>
    %50 = arith.addf %48, %49 : vector<32x128xf32>
    %cst_40 = arith.constant 0.000000e+00 : f32
    %51 = vector.broadcast %cst_40 : f32 to vector<32x128xf32>
    %52 = arith.maximumf %50, %51 : vector<32x128xf32>
    %c0_41 = arith.constant 0 : index
    %c0_42 = arith.constant 0 : index
    %53 = vector.load %arg7[%c0_41, %c0_42] : memref<32x128xf32, #tpu.memory_space<vmem>>, vector<32x128xf32>
    tpu.vector_store %arg7[%c0_41, %c0_42], %52 {strides = array<i32>} : memref<32x128xf32, #tpu.memory_space<vmem>>, vector<32x128xf32>,
    return
  }
  func.func @transform_0(%arg0: i32) -> (i32, i32, i32) {
    %c0_i32 = arith.constant 0 : i32
    %c0_i32_0 = arith.constant 0 : i32
    %c0_i32_1 = arith.constant 0 : i32
    %c0_i32_2 = arith.constant 0 : i32
    return %c0_i32, %c0_i32_0, %c0_i32_1 : i32, i32, i32
  }
  func.func @transform_1(%arg0: i32) -> (i32, i32) {
    %c0_i32 = arith.constant 0 : i32
    %c0_i32_0 = arith.constant 0 : i32
    return %arg0, %c0_i32 : i32, i32
  }
  func.func @transform_2(%arg0: i32) -> (i32, i32) {
    %c0_i32 = arith.constant 0 : i32
    %c0_i32_0 = arith.constant 0 : i32
    %c0_i32_1 = arith.constant 0 : i32
    return %c0_i32, %c0_i32_0 : i32, i32
  }
  func.func @transform_3(%arg0: i32) -> (i32, i32) {
    %c0_i32 = arith.constant 0 : i32
    %c0_i32_0 = arith.constant 0 : i32
    %c0_i32_1 = arith.constant 0 : i32
    return %c0_i32, %c0_i32_0 : i32, i32
  }
  func.func @transform_4(%arg0: i32) -> (i32, i32) {
    %c0_i32 = arith.constant 0 : i32
    %c0_i32_0 = arith.constant 0 : i32
    %c0_i32_1 = arith.constant 0 : i32
    return %c0_i32, %c0_i32_0 : i32, i32
  }
  func.func @transform_5(%arg0: i32) -> (i32, i32) {
    %c0_i32 = arith.constant 0 : i32
    %c0_i32_0 = arith.constant 0 : i32
    %c0_i32_1 = arith.constant 0 : i32
    return %c0_i32, %c0_i32_0 : i32, i32
  }
  func.func @transform_6(%arg0: i32) -> (i32, i32) {
    %c0_i32 = arith.constant 0 : i32
    %c0_i32_0 = arith.constant 0 : i32
    return %arg0, %c0_i32 : i32, i32
  }
}

module attributes {stable_mosaic.version = 11 : i64} {
  func.func @chebnet_fused_kernel(%arg0: i32, %arg1: memref<4x32x32xf32, #tpu.memory_space<vmem>>, %arg2: memref<32x8xf32, #tpu.memory_space<vmem>>, %arg3: memref<8x512xf32, #tpu.memory_space<vmem>>, %arg4: memref<1x128xf32, #tpu.memory_space<vmem>>, %arg5: memref<128x512xf32, #tpu.memory_space<vmem>>, %arg6: memref<1x128xf32, #tpu.memory_space<vmem>>, %arg7: memref<32x128xf32, #tpu.memory_space<vmem>>) attributes {dimension_semantics = [#tpu.dimension_semantics<parallel>], iteration_bounds = array<i64: 2>, scalar_prefetch = 0 : i64, scratch_operands = 0 : i64, tpu.core_type = #tpu.core_type<tc>, window_params = [{pipeline_mode = #tpu.pipeline_mode<synchronous>, transform_indices = @transform_0, window_bounds = array<i64: 4, 32, 32>}, {transform_indices = @transform_1, window_bounds = array<i64: 32, 8>}, {pipeline_mode = #tpu.pipeline_mode<synchronous>, transform_indices = @transform_2, window_bounds = array<i64: 8, 512>}, {pipeline_mode = #tpu.pipeline_mode<synchronous>, transform_indices = @transform_3, window_bounds = array<i64: 1, 128>}, {pipeline_mode = #tpu.pipeline_mode<synchronous>, transform_indices = @transform_4, window_bounds = array<i64: 128, 512>}, {pipeline_mode = #tpu.pipeline_mode<synchronous>, transform_indices = @transform_5, window_bounds = array<i64: 1, 128>}, {transform_indices = @transform_6, window_bounds = array<i64: 32, 128>}]} {
    %c0 = arith.constant 0 : index
    %c0_0 = arith.constant 0 : index
    %0 = vector.load %arg2[%c0, %c0_0] : memref<32x8xf32, #tpu.memory_space<vmem>>, vector<32x8xf32>
    %c0_1 = arith.constant 0 : index
    %c0_2 = arith.constant 0 : index
    %1 = vector.load %arg3[%c0_1, %c0_2] : memref<8x512xf32, #tpu.memory_space<vmem>>, vector<8x512xf32>
    %c0_3 = arith.constant 0 : index
    %c0_4 = arith.constant 0 : index
    %2 = vector.load %arg4[%c0_3, %c0_4] : memref<1x128xf32, #tpu.memory_space<vmem>>, vector<1x128xf32>
    %cst = arith.constant dense<0.000000e+00> : vector<32x512xf32>
    %3 = tpu.matmul %0, %1, %cst {dimension_numbers = #tpu.dot_dimension_numbers<[1], [0], [0], [1], [0, 0, 1, 1], [], []>} : vector<32x8xf32>, vector<8x512xf32>, vector<32x512xf32> -> vector<32x512xf32>
    %c0_5 = arith.constant 0 : index
    %c0_6 = arith.constant 0 : index
    %c0_7 = arith.constant 0 : index
    %4 = vector.load %arg1[%c0_5, %c0_6, %c0_7] : memref<4x32x32xf32, #tpu.memory_space<vmem>>, vector<1x32x32xf32>
    %5 = vector.shape_cast %4 : vector<1x32x32xf32> to vector<32x32xf32>
    %6 = vector.extract_strided_slice %3 {offsets = [0, 0], sizes = [32, 128], strides = [1, 1]} : vector<32x512xf32> to vector<32x128xf32>
    %cst_8 = arith.constant dense<0.000000e+00> : vector<32x128xf32>
    %7 = tpu.matmul %5, %6, %cst_8 {dimension_numbers = #tpu.dot_dimension_numbers<[1], [0], [0], [1], [0, 0, 1, 1], [], []>} : vector<32x32xf32>, vector<32x128xf32>, vector<32x128xf32> -> vector<32x128xf32>
    %c1 = arith.constant 1 : index
    %c0_9 = arith.constant 0 : index
    %c0_10 = arith.constant 0 : index
    %8 = vector.load %arg1[%c1, %c0_9, %c0_10] : memref<4x32x32xf32, #tpu.memory_space<vmem>>, vector<1x32x32xf32>
    %9 = vector.shape_cast %8 : vector<1x32x32xf32> to vector<32x32xf32>
    %10 = vector.extract_strided_slice %3 {offsets = [0, 128], sizes = [32, 128], strides = [1, 1]} : vector<32x512xf32> to vector<32x128xf32>
    %cst_11 = arith.constant dense<0.000000e+00> : vector<32x128xf32>
    %11 = tpu.matmul %9, %10, %cst_11 {dimension_numbers = #tpu.dot_dimension_numbers<[1], [0], [0], [1], [0, 0, 1, 1], [], []>} : vector<32x32xf32>, vector<32x128xf32>, vector<32x128xf32> -> vector<32x128xf32>
    %12 = arith.addf %7, %11 : vector<32x128xf32>
    %c2 = arith.constant 2 : index
    %c0_12 = arith.constant 0 : index
    %c0_13 = arith.constant 0 : index
    %13 = vector.load %arg1[%c2, %c0_12, %c0_13] : memref<4x32x32xf32, #tpu.memory_space<vmem>>, vector<1x32x32xf32>
    %14 = vector.shape_cast %13 : vector<1x32x32xf32> to vector<32x32xf32>
    %15 = vector.extract_strided_slice %3 {offsets = [0, 256], sizes = [32, 128], strides = [1, 1]} : vector<32x512xf32> to vector<32x128xf32>
    %cst_14 = arith.constant dense<0.000000e+00> : vector<32x128xf32>
    %16 = tpu.matmul %14, %15, %cst_14 {dimension_numbers = #tpu.dot_dimension_numbers<[1], [0], [0], [1], [0, 0, 1, 1], [], []>} : vector<32x32xf32>, vector<32x128xf32>, vector<32x128xf32> -> vector<32x128xf32>
    %17 = arith.addf %12, %16 : vector<32x128xf32>
    %c3 = arith.constant 3 : index
    %c0_15 = arith.constant 0 : index
    %c0_16 = arith.constant 0 : index
    %18 = vector.load %arg1[%c3, %c0_15, %c0_16] : memref<4x32x32xf32, #tpu.memory_space<vmem>>, vector<1x32x32xf32>
    %19 = vector.shape_cast %18 : vector<1x32x32xf32> to vector<32x32xf32>
    %20 = vector.extract_strided_slice %3 {offsets = [0, 384], sizes = [32, 128], strides = [1, 1]} : vector<32x512xf32> to vector<32x128xf32>
    %cst_17 = arith.constant dense<0.000000e+00> : vector<32x128xf32>
    %21 = tpu.matmul %19, %20, %cst_17 {dimension_numbers = #tpu.dot_dimension_numbers<[1], [0], [0], [1], [0, 0, 1, 1], [], []>} : vector<32x32xf32>, vector<32x128xf32>, vector<32x128xf32> -> vector<32x128xf32>
    %22 = arith.addf %17, %21 : vector<32x128xf32>
    %23 = vector.broadcast %2 : vector<1x128xf32> to vector<32x128xf32>
    %24 = arith.addf %22, %23 : vector<32x128xf32>
    %cst_18 = arith.constant 0.000000e+00 : f32
    %25 = vector.broadcast %cst_18 : f32 to vector<32x128xf32>
    %26 = arith.maximumf %24, %25 : vector<32x128xf32>
    %c0_19 = arith.constant 0 : index
    %c0_20 = arith.constant 0 : index
    %27 = vector.load %arg5[%c0_19, %c0_20] : memref<128x512xf32, #tpu.memory_space<vmem>>, vector<128x512xf32>
    %c0_21 = arith.constant 0 : index
    %c0_22 = arith.constant 0 : index
    %28 = vector.load %arg6[%c0_21, %c0_22] : memref<1x128xf32, #tpu.memory_space<vmem>>, vector<1x128xf32>
    %cst_23 = arith.constant dense<0.000000e+00> : vector<32x512xf32>
    %29 = tpu.matmul %26, %27, %cst_23 {dimension_numbers = #tpu.dot_dimension_numbers<[1], [0], [0], [1], [0, 0, 1, 1], [], []>} : vector<32x128xf32>, vector<128x512xf32>, vector<32x512xf32> -> vector<32x512xf32>
    %c0_24 = arith.constant 0 : index
    %c0_25 = arith.constant 0 : index
    %c0_26 = arith.constant 0 : index
    %30 = vector.load %arg1[%c0_24, %c0_25, %c0_26] : memref<4x32x32xf32, #tpu.memory_space<vmem>>, vector<1x32x32xf32>
    %31 = vector.shape_cast %30 : vector<1x32x32xf32> to vector<32x32xf32>
    %32 = vector.extract_strided_slice %29 {offsets = [0, 0], sizes = [32, 128], strides = [1, 1]} : vector<32x512xf32> to vector<32x128xf32>
    %cst_27 = arith.constant dense<0.000000e+00> : vector<32x128xf32>
    %33 = tpu.matmul %31, %32, %cst_27 {dimension_numbers = #tpu.dot_dimension_numbers<[1], [0], [0], [1], [0, 0, 1, 1], [], []>} : vector<32x32xf32>, vector<32x128xf32>, vector<32x128xf32> -> vector<32x128xf32>
    %c1_28 = arith.constant 1 : index
    %c0_29 = arith.constant 0 : index
    %c0_30 = arith.constant 0 : index
    %34 = vector.load %arg1[%c1_28, %c0_29, %c0_30] : memref<4x32x32xf32, #tpu.memory_space<vmem>>, vector<1x32x32xf32>
    %35 = vector.shape_cast %34 : vector<1x32x32xf32> to vector<32x32xf32>
    %36 = vector.extract_strided_slice %29 {offsets = [0, 128], sizes = [32, 128], strides = [1, 1]} : vector<32x512xf32> to vector<32x128xf32>
    %cst_31 = arith.constant dense<0.000000e+00> : vector<32x128xf32>
    %37 = tpu.matmul %35, %36, %cst_31 {dimension_numbers = #tpu.dot_dimension_numbers<[1], [0], [0], [1], [0, 0, 1, 1], [], []>} : vector<32x32xf32>, vector<32x128xf32>, vector<32x128xf32> -> vector<32x128xf32>
    %38 = arith.addf %33, %37 : vector<32x128xf32>
    %c2_32 = arith.constant 2 : index
    %c0_33 = arith.constant 0 : index
    %c0_34 = arith.constant 0 : index
    %39 = vector.load %arg1[%c2_32, %c0_33, %c0_34] : memref<4x32x32xf32, #tpu.memory_space<vmem>>, vector<1x32x32xf32>
    %40 = vector.shape_cast %39 : vector<1x32x32xf32> to vector<32x32xf32>
    %41 = vector.extract_strided_slice %29 {offsets = [0, 256], sizes = [32, 128], strides = [1, 1]} : vector<32x512xf32> to vector<32x128xf32>
    %cst_35 = arith.constant dense<0.000000e+00> : vector<32x128xf32>
    %42 = tpu.matmul %40, %41, %cst_35 {dimension_numbers = #tpu.dot_dimension_numbers<[1], [0], [0], [1], [0, 0, 1, 1], [], []>} : vector<32x32xf32>, vector<32x128xf32>, vector<32x128xf32> -> vector<32x128xf32>
    %43 = arith.addf %38, %42 : vector<32x128xf32>
    %c3_36 = arith.constant 3 : index
    %c0_37 = arith.constant 0 : index
    %c0_38 = arith.constant 0 : index
    %44 = vector.load %arg1[%c3_36, %c0_37, %c0_38] : memref<4x32x32xf32, #tpu.memory_space<vmem>>, vector<1x32x32xf32>
    %45 = vector.shape_cast %44 : vector<1x32x32xf32> to vector<32x32xf32>
    %46 = vector.extract_strided_slice %29 {offsets = [0, 384], sizes = [32, 128], strides = [1, 1]} : vector<32x512xf32> to vector<32x128xf32>
    %cst_39 = arith.constant dense<0.000000e+00> : vector<32x128xf32>
    %47 = tpu.matmul %45, %46, %cst_39 {dimension_numbers = #tpu.dot_dimension_numbers<[1], [0], [0], [1], [0, 0, 1, 1], [], []>} : vector<32x32xf32>, vector<32x128xf32>, vector<32x128xf32> -> vector<32x128xf32>
    %48 = arith.addf %43, %47 : vector<32x128xf32>
    %49 = vector.broadcast %28 : vector<1x128xf32> to vector<32x128xf32>
    %50 = arith.addf %48, %49 : vector<32x128xf32>
    %cst_40 = arith.constant 0.000000e+00 : f32
    %51 = vector.broadcast %cst_40 : f32 to vector<32x128xf32>
    %52 = arith.maximumf %50, %51 : vector<32x128xf32>
    %c0_41 = arith.constant 0 : index
    %c0_42 = arith.constant 0 : index
    %53 = vector.load %arg7[%c0_41, %c0_42] : memref<32x128xf32, #tpu.memory_space<vmem>>, vector<32x128xf32>
    tpu.vector_store %arg7[%c0_41, %c0_42], %52 {strides = array<i32>} : memref<32x128xf32, #tpu.memory_space<vmem>>, vector<32x128xf32>,
    return
  }
  func.func @transform_0(%arg0: i32) -> (i32, i32, i32) {
    %c0_i32 = arith.constant 0 : i32
    %c0_i32_0 = arith.constant 0 : i32
    %c0_i32_1 = arith.constant 0 : i32
    %c0_i32_2 = arith.constant 0 : i32
    return %c0_i32, %c0_i32_0, %c0_i32_1 : i32, i32, i32
  }
  func.func @transform_1(%arg0: i32) -> (i32, i32) {
    %c0_i32 = arith.constant 0 : i32
    %c0_i32_0 = arith.constant 0 : i32
    return %arg0, %c0_i32 : i32, i32
  }
  func.func @transform_2(%arg0: i32) -> (i32, i32) {
    %c0_i32 = arith.constant 0 : i32
    %c0_i32_0 = arith.constant 0 : i32
    %c0_i32_1 = arith.constant 0 : i32
    return %c0_i32, %c0_i32_0 : i32, i32
  }
  func.func @transform_3(%arg0: i32) -> (i32, i32) {
    %c0_i32 = arith.constant 0 : i32
    %c0_i32_0 = arith.constant 0 : i32
    %c0_i32_1 = arith.constant 0 : i32
    return %c0_i32, %c0_i32_0 : i32, i32
  }
  func.func @transform_4(%arg0: i32) -> (i32, i32) {
    %c0_i32 = arith.constant 0 : i32
    %c0_i32_0 = arith.constant 0 : i32
    %c0_i32_1 = arith.constant 0 : i32
    return %c0_i32, %c0_i32_0 : i32, i32
  }
  func.func @transform_5(%arg0: i32) -> (i32, i32) {
    %c0_i32 = arith.constant 0 : i32
    %c0_i32_0 = arith.constant 0 : i32
    %c0_i32_1 = arith.constant 0 : i32
    return %c0_i32, %c0_i32_0 : i32, i32
  }
  func.func @transform_6(%arg0: i32) -> (i32, i32) {
    %c0_i32 = arith.constant 0 : i32
    %c0_i32_0 = arith.constant 0 : i32
    return %arg0, %c0_i32 : i32, i32
  }
}

</mosaic_0001>

<llo_original>
// kernel: tpu_custom_call.1
$region0: #{tpu_custom_call.1}
  #allocation0 [shape = 'u32[]', space=smem, size = 0x4, offset = 0x4, fixed_abs, tag = 'smem constant byte address 0x4 - core index']
  #allocation1 [shape = 'u32[144,128]{1,0:T(1,128)}', space=vmem, size = 0x12000, scoped, tag = 'internal scratch']
  %s0 = inlined_call_operand.hbm [shape: f32[4,32,32], index: 0, kind: input, shape index: {}]
  %s1 = inlined_call_operand.vmem [shape: f32[64,8], index: 1, kind: input, shape index: {}]
  %s2 = inlined_call_operand.vmem [shape: f32[8,512], index: 2, kind: input, shape index: {}]
  %s3 = inlined_call_operand.vmem [shape: f32[1,128], index: 3, kind: input, shape index: {}]
  %s4 = inlined_call_operand.hbm [shape: f32[128,512], index: 4, kind: input, shape index: {}]
  %s5 = inlined_call_operand.vmem [shape: f32[1,128], index: 5, kind: input, shape index: {}]
  %s6 = inlined_call_operand.hbm [shape: f32[64,128], index: 6, kind: output, shape index: {}]
  %s7 = sld [smem:[#allocation0]]
  $region65: #{tpu_custom_call.1} parent=0
    _
  %s9 = ssub.s32 1, %s7
  %s10 = scalar_select 0, %s9, %s7
  $region1: #{tpu_custom_call.1} parent=0
    #allocation2 [shape = 'u8[65536]{0}', space=vmem, size = 0x10000, scoped, tag = 'input window, operand 0, single buffered']
    #allocation3 [shape = 's32[2]{0}', space=sflag, size = 0x8, scoped, tag = 'scoped memory for tpu_custom_call.1']
    #allocation4 [shape = 's32[2]{0}', space=sflag, size = 0x8, scoped, tag = 'scoped memory for tpu_custom_call.1']
    #allocation5 [shape = 'u8[262144]{0}', space=vmem, size = 0x40000, scoped, tag = 'input window, operand 4, single buffered']
    #allocation6 [shape = 's32[1]{0}', space=sflag, size = 0x4, scoped, tag = 'scoped memory for tpu_custom_call.1']
    #allocation7 [shape = 'u8[32768]{0}', space=vmem, size = 0x8000, scoped, tag = 'output window, operand 0']
    %11 = vsyncpa [#allocation3], 0
    %12 = vsyncpa [#allocation6], 0
    %13 = vsyncpa [#allocation4], 0
    %s14 = scalar_lea.sflag [#allocation4], 1
    %15 = vsyncpa %s14, 0
    loop: start=0, step=1, limit=4
    $region2: #{tpu_custom_call.1} parent=1 // loop_pre_header
      _
    $region3: #{tpu_custom_call.1} parent=1 // loop_header
      %s17 = sphi 0, %s21
      %p18 = scmp.ge.s32.totalorder %s17, 4
      %s25 = sphi 0, %s25
      %s27 = sphi 0, %s25
      %s28 = sphi 0, %s27
      %s42 = sphi 0, %s28
      %s48 = sphi 0, %s50
      %s51 = sphi 0, %s48
      %s52 = sphi 0, %s51
      %s68 = sphi 0, %s52
      %s72 = sphi 0, %s72
      %s74 = sphi 0, %s72
      %s75 = sphi 0, %s74
      %s89 = sphi 0, %s75
      %s93 = sphi 0, %s93
      %s95 = sphi 0, %s93
      %s96 = sphi 0, %s95
      %s110 = sphi 0, %s96
      %s114 = sphi 0, %s114
      %s116 = sphi 0, %s114
      %s117 = sphi 0, %s116
      %s131 = sphi 0, %s117
      %s135 = sphi 0, %s135
      %s137 = sphi 0, %s135
      %s138 = sphi 0, %s137
      %s152 = sphi 0, %s138
      %s158 = sphi 0, %s160
      %s161 = sphi 0, %s158
      %s162 = sphi 0, %s161
      %s178 = sphi 0, %s162
    $region4: #{tpu_custom_call.1} parent=1 // loop_header_branch
      %20 = sbr.rel (%p18) target = $region8
    $region5: #{tpu_custom_call.1} parent=1 // loop_body
      %s22 = ssub.s32 %s17, 1
      %s23 = ssub.s32 %s17, 2
      %s24 = sadd.s32 %s17, 1
      %s26 = sadd.s32 %s25, 1
      %p29 = scmp.eq.s32.totalorder %s17, 1
      %p30 = scmp.ne.s32.totalorder %s25, %s27
      %p31 = scmp.eq.s32.totalorder %s17, 0
      %p32 = por %p30, %p31
      %p33 = scmp.ne.s32.totalorder %s25, %s27
      %p34 = scmp.eq.s32.totalorder %s22, 1
      %p35 = por %p33, %p34
      %p36 = scmp.ne.s32.totalorder %s27, %s28
      %p37 = scmp.eq.s32.totalorder %s22, 0
      %p38 = por %p36, %p37
      %p39 = scmp.ne.s32.totalorder %s27, %s28
      %p40 = scmp.eq.s32.totalorder %s23, 1
      %p41 = por %p39, %p40
      %p43 = scmp.ne.s32.totalorder %s28, %s42
      %p44 = scmp.eq.s32.totalorder %s23, 0
      %p45 = por %p43, %p44
      %s46 = ssub.s32 %s17, %s24
      %p47 = scmp.eq.s32.totalorder %s46, 0
      %s49 = sadd.s32 %s48, 1
      %s50 = scalar_select %p47, %s48, %s49
      %p53 = pneg %p47
      %p54 = scmp.eq.s32.totalorder %s17, 1
      %p55 = por %p53, %p54
      %p56 = scmp.ne.s32.totalorder %s48, %s51
      %p57 = scmp.eq.s32.totalorder %s17, 0
      %p58 = por %p56, %p57
      %p59 = scmp.ne.s32.totalorder %s48, %s51
      %p60 = scmp.eq.s32.totalorder %s22, 1
      %p61 = por %p59, %p60
      %p62 = scmp.ne.s32.totalorder %s51, %s52
      %p63 = scmp.eq.s32.totalorder %s22, 0
      %p64 = por %p62, %p63
      %p65 = scmp.ne.s32.totalorder %s51, %s52
      %p66 = scmp.eq.s32.totalorder %s23, 1
      %p67 = por %p65, %p66
      %p69 = scmp.ne.s32.totalorder %s52, %s68
      %p70 = scmp.eq.s32.totalorder %s23, 0
      %p71 = por %p69, %p70
      %s73 = sadd.s32 %s72, 1
      %p76 = scmp.eq.s32.totalorder %s17, 1
      %p77 = scmp.ne.s32.totalorder %s72, %s74
      %p78 = scmp.eq.s32.totalorder %s17, 0
      %p79 = por %p77, %p78
      %p80 = scmp.ne.s32.totalorder %s72, %s74
      %p81 = scmp.eq.s32.totalorder %s22, 1
      %p82 = por %p80, %p81
      %p83 = scmp.ne.s32.totalorder %s74, %s75
      %p84 = scmp.eq.s32.totalorder %s22, 0
      %p85 = por %p83, %p84
      %p86 = scmp.ne.s32.totalorder %s74, %s75
      %p87 = scmp.eq.s32.totalorder %s23, 1
      %p88 = por %p86, %p87
      %p90 = scmp.ne.s32.totalorder %s75, %s89
      %p91 = scmp.eq.s32.totalorder %s23, 0
      %p92 = por %p90, %p91
      %s94 = sadd.s32 %s93, 1
      %p97 = scmp.eq.s32.totalorder %s17, 1
      %p98 = scmp.ne.s32.totalorder %s93, %s95
      %p99 = scmp.eq.s32.totalorder %s17, 0
      %p100 = por %p98, %p99
      %p101 = scmp.ne.s32.totalorder %s93, %s95
      %p102 = scmp.eq.s32.totalorder %s22, 1
      %p103 = por %p101, %p102
      %p104 = scmp.ne.s32.totalorder %s95, %s96
      %p105 = scmp.eq.s32.totalorder %s22, 0
      %p106 = por %p104, %p105
      %p107 = scmp.ne.s32.totalorder %s95, %s96
      %p108 = scmp.eq.s32.totalorder %s23, 1
      %p109 = por %p107, %p108
      %p111 = scmp.ne.s32.totalorder %s96, %s110
      %p112 = scmp.eq.s32.totalorder %s23, 0
      %p113 = por %p111, %p112
      %s115 = sadd.s32 %s114, 1
      %p118 = scmp.eq.s32.totalorder %s17, 1
      %p119 = scmp.ne.s32.totalorder %s114, %s116
      %p120 = scmp.eq.s32.totalorder %s17, 0
      %p121 = por %p119, %p120
      %p122 = scmp.ne.s32.totalorder %s114, %s116
      %p123 = scmp.eq.s32.totalorder %s22, 1
      %p124 = por %p122, %p123
      %p125 = scmp.ne.s32.totalorder %s116, %s117
      %p126 = scmp.eq.s32.totalorder %s22, 0
      %p127 = por %p125, %p126
      %p128 = scmp.ne.s32.totalorder %s116, %s117
      %p129 = scmp.eq.s32.totalorder %s23, 1
      %p130 = por %p128, %p129
      %p132 = scmp.ne.s32.totalorder %s117, %s131
      %p133 = scmp.eq.s32.totalorder %s23, 0
      %p134 = por %p132, %p133
      %s136 = sadd.s32 %s135, 1
      %p139 = scmp.eq.s32.totalorder %s17, 1
      %p140 = scmp.ne.s32.totalorder %s135, %s137
      %p141 = scmp.eq.s32.totalorder %s17, 0
      %p142 = por %p140, %p141
      %p143 = scmp.ne.s32.totalorder %s135, %s137
      %p144 = scmp.eq.s32.totalorder %s22, 1
      %p145 = por %p143, %p144
      %p146 = scmp.ne.s32.totalorder %s137, %s138
      %p147 = scmp.eq.s32.totalorder %s22, 0
      %p148 = por %p146, %p147
      %p149 = scmp.ne.s32.totalorder %s137, %s138
      %p150 = scmp.eq.s32.totalorder %s23, 1
      %p151 = por %p149, %p150
      %p153 = scmp.ne.s32.totalorder %s138, %s152
      %p154 = scmp.eq.s32.totalorder %s23, 0
      %p155 = por %p153, %p154
      %s156 = ssub.s32 %s17, %s24
      %p157 = scmp.eq.s32.totalorder %s156, 0
      %s159 = sadd.s32 %s158, 1
      %s160 = scalar_select %p157, %s158, %s159
      %p163 = pneg %p157
      %p164 = scmp.eq.s32.totalorder %s17, 1
      %p165 = por %p163, %p164
      %p166 = scmp.ne.s32.totalorder %s158, %s161
      %p167 = scmp.eq.s32.totalorder %s17, 0
      %p168 = por %p166, %p167
      %p169 = scmp.ne.s32.totalorder %s158, %s161
      %p170 = scmp.eq.s32.totalorder %s22, 1
      %p171 = por %p169, %p170
      %p172 = scmp.ne.s32.totalorder %s161, %s162
      %p173 = scmp.eq.s32.totalorder %s22, 0
      %p174 = por %p172, %p173
      %p175 = scmp.ne.s32.totalorder %s161, %s162
      %p176 = scmp.eq.s32.totalorder %s23, 1
      %p177 = por %p175, %p176
      %p179 = scmp.ne.s32.totalorder %s162, %s178
      %p180 = scmp.eq.s32.totalorder %s23, 0
      %p181 = por %p179, %p180
      %p182 = scmp.le.s32.totalorder 1, %s17
      %p183 = scmp.lt.s32.totalorder %s17, 3
      %p184 = pnand %p182, %p183
      %p185 = pneg %p184
      // Predicated region
      $region9: #{tpu_custom_call.1} parent=5 // pred_check
        _
      $region10: #{tpu_custom_call.1} parent=5 // pred_check_branch
        %187 = sbr.rel (%p184) target = $region12
      $region11: #{tpu_custom_call.1} parent=5 // pred_region
        %s188 = ssub.s32 %s17, 1
        // Predicated region
        $region13: #{tpu_custom_call.1} parent=11 // pred_check
          %p189 = pneg %p38
        $region14: #{tpu_custom_call.1} parent=11 // pred_check_branch
          %191 = sbr.rel (%p189) target = $region16
        $region15: #{tpu_custom_call.1} parent=11 // pred_region
          %s193 = ssub.s32 2048, 2048
          %194 = vsyncadd [#allocation3], %s193
          %s195 = sshll.u32 [#allocation2], 4
          %s196 = int_to_ptr.vmem [resolvable:$true] %s195
          %201 = dma.hbm_to_vmem [thread:$0]  %s0, 2048, %s196, [#allocation3], 128, 128, 8
        $region16: #{tpu_custom_call.1} parent=11 // pred_fallthru
          _
        // Predicated region
        $region17: #{tpu_custom_call.1} parent=11 // pred_check
          %p202 = pneg %p85
        $region18: #{tpu_custom_call.1} parent=11 // pred_check_branch
          %204 = sbr.rel (%p202) target = $region20
        $region19: #{tpu_custom_call.1} parent=11 // pred_region
          _
        $region20: #{tpu_custom_call.1} parent=11 // pred_fallthru
          _
        // Predicated region
        $region21: #{tpu_custom_call.1} parent=11 // pred_check
          %p205 = pneg %p106
        $region22: #{tpu_custom_call.1} parent=11 // pred_check_branch
          %207 = sbr.rel (%p205) target = $region24
        $region23: #{tpu_custom_call.1} parent=11 // pred_region
          _
        $region24: #{tpu_custom_call.1} parent=11 // pred_fallthru
          _
        // Predicated region
        $region25: #{tpu_custom_call.1} parent=11 // pred_check
          %p208 = pneg %p127
        $region26: #{tpu_custom_call.1} parent=11 // pred_check_branch
          %210 = sbr.rel (%p208) target = $region28
        $region27: #{tpu_custom_call.1} parent=11 // pred_region
          %s212 = ssub.s32 8192, 8192
          %213 = vsyncadd [#allocation6], %s212
          %s214 = sshll.u32 [#allocation5], 4
          %s215 = int_to_ptr.vmem [resolvable:$true] %s214
          %220 = dma.hbm_to_vmem [thread:$0]  %s4, 8192, %s215, [#allocation6], 512, 512, 32
        $region28: #{tpu_custom_call.1} parent=11 // pred_fallthru
          _
        // Predicated region
        $region29: #{tpu_custom_call.1} parent=11 // pred_check
          %p221 = pneg %p148
        $region30: #{tpu_custom_call.1} parent=11 // pred_check_branch
          %223 = sbr.rel (%p221) target = $region32
        $region31: #{tpu_custom_call.1} parent=11 // pred_region
          _
        $region32: #{tpu_custom_call.1} parent=11 // pred_fallthru
          _
      $region12: #{tpu_custom_call.1} parent=5 // pred_fallthru
        _
      %p224 = scmp.lt.s32.totalorder %s17, 2
      // Predicated region
      $region33: #{tpu_custom_call.1} parent=5 // pred_check
        %p225 = pneg %p224
      $region34: #{tpu_custom_call.1} parent=5 // pred_check_branch
        %227 = sbr.rel (%p225) target = $region36
      $region35: #{tpu_custom_call.1} parent=5 // pred_region
        // Predicated region
        $region37: #{tpu_custom_call.1} parent=35 // pred_check
          %p228 = pneg %p58
        $region38: #{tpu_custom_call.1} parent=35 // pred_check_branch
          %230 = sbr.rel (%p228) target = $region40
        $region39: #{tpu_custom_call.1} parent=35 // pred_region
          %s231 = smul.u32 4, %s17
          %p232 = scmp.lt.s32.totalorder %s231, 7
          %s233 = scalar_select %p232, %s231, 7
          %s234 = smul.addr %s233, 8
          %s235 = scalar_lea.vmem %s1, %s234
          %s236 = smul.u32 4, %s17
        $region40: #{tpu_custom_call.1} parent=35 // pred_fallthru
          _
      $region36: #{tpu_custom_call.1} parent=5 // pred_fallthru
        _
      %p237 = scmp.le.s32.totalorder 1, %s17
      %p238 = scmp.lt.s32.totalorder %s17, 3
      %p239 = pnand %p237, %p238
      %p240 = pneg %p239
      // Predicated region
      $region41: #{tpu_custom_call.1} parent=5 // pred_check
        _
      $region42: #{tpu_custom_call.1} parent=5 // pred_check_branch
        %242 = sbr.rel (%p239) target = $region44
      $region43: #{tpu_custom_call.1} parent=5 // pred_region
        %s243 = ssub.s32 %s17, 1
        // Predicated region
        $region45: #{tpu_custom_call.1} parent=43 // pred_check
          %p244 = pneg %p38
        $region46: #{tpu_custom_call.1} parent=43 // pred_check_branch
          %246 = sbr.rel (%p244) target = $region48
        $region47: #{tpu_custom_call.1} parent=43 // pred_region
          %247 = dma.done [#allocation3], 2048
        $region48: #{tpu_custom_call.1} parent=43 // pred_fallthru
          _
        // Predicated region
        $region49: #{tpu_custom_call.1} parent=43 // pred_check
          %p248 = pneg %p127
        $region50: #{tpu_custom_call.1} parent=43 // pred_check_branch
          %250 = sbr.rel (%p248) target = $region52
        $region51: #{tpu_custom_call.1} parent=43 // pred_region
          %251 = dma.done [#allocation6], 8192
        $region52: #{tpu_custom_call.1} parent=43 // pred_fallthru
          _
        %p252 = pneg %p38
        %p253 = pneg %p35
        %s254 = smul.u32 4, %s22
        %p255 = scmp.lt.s32.totalorder %s254, 7
        %s256 = scalar_select %p255, %s254, 7
        %s257 = smul.addr %s256, 8
        %s258 = scalar_lea.vmem %s1, %s257
        %p259 = pneg %p64
        %p260 = pneg %p61
        %p261 = pneg %p85
        %p262 = pneg %p82
        %p263 = pneg %p106
        %p264 = pneg %p103
        %p265 = pneg %p127
        %p266 = pneg %p124
        %p267 = pneg %p148
        %p268 = pneg %p145
        %p269 = pneg %p174
        %p270 = pneg %p171
        %s271 = sand.u32 %s161, 1
        %s272 = scalar_lea.sflag [#allocation4], %s271
        %s273 = sand.u32 %s161, 1
        %s274 = smul.addr %s273, 32
        %s275 = scalar_lea.vmem [#allocation7], %s274
        %s276 = smul.u32 4, %s22
        %p277 = scmp.lt.s32.totalorder %s276, 7
        %s278 = scalar_select %p277, %s276, 7
        %s279 = smul.addr %s278, 8
        %s280 = scalar_lea.vmem %s1, %s279
        %s281 = smul.u32 4, %s22
        %s282 = smul.u32 4, %s22
        %v283 = vld [vmem:[%s280] sm:$0xff]
        %v284 = vld [vmem:[%s280 + $0x8] sm:$0xff]
        %v285 = vld [vmem:[%s280 + $0x10] sm:$0xff]
        %v286 = vld [vmem:[%s280 + $0x18] sm:$0xff]
        %v287 = vld [vmem:[%s2] sm:$0xff]
        %v288 = vld [vmem:[%s2 + $0x8] sm:$0xff]
        %v289 = vld [vmem:[%s2 + $0x10] sm:$0xff]
        %v290 = vld [vmem:[%s2 + $0x18] sm:$0xff]
        %v291 = vld [vmem:[%s3] sm:$0x1]
        %vm292 = vcmask 64512
        %v294 = vsel %vm292, %v283, 0
        %v297 = vsel %vm292, %v284, 0
        %v300 = vsel %vm292, %v285, 0
        %v303 = vsel %vm292, %v286, 0
        %305 = vmatprep.subr.mxu0 %v288
        %306 = vmatpush1.msra.mxu0 %v287
        %307 = vmatprep.subr.mxu0 0.0
        %308 = vmatpush1.msra.mxu0 0.0
        %309 = vmatprep.subr.mxu0 0.0
        %310 = vmatpush1.msra.mxu0 0.0
        %311 = vmatprep.subr.mxu0 0.0
        %312 = vmatpush1.msra.mxu0 0.0
        %313 = vmatprep.subr.mxu0 0.0
        %314 = vmatpush1.msra.mxu0 0.0
        %315 = vmatprep.subr.mxu0 0.0
        %316 = vmatpush1.msra.mxu0 0.0
        %317 = vmatprep.subr.mxu0 0.0
        %318 = vmatpush1.msra.mxu0 0.0
        %319 = vmatprep.subr.mxu0 0.0
        %320 = vmatpush1.msra.mxu0 0.0
        %321 = vmatprep.subr.mxu0 0.0
        %322 = vmatpush1.msra.mxu0 0.0
        %323 = vmatprep.subr.mxu0 0.0
        %324 = vmatpush1.msra.mxu0 0.0
        %325 = vmatprep.subr.mxu0 0.0
        %326 = vmatpush1.msra.mxu0 0.0
        %327 = vmatprep.subr.mxu0 0.0
        %328 = vmatpush1.msra.mxu0 0.0
        %329 = vmatprep.subr.mxu0 0.0
        %330 = vmatpush1.msra.mxu0 0.0
        %331 = vmatprep.subr.mxu0 0.0
        %332 = vmatpush1.msra.mxu0 0.0
        %333 = vmatprep.subr.mxu0 0.0
        %334 = vmatpush1.msra.mxu0 0.0
        %335 = vmatprep.subr.mxu0 0.0
        %336 = vmatpush1.msra.mxu0 0.0
        %337 = vmatprep.subr.mxu0 0.0
        %338 = vmatpush1.msra.mxu0 0.0
        %339 = vmatprep.subr.mxu0 0.0
        %340 = vmatpush1.msra.mxu0 0.0
        %341 = vmatprep.subr.mxu0 0.0
        %342 = vmatpush1.msra.mxu0 0.0
        %343 = vmatprep.subr.mxu0 0.0
        %344 = vmatpush1.msra.mxu0 0.0
        %345 = vmatprep.subr.mxu0 0.0
        %346 = vmatpush1.msra.mxu0 0.0
        %347 = vmatprep.subr.mxu0 0.0
        %348 = vmatpush1.msra.mxu0 0.0
        %349 = vmatprep.subr.mxu0 0.0
        %350 = vmatpush1.msra.mxu0 0.0
        %351 = vmatprep.subr.mxu0 0.0
        %352 = vmatpush1.msra.mxu0 0.0
        %353 = vmatprep.subr.mxu0 0.0
        %354 = vmatpush1.msra.mxu0 0.0
        %355 = vmatprep.subr.mxu0 0.0
        %356 = vmatpush1.msra.mxu0 0.0
        %357 = vmatprep.subr.mxu0 0.0
        %358 = vmatpush1.msra.mxu0 0.0
        %359 = vmatprep.subr.mxu0 0.0
        %360 = vmatpush1.msra.mxu0 0.0
        %361 = vmatprep.subr.mxu0 0.0
        %362 = vmatpush1.msra.mxu0 0.0
        %363 = vmatprep.subr.mxu0 0.0
        %364 = vmatpush1.msra.mxu0 0.0
        %365 = vmatprep.subr.mxu0 0.0
        %366 = vmatpush1.msra.mxu0 0.0
        %367 = vmatprep.subr.mxu0 0.0
        %368 = vmatpush1.msra.mxu0 0.0
        %369 = vmatprep.mubr.f32.mxu0 0.0
        %370 = vmatmul.mubr.f32.gmra.mrb[0].mxu0 %v294
        %v371 = vpop.f32.mrb[0].mxu0
        %v372 = vadd.f32 0.0, %v371
        %v373 = vpop.f32.mrb[0].mxu0
        %v374 = vadd.f32 0.0, %v373
        %375 = vmatprep.mubr.f32.mxu0 0.0
        %376 = vmatmul.mubr.f32.gmra.mrb[0].mxu0 %v297
        %v377 = vpop.f32.mrb[0].mxu0
        %v378 = vadd.f32 0.0, %v377
        %v379 = vpop.f32.mrb[0].mxu0
        %v380 = vadd.f32 0.0, %v379
        %381 = vmatprep.mubr.f32.mxu0 0.0
        %382 = vmatmul.mubr.f32.gmra.mrb[0].mxu0 %v300
        %v383 = vpop.f32.mrb[0].mxu0
        %v384 = vadd.f32 0.0, %v383
        %v385 = vpop.f32.mrb[0].mxu0
        %v386 = vadd.f32 0.0, %v385
        %387 = vmatprep.mubr.f32.mxu0 0.0
        %388 = vmatmul.mubr.f32.gmra.mrb[0].mxu0 %v303
        %v389 = vpop.f32.mrb[0].mxu0
        %v390 = vadd.f32 0.0, %v389
        %v391 = vpop.f32.mrb[0].mxu0
        %v392 = vadd.f32 0.0, %v391
        %393 = vdwg.mxu0
        %394 = vmatprep.subr.mxu0 %v290
        %395 = vmatpush1.msra.mxu0 %v289
        %396 = vmatprep.subr.mxu0 0.0
        %397 = vmatpush1.msra.mxu0 0.0
        %398 = vmatprep.subr.mxu0 0.0
        %399 = vmatpush1.msra.mxu0 0.0
        %400 = vmatprep.subr.mxu0 0.0
        %401 = vmatpush1.msra.mxu0 0.0
        %402 = vmatprep.subr.mxu0 0.0
        %403 = vmatpush1.msra.mxu0 0.0
        %404 = vmatprep.subr.mxu0 0.0
        %405 = vmatpush1.msra.mxu0 0.0
        %406 = vmatprep.subr.mxu0 0.0
        %407 = vmatpush1.msra.mxu0 0.0
        %408 = vmatprep.subr.mxu0 0.0
        %409 = vmatpush1.msra.mxu0 0.0
        %410 = vmatprep.subr.mxu0 0.0
        %411 = vmatpush1.msra.mxu0 0.0
        %412 = vmatprep.subr.mxu0 0.0
        %413 = vmatpush1.msra.mxu0 0.0
        %414 = vmatprep.subr.mxu0 0.0
        %415 = vmatpush1.msra.mxu0 0.0
        %416 = vmatprep.subr.mxu0 0.0
        %417 = vmatpush1.msra.mxu0 0.0
        %418 = vmatprep.subr.mxu0 0.0
        %419 = vmatpush1.msra.mxu0 0.0
        %420 = vmatprep.subr.mxu0 0.0
        %421 = vmatpush1.msra.mxu0 0.0
        %422 = vmatprep.subr.mxu0 0.0
        %423 = vmatpush1.msra.mxu0 0.0
        %424 = vmatprep.subr.mxu0 0.0
        %425 = vmatpush1.msra.mxu0 0.0
        %426 = vmatprep.subr.mxu0 0.0
        %427 = vmatpush1.msra.mxu0 0.0
        %428 = vmatprep.subr.mxu0 0.0
        %429 = vmatpush1.msra.mxu0 0.0
        %430 = vmatprep.subr.mxu0 0.0
        %431 = vmatpush1.msra.mxu0 0.0
        %432 = vmatprep.subr.mxu0 0.0
        %433 = vmatpush1.msra.mxu0 0.0
        %434 = vmatprep.subr.mxu0 0.0
        %435 = vmatpush1.msra.mxu0 0.0
        %436 = vmatprep.subr.mxu0 0.0
        %437 = vmatpush1.msra.mxu0 0.0
        %438 = vmatprep.subr.mxu0 0.0
        %439 = vmatpush1.msra.mxu0 0.0
        %440 = vmatprep.subr.mxu0 0.0
        %441 = vmatpush1.msra.mxu0 0.0
        %442 = vmatprep.subr.mxu0 0.0
        %443 = vmatpush1.msra.mxu0 0.0
        %444 = vmatprep.subr.mxu0 0.0
        %445 = vmatpush1.msra.mxu0 0.0
        %446 = vmatprep.subr.mxu0 0.0
        %447 = vmatpush1.msra.mxu0 0.0
        %448 = vmatprep.subr.mxu0 0.0
        %449 = vmatpush1.msra.mxu0 0.0
        %450 = vmatprep.subr.mxu0 0.0
        %451 = vmatpush1.msra.mxu0 0.0
        %452 = vmatprep.subr.mxu0 0.0
        %453 = vmatpush1.msra.mxu0 0.0
        %454 = vmatprep.subr.mxu0 0.0
        %455 = vmatpush1.msra.mxu0 0.0
        %456 = vmatprep.subr.mxu0 0.0
        %457 = vmatpush1.msra.mxu0 0.0
        %458 = vmatprep.mubr.f32.mxu0 0.0
        %459 = vmatmul.mubr.f32.gmra.mrb[0].mxu0 %v294
        %v460 = vpop.f32.mrb[0].mxu0
        %v461 = vadd.f32 0.0, %v460
        %v462 = vpop.f32.mrb[0].mxu0
        %v463 = vadd.f32 0.0, %v462
        %464 = vmatprep.mubr.f32.mxu0 0.0
        %465 = vmatmul.mubr.f32.gmra.mrb[0].mxu0 %v297
        %v466 = vpop.f32.mrb[0].mxu0
        %v467 = vadd.f32 0.0, %v466
        %v468 = vpop.f32.mrb[0].mxu0
        %v469 = vadd.f32 0.0, %v468
        %470 = vmatprep.mubr.f32.mxu0 0.0
        %471 = vmatmul.mubr.f32.gmra.mrb[0].mxu0 %v300
        %v472 = vpop.f32.mrb[0].mxu0
        %v473 = vadd.f32 0.0, %v472
        %v474 = vpop.f32.mrb[0].mxu0
        %v475 = vadd.f32 0.0, %v474
        %476 = vmatprep.mubr.f32.mxu0 0.0
        %477 = vmatmul.mubr.f32.gmra.mrb[0].mxu0 %v303
        %v478 = vpop.f32.mrb[0].mxu0
        %v479 = vadd.f32 0.0, %v478
        %v480 = vpop.f32.mrb[0].mxu0
        %v481 = vadd.f32 0.0, %v480
        %482 = vdwg.mxu0
        %v483 = vld [vmem:[#allocation2] sm:$0xff]
        %v484 = vld [vmem:[#allocation2 + $0x8] sm:$0xff]
        %v485 = vld [vmem:[#allocation2 + $0x10] sm:$0xff]
        %v486 = vld [vmem:[#allocation2 + $0x18] sm:$0xff]
        %s487 = scalar_lea.vmem [#allocation2], 32
        %v488 = vld [vmem:[%s487] sm:$0xff]
        %v489 = vld [vmem:[%s487 + $0x8] sm:$0xff]
        %v490 = vld [vmem:[%s487 + $0x10] sm:$0xff]
        %v491 = vld [vmem:[%s487 + $0x18] sm:$0xff]
        %vm492 = vcmask 261120
        %v494 = vsel %vm492, %v488, 0
        %v497 = vsel %vm492, %v489, 0
        %v500 = vsel %vm492, %v490, 0
        %v503 = vsel %vm492, %v491, 0
        %505 = vmatprep.subr.mxu0 0.0
        %506 = vmatpush1.msra.mxu0 %v374
        %507 = vmatprep.subr.mxu0 0.0
        %508 = vmatpush1.msra.mxu0 %v380
        %509 = vmatprep.subr.mxu0 0.0
        %510 = vmatpush1.msra.mxu0 %v386
        %511 = vmatprep.subr.mxu0 0.0
        %512 = vmatpush1.msra.mxu0 %v392
        %513 = vmatprep.subr.mxu0 0.0
        %514 = vmatpush1.msra.mxu0 0.0
        %515 = vmatprep.subr.mxu0 0.0
        %516 = vmatpush1.msra.mxu0 0.0
        %517 = vmatprep.subr.mxu0 0.0
        %518 = vmatpush1.msra.mxu0 0.0
        %519 = vmatprep.subr.mxu0 0.0
        %520 = vmatpush1.msra.mxu0 0.0
        %521 = vmatprep.subr.mxu0 0.0
        %522 = vmatpush1.msra.mxu0 0.0
        %523 = vmatprep.subr.mxu0 0.0
        %524 = vmatpush1.msra.mxu0 0.0
        %525 = vmatprep.subr.mxu0 0.0
        %526 = vmatpush1.msra.mxu0 0.0
        %527 = vmatprep.subr.mxu0 0.0
        %528 = vmatpush1.msra.mxu0 0.0
        %529 = vmatprep.subr.mxu0 0.0
        %530 = vmatpush1.msra.mxu0 0.0
        %531 = vmatprep.subr.mxu0 0.0
        %532 = vmatpush1.msra.mxu0 0.0
        %533 = vmatprep.subr.mxu0 0.0
        %534 = vmatpush1.msra.mxu0 0.0
        %535 = vmatprep.subr.mxu0 0.0
        %536 = vmatpush1.msra.mxu0 0.0
        %537 = vmatprep.subr.mxu0 0.0
        %538 = vmatpush1.msra.mxu0 0.0
        %539 = vmatprep.subr.mxu0 0.0
        %540 = vmatpush1.msra.mxu0 0.0
        %541 = vmatprep.subr.mxu0 0.0
        %542 = vmatpush1.msra.mxu0 0.0
        %543 = vmatprep.subr.mxu0 0.0
        %544 = vmatpush1.msra.mxu0 0.0
        %545 = vmatprep.subr.mxu0 0.0
        %546 = vmatpush1.msra.mxu0 0.0
        %547 = vmatprep.subr.mxu0 0.0
        %548 = vmatpush1.msra.mxu0 0.0
        %549 = vmatprep.subr.mxu0 0.0
        %550 = vmatpush1.msra.mxu0 0.0
        %551 = vmatprep.subr.mxu0 0.0
        %552 = vmatpush1.msra.mxu0 0.0
        %553 = vmatprep.subr.mxu0 0.0
        %554 = vmatpush1.msra.mxu0 0.0
        %555 = vmatprep.subr.mxu0 0.0
        %556 = vmatpush1.msra.mxu0 0.0
        %557 = vmatprep.subr.mxu0 0.0
        %558 = vmatpush1.msra.mxu0 0.0
        %559 = vmatprep.subr.mxu0 0.0
        %560 = vmatpush1.msra.mxu0 0.0
        %561 = vmatprep.subr.mxu0 0.0
        %562 = vmatpush1.msra.mxu0 0.0
        %563 = vmatprep.subr.mxu0 0.0
        %564 = vmatpush1.msra.mxu0 0.0
        %565 = vmatprep.subr.mxu0 0.0
        %566 = vmatpush1.msra.mxu0 0.0
        %567 = vmatprep.subr.mxu0 0.0
        %568 = vmatpush1.msra.mxu0 0.0
        %569 = vmatprep.mubr.f32.mxu0 0.0
        %570 = vmatmul.mubr.f32.gmra.mrb[0].mxu0 %v494
        %v571 = vpop.f32.mrb[0].mxu0
        %v572 = vadd.f32 0.0, %v571
        %v573 = vpop.f32.mrb[0].mxu0
        %574 = vmatprep.mubr.f32.mxu0 0.0
        %575 = vmatmul.mubr.f32.gmra.mrb[0].mxu0 %v497
        %v576 = vpop.f32.mrb[0].mxu0
        %v577 = vadd.f32 0.0, %v576
        %v578 = vpop.f32.mrb[0].mxu0
        %579 = vmatprep.mubr.f32.mxu0 0.0
        %580 = vmatmul.mubr.f32.gmra.mrb[0].mxu0 %v500
        %v581 = vpop.f32.mrb[0].mxu0
        %v582 = vadd.f32 0.0, %v581
        %v583 = vpop.f32.mrb[0].mxu0
        %584 = vmatprep.mubr.f32.mxu0 0.0
        %585 = vmatmul.mubr.f32.gmra.mrb[0].mxu0 %v503
        %v586 = vpop.f32.mrb[0].mxu0
        %v587 = vadd.f32 0.0, %v586
        %v588 = vpop.f32.mrb[0].mxu0
        %589 = vdwg.mxu0
        %v591 = vsel %vm492, %v483, 0
        %v594 = vsel %vm492, %v484, 0
        %v597 = vsel %vm492, %v485, 0
        %v600 = vsel %vm492, %v486, 0
        %602 = vmatprep.subr.mxu0 0.0
        %603 = vmatpush1.msra.mxu0 %v372
        %604 = vmatprep.subr.mxu0 0.0
        %605 = vmatpush1.msra.mxu0 %v378
        %606 = vmatprep.subr.mxu0 0.0
        %607 = vmatpush1.msra.mxu0 %v384
        %608 = vmatprep.subr.mxu0 0.0
        %609 = vmatpush1.msra.mxu0 %v390
        %610 = vmatprep.subr.mxu0 0.0
        %611 = vmatpush1.msra.mxu0 0.0
        %612 = vmatprep.subr.mxu0 0.0
        %613 = vmatpush1.msra.mxu0 0.0
        %614 = vmatprep.subr.mxu0 0.0
        %615 = vmatpush1.msra.mxu0 0.0
        %616 = vmatprep.subr.mxu0 0.0
        %617 = vmatpush1.msra.mxu0 0.0
        %618 = vmatprep.subr.mxu0 0.0
        %619 = vmatpush1.msra.mxu0 0.0
        %620 = vmatprep.subr.mxu0 0.0
        %621 = vmatpush1.msra.mxu0 0.0
        %622 = vmatprep.subr.mxu0 0.0
        %623 = vmatpush1.msra.mxu0 0.0
        %624 = vmatprep.subr.mxu0 0.0
        %625 = vmatpush1.msra.mxu0 0.0
        %626 = vmatprep.subr.mxu0 0.0
        %627 = vmatpush1.msra.mxu0 0.0
        %628 = vmatprep.subr.mxu0 0.0
        %629 = vmatpush1.msra.mxu0 0.0
        %630 = vmatprep.subr.mxu0 0.0
        %631 = vmatpush1.msra.mxu0 0.0
        %632 = vmatprep.subr.mxu0 0.0
        %633 = vmatpush1.msra.mxu0 0.0
        %634 = vmatprep.subr.mxu0 0.0
        %635 = vmatpush1.msra.mxu0 0.0
        %636 = vmatprep.subr.mxu0 0.0
        %637 = vmatpush1.msra.mxu0 0.0
        %638 = vmatprep.subr.mxu0 0.0
        %639 = vmatpush1.msra.mxu0 0.0
        %640 = vmatprep.subr.mxu0 0.0
        %641 = vmatpush1.msra.mxu0 0.0
        %642 = vmatprep.subr.mxu0 0.0
        %643 = vmatpush1.msra.mxu0 0.0
        %644 = vmatprep.subr.mxu0 0.0
        %645 = vmatpush1.msra.mxu0 0.0
        %646 = vmatprep.subr.mxu0 0.0
        %647 = vmatpush1.msra.mxu0 0.0
        %648 = vmatprep.subr.mxu0 0.0
        %649 = vmatpush1.msra.mxu0 0.0
        %650 = vmatprep.subr.mxu0 0.0
        %651 = vmatpush1.msra.mxu0 0.0
        %652 = vmatprep.subr.mxu0 0.0
        %653 = vmatpush1.msra.mxu0 0.0
        %654 = vmatprep.subr.mxu0 0.0
        %655 = vmatpush1.msra.mxu0 0.0
        %656 = vmatprep.subr.mxu0 0.0
        %657 = vmatpush1.msra.mxu0 0.0
        %658 = vmatprep.subr.mxu0 0.0
        %659 = vmatpush1.msra.mxu0 0.0
        %660 = vmatprep.subr.mxu0 0.0
        %661 = vmatpush1.msra.mxu0 0.0
        %662 = vmatprep.subr.mxu0 0.0
        %663 = vmatpush1.msra.mxu0 0.0
        %664 = vmatprep.subr.mxu0 0.0
        %665 = vmatpush1.msra.mxu0 0.0
        %666 = vmatprep.mubr.f32.mxu0 0.0
        %667 = vmatmul.mubr.f32.gmra.mrb[0].mxu0 %v591
        %v668 = vpop.f32.mrb[0].mxu0
        %v669 = vadd.f32 %v572, %v668
        %v670 = vpop.f32.mrb[0].mxu0
        %671 = vmatprep.mubr.f32.mxu0 0.0
        %672 = vmatmul.mubr.f32.gmra.mrb[0].mxu0 %v594
        %v673 = vpop.f32.mrb[0].mxu0
        %v674 = vadd.f32 %v577, %v673
        %v675 = vpop.f32.mrb[0].mxu0
        %676 = vmatprep.mubr.f32.mxu0 0.0
        %677 = vmatmul.mubr.f32.gmra.mrb[0].mxu0 %v597
        %v678 = vpop.f32.mrb[0].mxu0
        %v679 = vadd.f32 %v582, %v678
        %v680 = vpop.f32.mrb[0].mxu0
        %681 = vmatprep.mubr.f32.mxu0 0.0
        %682 = vmatmul.mubr.f32.gmra.mrb[0].mxu0 %v600
        %v683 = vpop.f32.mrb[0].mxu0
        %v684 = vadd.f32 %v587, %v683
        %v685 = vpop.f32.mrb[0].mxu0
        %686 = vdwg.mxu0
        %s687 = scalar_lea.vmem [#allocation2], 64
        %v688 = vld [vmem:[%s687] sm:$0xff]
        %v689 = vld [vmem:[%s687 + $0x8] sm:$0xff]
        %v690 = vld [vmem:[%s687 + $0x10] sm:$0xff]
        %v691 = vld [vmem:[%s687 + $0x18] sm:$0xff]
        %v693 = vsel %vm492, %v688, 0
        %v696 = vsel %vm492, %v689, 0
        %v699 = vsel %vm492, %v690, 0
        %v702 = vsel %vm492, %v691, 0
        %704 = vmatprep.subr.mxu0 0.0
        %705 = vmatpush1.msra.mxu0 %v461
        %706 = vmatprep.subr.mxu0 0.0
        %707 = vmatpush1.msra.mxu0 %v467
        %708 = vmatprep.subr.mxu0 0.0
        %709 = vmatpush1.msra.mxu0 %v473
        %710 = vmatprep.subr.mxu0 0.0
        %711 = vmatpush1.msra.mxu0 %v479
        %712 = vmatprep.subr.mxu0 0.0
        %713 = vmatpush1.msra.mxu0 0.0
        %714 = vmatprep.subr.mxu0 0.0
        %715 = vmatpush1.msra.mxu0 0.0
        %716 = vmatprep.subr.mxu0 0.0
        %717 = vmatpush1.msra.mxu0 0.0
        %718 = vmatprep.subr.mxu0 0.0
        %719 = vmatpush1.msra.mxu0 0.0
        %720 = vmatprep.subr.mxu0 0.0
        %721 = vmatpush1.msra.mxu0 0.0
        %722 = vmatprep.subr.mxu0 0.0
        %723 = vmatpush1.msra.mxu0 0.0
        %724 = vmatprep.subr.mxu0 0.0
        %725 = vmatpush1.msra.mxu0 0.0
        %726 = vmatprep.subr.mxu0 0.0
        %727 = vmatpush1.msra.mxu0 0.0
        %728 = vmatprep.subr.mxu0 0.0
        %729 = vmatpush1.msra.mxu0 0.0
        %730 = vmatprep.subr.mxu0 0.0
        %731 = vmatpush1.msra.mxu0 0.0
        %732 = vmatprep.subr.mxu0 0.0
        %733 = vmatpush1.msra.mxu0 0.0
        %734 = vmatprep.subr.mxu0 0.0
        %735 = vmatpush1.msra.mxu0 0.0
        %736 = vmatprep.subr.mxu0 0.0
        %737 = vmatpush1.msra.mxu0 0.0
        %738 = vmatprep.subr.mxu0 0.0
        %739 = vmatpush1.msra.mxu0 0.0
        %740 = vmatprep.subr.mxu0 0.0
        %741 = vmatpush1.msra.mxu0 0.0
        %742 = vmatprep.subr.mxu0 0.0
        %743 = vmatpush1.msra.mxu0 0.0
        %744 = vmatprep.subr.mxu0 0.0
        %745 = vmatpush1.msra.mxu0 0.0
        %746 = vmatprep.subr.mxu0 0.0
        %747 = vmatpush1.msra.mxu0 0.0
        %748 = vmatprep.subr.mxu0 0.0
        %749 = vmatpush1.msra.mxu0 0.0
        %750 = vmatprep.subr.mxu0 0.0
        %751 = vmatpush1.msra.mxu0 0.0
        %752 = vmatprep.subr.mxu0 0.0
        %753 = vmatpush1.msra.mxu0 0.0
        %754 = vmatprep.subr.mxu0 0.0
        %755 = vmatpush1.msra.mxu0 0.0
        %756 = vmatprep.subr.mxu0 0.0
        %757 = vmatpush1.msra.mxu0 0.0
        %758 = vmatprep.subr.mxu0 0.0
        %759 = vmatpush1.msra.mxu0 0.0
        %760 = vmatprep.subr.mxu0 0.0
        %761 = vmatpush1.msra.mxu0 0.0
        %762 = vmatprep.subr.mxu0 0.0
        %763 = vmatpush1.msra.mxu0 0.0
        %764 = vmatprep.subr.mxu0 0.0
        %765 = vmatpush1.msra.mxu0 0.0
        %766 = vmatprep.subr.mxu0 0.0
        %767 = vmatpush1.msra.mxu0 0.0
        %768 = vmatprep.mubr.f32.mxu0 0.0
        %769 = vmatmul.mubr.f32.gmra.mrb[0].mxu0 %v693
        %v770 = vpop.f32.mrb[0].mxu0
        %v771 = vadd.f32 0.0, %v770
        %v772 = vpop.f32.mrb[0].mxu0
        %773 = vmatprep.mubr.f32.mxu0 0.0
        %774 = vmatmul.mubr.f32.gmra.mrb[0].mxu0 %v696
        %v775 = vpop.f32.mrb[0].mxu0
        %v776 = vadd.f32 0.0, %v775
        %v777 = vpop.f32.mrb[0].mxu0
        %778 = vmatprep.mubr.f32.mxu0 0.0
        %779 = vmatmul.mubr.f32.gmra.mrb[0].mxu0 %v699
        %v780 = vpop.f32.mrb[0].mxu0
        %v781 = vadd.f32 0.0, %v780
        %v782 = vpop.f32.mrb[0].mxu0
        %783 = vmatprep.mubr.f32.mxu0 0.0
        %784 = vmatmul.mubr.f32.gmra.mrb[0].mxu0 %v702
        %v785 = vpop.f32.mrb[0].mxu0
        %v786 = vadd.f32 0.0, %v785
        %v787 = vpop.f32.mrb[0].mxu0
        %788 = vdwg.mxu0
        %v789 = vadd.f32 %v669, %v771
        %v790 = vadd.f32 %v674, %v776
        %v791 = vadd.f32 %v679, %v781
        %v792 = vadd.f32 %v684, %v786
        %s793 = scalar_lea.vmem [#allocation2], 96
        %v794 = vld [vmem:[%s793] sm:$0xff]
        %v795 = vld [vmem:[%s793 + $0x8] sm:$0xff]
        %v796 = vld [vmem:[%s793 + $0x10] sm:$0xff]
        %v797 = vld [vmem:[%s793 + $0x18] sm:$0xff]
        %v799 = vsel %vm492, %v794, 0
        %v802 = vsel %vm492, %v795, 0
        %v805 = vsel %vm492, %v796, 0
        %v808 = vsel %vm492, %v797, 0
        %810 = vmatprep.subr.mxu0 0.0
        %811 = vmatpush1.msra.mxu0 %v463
        %812 = vmatprep.subr.mxu0 0.0
        %813 = vmatpush1.msra.mxu0 %v469
        %814 = vmatprep.subr.mxu0 0.0
        %815 = vmatpush1.msra.mxu0 %v475
        %816 = vmatprep.subr.mxu0 0.0
        %817 = vmatpush1.msra.mxu0 %v481
        %818 = vmatprep.subr.mxu0 0.0
        %819 = vmatpush1.msra.mxu0 0.0
        %820 = vmatprep.subr.mxu0 0.0
        %821 = vmatpush1.msra.mxu0 0.0
        %822 = vmatprep.subr.mxu0 0.0
        %823 = vmatpush1.msra.mxu0 0.0
        %824 = vmatprep.subr.mxu0 0.0
        %825 = vmatpush1.msra.mxu0 0.0
        %826 = vmatprep.subr.mxu0 0.0
        %827 = vmatpush1.msra.mxu0 0.0
        %828 = vmatprep.subr.mxu0 0.0
        %829 = vmatpush1.msra.mxu0 0.0
        %830 = vmatprep.subr.mxu0 0.0
        %831 = vmatpush1.msra.mxu0 0.0
        %832 = vmatprep.subr.mxu0 0.0
        %833 = vmatpush1.msra.mxu0 0.0
        %834 = vmatprep.subr.mxu0 0.0
        %835 = vmatpush1.msra.mxu0 0.0
        %836 = vmatprep.subr.mxu0 0.0
        %837 = vmatpush1.msra.mxu0 0.0
        %838 = vmatprep.subr.mxu0 0.0
        %839 = vmatpush1.msra.mxu0 0.0
        %840 = vmatprep.subr.mxu0 0.0
        %841 = vmatpush1.msra.mxu0 0.0
        %842 = vmatprep.subr.mxu0 0.0
        %843 = vmatpush1.msra.mxu0 0.0
        %844 = vmatprep.subr.mxu0 0.0
        %845 = vmatpush1.msra.mxu0 0.0
        %846 = vmatprep.subr.mxu0 0.0
        %847 = vmatpush1.msra.mxu0 0.0
        %848 = vmatprep.subr.mxu0 0.0
        %849 = vmatpush1.msra.mxu0 0.0
        %850 = vmatprep.subr.mxu0 0.0
        %851 = vmatpush1.msra.mxu0 0.0
        %852 = vmatprep.subr.mxu0 0.0
        %853 = vmatpush1.msra.mxu0 0.0
        %854 = vmatprep.subr.mxu0 0.0
        %855 = vmatpush1.msra.mxu0 0.0
        %856 = vmatprep.subr.mxu0 0.0
        %857 = vmatpush1.msra.mxu0 0.0
        %858 = vmatprep.subr.mxu0 0.0
        %859 = vmatpush1.msra.mxu0 0.0
        %860 = vmatprep.subr.mxu0 0.0
        %861 = vmatpush1.msra.mxu0 0.0
        %862 = vmatprep.subr.mxu0 0.0
        %863 = vmatpush1.msra.mxu0 0.0
        %864 = vmatprep.subr.mxu0 0.0
        %865 = vmatpush1.msra.mxu0 0.0
        %866 = vmatprep.subr.mxu0 0.0
        %867 = vmatpush1.msra.mxu0 0.0
        %868 = vmatprep.subr.mxu0 0.0
        %869 = vmatpush1.msra.mxu0 0.0
        %870 = vmatprep.subr.mxu0 0.0
        %871 = vmatpush1.msra.mxu0 0.0
        %872 = vmatprep.subr.mxu0 0.0
        %873 = vmatpush1.msra.mxu0 0.0
        %874 = vmatprep.mubr.f32.mxu0 0.0
        %875 = vmatmul.mubr.f32.gmra.mrb[0].mxu0 %v799
        %v876 = vpop.f32.mrb[0].mxu0
        %v877 = vadd.f32 0.0, %v876
        %v878 = vpop.f32.mrb[0].mxu0
        %879 = vmatprep.mubr.f32.mxu0 0.0
        %880 = vmatmul.mubr.f32.gmra.mrb[0].mxu0 %v802
        %v881 = vpop.f32.mrb[0].mxu0
        %v882 = vadd.f32 0.0, %v881
        %v883 = vpop.f32.mrb[0].mxu0
        %884 = vmatprep.mubr.f32.mxu0 0.0
        %885 = vmatmul.mubr.f32.gmra.mrb[0].mxu0 %v805
        %v886 = vpop.f32.mrb[0].mxu0
        %v887 = vadd.f32 0.0, %v886
        %v888 = vpop.f32.mrb[0].mxu0
        %889 = vmatprep.mubr.f32.mxu0 0.0
        %890 = vmatmul.mubr.f32.gmra.mrb[0].mxu0 %v808
        %v891 = vpop.f32.mrb[0].mxu0
        %v892 = vadd.f32 0.0, %v891
        %v893 = vpop.f32.mrb[0].mxu0
        %894 = vdwg.mxu0
        %v895 = vadd.f32 %v789, %v877
        %v896 = vadd.f32 %v790, %v882
        %v897 = vadd.f32 %v791, %v887
        %v898 = vadd.f32 %v792, %v892
        %v900 = vlaneseq
        %v901 = vshrl.u32 %v900, 7
        %v902 = vsub.s32 0, %v901
        %v903 = vrot.slane %v291, %v902
        %v905 = vadd.f32 %v895, %v903
        %v906 = vadd.f32 %v896, %v903
        %v907 = vadd.f32 %v897, %v903
        %v908 = vadd.f32 %v898, %v903
        %v909 = vmax.f32 %v905, 0.0
        %v910 = vmax.f32 %v906, 0.0
        %v911 = vmax.f32 %v907, 0.0
        %v912 = vmax.f32 %v908, 0.0
        %v913 = vld [vmem:[#allocation5] sm:$0xff]
        %v914 = vld [vmem:[#allocation5 + $0x8] sm:$0xff]
        %v915 = vld [vmem:[#allocation5 + $0x10] sm:$0xff]
        %v916 = vld [vmem:[#allocation5 + $0x18] sm:$0xff]
        %v917 = vld [vmem:[#allocation5 + $0x20] sm:$0xff]
        %v918 = vld [vmem:[#allocation5 + $0x28] sm:$0xff]
        %v919 = vld [vmem:[#allocation5 + $0x30] sm:$0xff]
        %v920 = vld [vmem:[#allocation5 + $0x38] sm:$0xff]
        %v921 = vld [vmem:[#allocation5 + $0x40] sm:$0xff]
        %v922 = vld [vmem:[#allocation5 + $0x48] sm:$0xff]
        %v923 = vld [vmem:[#allocation5 + $0x50] sm:$0xff]
        %v924 = vld [vmem:[#allocation5 + $0x58] sm:$0xff]
        %v925 = vld [vmem:[#allocation5 + $0x60] sm:$0xff]
        %v926 = vld [vmem:[#allocation5 + $0x68] sm:$0xff]
        %v927 = vld [vmem:[#allocation5 + $0x70] sm:$0xff]
        %v928 = vld [vmem:[#allocation5 + $0x78] sm:$0xff]
        %v929 = vld [vmem:[#allocation5 + $0x80] sm:$0xff]
        %v930 = vld [vmem:[#allocation5 + $0x88] sm:$0xff]
        %v931 = vld [vmem:[#allocation5 + $0x90] sm:$0xff]
        %v932 = vld [vmem:[#allocation5 + $0x98] sm:$0xff]
        %v933 = vld [vmem:[#allocation5 + $0xa0] sm:$0xff]
        %v934 = vld [vmem:[#allocation5 + $0xa8] sm:$0xff]
        %v935 = vld [vmem:[#allocation5 + $0xb0] sm:$0xff]
        %v936 = vld [vmem:[#allocation5 + $0xb8] sm:$0xff]
        %v937 = vld [vmem:[#allocation5 + $0xc0] sm:$0xff]
        %v938 = vld [vmem:[#allocation5 + $0xc8] sm:$0xff]
        %v939 = vld [vmem:[#allocation5 + $0xd0] sm:$0xff]
        %v940 = vld [vmem:[#allocation5 + $0xd8] sm:$0xff]
        %v941 = vld [vmem:[#allocation5 + $0xe0] sm:$0xff]
        %v942 = vld [vmem:[#allocation5 + $0xe8] sm:$0xff]
        %v943 = vld [vmem:[#allocation5 + $0xf0] sm:$0xff]
        %v944 = vld [vmem:[#allocation5 + $0xf8] sm:$0xff]
        %v945 = vld [vmem:[#allocation5 + $0x100] sm:$0xff]
        %v946 = vld [vmem:[#allocation5 + $0x108] sm:$0xff]
        %v947 = vld [vmem:[#allocation5 + $0x110] sm:$0xff]
        %v948 = vld [vmem:[#allocation5 + $0x118] sm:$0xff]
        %v949 = vld [vmem:[#allocation5 + $0x120] sm:$0xff]
        %v950 = vld [vmem:[#allocation5 + $0x128] sm:$0xff]
        %v951 = vld [vmem:[#allocation5 + $0x130] sm:$0xff]
        %v952 = vld [vmem:[#allocation5 + $0x138] sm:$0xff]
        %v953 = vld [vmem:[#allocation5 + $0x140] sm:$0xff]
        %v954 = vld [vmem:[#allocation5 + $0x148] sm:$0xff]
        %v955 = vld [vmem:[#allocation5 + $0x150] sm:$0xff]
        %v956 = vld [vmem:[#allocation5 + $0x158] sm:$0xff]
        %v957 = vld [vmem:[#allocation5 + $0x160] sm:$0xff]
        %v958 = vld [vmem:[#allocation5 + $0x168] sm:$0xff]
        %v959 = vld [vmem:[#allocation5 + $0x170] sm:$0xff]
        %v960 = vld [vmem:[#allocation5 + $0x178] sm:$0xff]
        %v961 = vld [vmem:[#allocation5 + $0x180] sm:$0xff]
        %v962 = vld [vmem:[#allocation5 + $0x188] sm:$0xff]
        %v963 = vld [vmem:[#allocation5 + $0x190] sm:$0xff]
        %v964 = vld [vmem:[#allocation5 + $0x198] sm:$0xff]
        %v965 = vld [vmem:[#allocation5 + $0x1a0] sm:$0xff]
        %v966 = vld [vmem:[#allocation5 + $0x1a8] sm:$0xff]
        %v967 = vld [vmem:[#allocation5 + $0x1b0] sm:$0xff]
        %v968 = vld [vmem:[#allocation5 + $0x1b8] sm:$0xff]
        %v969 = vld [vmem:[#allocation5 + $0x1c0] sm:$0xff]
        %v970 = vld [vmem:[#allocation5 + $0x1c8] sm:$0xff]
        %v971 = vld [vmem:[#allocation5 + $0x1d0] sm:$0xff]
        %v972 = vld [vmem:[#allocation5 + $0x1d8] sm:$0xff]
        %v973 = vld [vmem:[#allocation5 + $0x1e0] sm:$0xff]
        %v974 = vld [vmem:[#allocation5 + $0x1e8] sm:$0xff]
        %v975 = vld [vmem:[#allocation5 + $0x1f0] sm:$0xff]
        %v976 = vld [vmem:[#allocation5 + $0x1f8] sm:$0xff]
        %v977 = vld [vmem:[%s5] sm:$0x1]
        %978 = vmatprep.subr.mxu0 %v914
        %979 = vmatpush1.msra.mxu0 %v913
        %980 = vmatprep.subr.mxu0 %v918
        %981 = vmatpush1.msra.mxu0 %v917
        %982 = vmatprep.subr.mxu0 %v922
        %983 = vmatpush1.msra.mxu0 %v921
        %984 = vmatprep.subr.mxu0 %v926
        %985 = vmatpush1.msra.mxu0 %v925
        %986 = vmatprep.subr.mxu0 %v930
        %987 = vmatpush1.msra.mxu0 %v929
        %988 = vmatprep.subr.mxu0 %v934
        %989 = vmatpush1.msra.mxu0 %v933
        %990 = vmatprep.subr.mxu0 %v938
        %991 = vmatpush1.msra.mxu0 %v937
        %992 = vmatprep.subr.mxu0 %v942
        %993 = vmatpush1.msra.mxu0 %v941
        %994 = vmatprep.subr.mxu0 %v946
        %995 = vmatpush1.msra.mxu0 %v945
        %996 = vmatprep.subr.mxu0 %v950
        %997 = vmatpush1.msra.mxu0 %v949
        %998 = vmatprep.subr.mxu0 %v954
        %999 = vmatpush1.msra.mxu0 %v953
        %1000 = vmatprep.subr.mxu0 %v958
        %1001 = vmatpush1.msra.mxu0 %v957
        %1002 = vmatprep.subr.mxu0 %v962
        %1003 = vmatpush1.msra.mxu0 %v961
        %1004 = vmatprep.subr.mxu0 %v966
        %1005 = vmatpush1.msra.mxu0 %v965
        %1006 = vmatprep.subr.mxu0 %v970
        %1007 = vmatpush1.msra.mxu0 %v969
        %1008 = vmatprep.subr.mxu0 %v974
        %1009 = vmatpush1.msra.mxu0 %v973
        %1010 = vmatprep.subr.mxu0 0.0
        %1011 = vmatpush1.msra.mxu0 0.0
        %1012 = vmatprep.subr.mxu0 0.0
        %1013 = vmatpush1.msra.mxu0 0.0
        %1014 = vmatprep.subr.mxu0 0.0
        %1015 = vmatpush1.msra.mxu0 0.0
        %1016 = vmatprep.subr.mxu0 0.0
        %1017 = vmatpush1.msra.mxu0 0.0
        %1018 = vmatprep.subr.mxu0 0.0
        %1019 = vmatpush1.msra.mxu0 0.0
        %1020 = vmatprep.subr.mxu0 0.0
        %1021 = vmatpush1.msra.mxu0 0.0
        %1022 = vmatprep.subr.mxu0 0.0
        %1023 = vmatpush1.msra.mxu0 0.0
        %1024 = vmatprep.subr.mxu0 0.0
        %1025 = vmatpush1.msra.mxu0 0.0
        %1026 = vmatprep.subr.mxu0 0.0
        %1027 = vmatpush1.msra.mxu0 0.0
        %1028 = vmatprep.subr.mxu0 0.0
        %1029 = vmatpush1.msra.mxu0 0.0
        %1030 = vmatprep.subr.mxu0 0.0
        %1031 = vmatpush1.msra.mxu0 0.0
        %1032 = vmatprep.subr.mxu0 0.0
        %1033 = vmatpush1.msra.mxu0 0.0
        %1034 = vmatprep.subr.mxu0 0.0
        %1035 = vmatpush1.msra.mxu0 0.0
        %1036 = vmatprep.subr.mxu0 0.0
        %1037 = vmatpush1.msra.mxu0 0.0
        %1038 = vmatprep.subr.mxu0 0.0
        %1039 = vmatpush1.msra.mxu0 0.0
        %1040 = vmatprep.subr.mxu0 0.0
        %1041 = vmatpush1.msra.mxu0 0.0
        %1042 = vmatprep.mubr.f32.mxu0 0.0
        %1043 = vmatmul.mubr.f32.gmra.mrb[0].mxu0 %v909
        %v1044 = vpop.f32.mrb[0].mxu0
        %v1045 = vadd.f32 0.0, %v1044
        %v1046 = vpop.f32.mrb[0].mxu0
        %v1047 = vadd.f32 0.0, %v1046
        %1048 = vmatprep.mubr.f32.mxu0 0.0
        %1049 = vmatmul.mubr.f32.gmra.mrb[0].mxu0 %v910
        %v1050 = vpop.f32.mrb[0].mxu0
        %v1051 = vadd.f32 0.0, %v1050
        %v1052 = vpop.f32.mrb[0].mxu0
        %v1053 = vadd.f32 0.0, %v1052
        %1054 = vmatprep.mubr.f32.mxu0 0.0
        %1055 = vmatmul.mubr.f32.gmra.mrb[0].mxu0 %v911
        %v1056 = vpop.f32.mrb[0].mxu0
        %v1057 = vadd.f32 0.0, %v1056
        %v1058 = vpop.f32.mrb[0].mxu0
        %v1059 = vadd.f32 0.0, %v1058
        %1060 = vmatprep.mubr.f32.mxu0 0.0
        %1061 = vmatmul.mubr.f32.gmra.mrb[0].mxu0 %v912
        %v1062 = vpop.f32.mrb[0].mxu0
        %v1063 = vadd.f32 0.0, %v1062
        %v1064 = vpop.f32.mrb[0].mxu0
        %v1065 = vadd.f32 0.0, %v1064
        %1066 = vdwg.mxu0
        %1067 = vmatprep.subr.mxu0 %v916
        %1068 = vmatpush1.msra.mxu0 %v915
        %1069 = vmatprep.subr.mxu0 %v920
        %1070 = vmatpush1.msra.mxu0 %v919
        %1071 = vmatprep.subr.mxu0 %v924
        %1072 = vmatpush1.msra.mxu0 %v923
        %1073 = vmatprep.subr.mxu0 %v928
        %1074 = vmatpush1.msra.mxu0 %v927
        %1075 = vmatprep.subr.mxu0 %v932
        %1076 = vmatpush1.msra.mxu0 %v931
        %1077 = vmatprep.subr.mxu0 %v936
        %1078 = vmatpush1.msra.mxu0 %v935
        %1079 = vmatprep.subr.mxu0 %v940
        %1080 = vmatpush1.msra.mxu0 %v939
        %1081 = vmatprep.subr.mxu0 %v944
        %1082 = vmatpush1.msra.mxu0 %v943
        %1083 = vmatprep.subr.mxu0 %v948
        %1084 = vmatpush1.msra.mxu0 %v947
        %1085 = vmatprep.subr.mxu0 %v952
        %1086 = vmatpush1.msra.mxu0 %v951
        %1087 = vmatprep.subr.mxu0 %v956
        %1088 = vmatpush1.msra.mxu0 %v955
        %1089 = vmatprep.subr.mxu0 %v960
        %1090 = vmatpush1.msra.mxu0 %v959
        %1091 = vmatprep.subr.mxu0 %v964
        %1092 = vmatpush1.msra.mxu0 %v963
        %1093 = vmatprep.subr.mxu0 %v968
        %1094 = vmatpush1.msra.mxu0 %v967
        %1095 = vmatprep.subr.mxu0 %v972
        %1096 = vmatpush1.msra.mxu0 %v971
        %1097 = vmatprep.subr.mxu0 %v976
        %1098 = vmatpush1.msra.mxu0 %v975
        %1099 = vmatprep.subr.mxu0 0.0
        %1100 = vmatpush1.msra.mxu0 0.0
        %1101 = vmatprep.subr.mxu0 0.0
        %1102 = vmatpush1.msra.mxu0 0.0
        %1103 = vmatprep.subr.mxu0 0.0
        %1104 = vmatpush1.msra.mxu0 0.0
        %1105 = vmatprep.subr.mxu0 0.0
        %1106 = vmatpush1.msra.mxu0 0.0
        %1107 = vmatprep.subr.mxu0 0.0
        %1108 = vmatpush1.msra.mxu0 0.0
        %1109 = vmatprep.subr.mxu0 0.0
        %1110 = vmatpush1.msra.mxu0 0.0
        %1111 = vmatprep.subr.mxu0 0.0
        %1112 = vmatpush1.msra.mxu0 0.0
        %1113 = vmatprep.subr.mxu0 0.0
        %1114 = vmatpush1.msra.mxu0 0.0
        %1115 = vmatprep.subr.mxu0 0.0
        %1116 = vmatpush1.msra.mxu0 0.0
        %1117 = vmatprep.subr.mxu0 0.0
        %1118 = vmatpush1.msra.mxu0 0.0
        %1119 = vmatprep.subr.mxu0 0.0
        %1120 = vmatpush1.msra.mxu0 0.0
        %1121 = vmatprep.subr.mxu0 0.0
        %1122 = vmatpush1.msra.mxu0 0.0
        %1123 = vmatprep.subr.mxu0 0.0
        %1124 = vmatpush1.msra.mxu0 0.0
        %1125 = vmatprep.subr.mxu0 0.0
        %1126 = vmatpush1.msra.mxu0 0.0
        %1127 = vmatprep.subr.mxu0 0.0
        %1128 = vmatpush1.msra.mxu0 0.0
        %1129 = vmatprep.subr.mxu0 0.0
        %1130 = vmatpush1.msra.mxu0 0.0
        %1131 = vmatprep.mubr.f32.mxu0 0.0
        %1132 = vmatmul.mubr.f32.gmra.mrb[0].mxu0 %v909
        %v1133 = vpop.f32.mrb[0].mxu0
        %v1134 = vadd.f32 0.0, %v1133
        %v1135 = vpop.f32.mrb[0].mxu0
        %v1136 = vadd.f32 0.0, %v1135
        %1137 = vmatprep.mubr.f32.mxu0 0.0
        %1138 = vmatmul.mubr.f32.gmra.mrb[0].mxu0 %v910
        %v1139 = vpop.f32.mrb[0].mxu0
        %v1140 = vadd.f32 0.0, %v1139
        %v1141 = vpop.f32.mrb[0].mxu0
        %v1142 = vadd.f32 0.0, %v1141
        %1143 = vmatprep.mubr.f32.mxu0 0.0
        %1144 = vmatmul.mubr.f32.gmra.mrb[0].mxu0 %v911
        %v1145 = vpop.f32.mrb[0].mxu0
        %v1146 = vadd.f32 0.0, %v1145
        %v1147 = vpop.f32.mrb[0].mxu0
        %v1148 = vadd.f32 0.0, %v1147
        %1149 = vmatprep.mubr.f32.mxu0 0.0
        %1150 = vmatmul.mubr.f32.gmra.mrb[0].mxu0 %v912
        %v1151 = vpop.f32.mrb[0].mxu0
        %v1152 = vadd.f32 0.0, %v1151
        %v1153 = vpop.f32.mrb[0].mxu0
        %v1154 = vadd.f32 0.0, %v1153
        %1155 = vdwg.mxu0
        %1156 = vmatprep.subr.mxu0 0.0
        %1157 = vmatpush1.msra.mxu0 %v1047
        %1158 = vmatprep.subr.mxu0 0.0
        %1159 = vmatpush1.msra.mxu0 %v1053
        %1160 = vmatprep.subr.mxu0 0.0
        %1161 = vmatpush1.msra.mxu0 %v1059
        %1162 = vmatprep.subr.mxu0 0.0
        %1163 = vmatpush1.msra.mxu0 %v1065
        %1164 = vmatprep.subr.mxu0 0.0
        %1165 = vmatpush1.msra.mxu0 0.0
        %1166 = vmatprep.subr.mxu0 0.0
        %1167 = vmatpush1.msra.mxu0 0.0
        %1168 = vmatprep.subr.mxu0 0.0
        %1169 = vmatpush1.msra.mxu0 0.0
        %1170 = vmatprep.subr.mxu0 0.0
        %1171 = vmatpush1.msra.mxu0 0.0
        %1172 = vmatprep.subr.mxu0 0.0
        %1173 = vmatpush1.msra.mxu0 0.0
        %1174 = vmatprep.subr.mxu0 0.0
        %1175 = vmatpush1.msra.mxu0 0.0
        %1176 = vmatprep.subr.mxu0 0.0
        %1177 = vmatpush1.msra.mxu0 0.0
        %1178 = vmatprep.subr.mxu0 0.0
        %1179 = vmatpush1.msra.mxu0 0.0
        %1180 = vmatprep.subr.mxu0 0.0
        %1181 = vmatpush1.msra.mxu0 0.0
        %1182 = vmatprep.subr.mxu0 0.0
        %1183 = vmatpush1.msra.mxu0 0.0
        %1184 = vmatprep.subr.mxu0 0.0
        %1185 = vmatpush1.msra.mxu0 0.0
        %1186 = vmatprep.subr.mxu0 0.0
        %1187 = vmatpush1.msra.mxu0 0.0
        %1188 = vmatprep.subr.mxu0 0.0
        %1189 = vmatpush1.msra.mxu0 0.0
        %1190 = vmatprep.subr.mxu0 0.0
        %1191 = vmatpush1.msra.mxu0 0.0
        %1192 = vmatprep.subr.mxu0 0.0
        %1193 = vmatpush1.msra.mxu0 0.0
        %1194 = vmatprep.subr.mxu0 0.0
        %1195 = vmatpush1.msra.mxu0 0.0
        %1196 = vmatprep.subr.mxu0 0.0
        %1197 = vmatpush1.msra.mxu0 0.0
        %1198 = vmatprep.subr.mxu0 0.0
        %1199 = vmatpush1.msra.mxu0 0.0
        %1200 = vmatprep.subr.mxu0 0.0
        %1201 = vmatpush1.msra.mxu0 0.0
        %1202 = vmatprep.subr.mxu0 0.0
        %1203 = vmatpush1.msra.mxu0 0.0
        %1204 = vmatprep.subr.mxu0 0.0
        %1205 = vmatpush1.msra.mxu0 0.0
        %1206 = vmatprep.subr.mxu0 0.0
        %1207 = vmatpush1.msra.mxu0 0.0
        %1208 = vmatprep.subr.mxu0 0.0
        %1209 = vmatpush1.msra.mxu0 0.0
        %1210 = vmatprep.subr.mxu0 0.0
        %1211 = vmatpush1.msra.mxu0 0.0
        %1212 = vmatprep.subr.mxu0 0.0
        %1213 = vmatpush1.msra.mxu0 0.0
        %1214 = vmatprep.subr.mxu0 0.0
        %1215 = vmatpush1.msra.mxu0 0.0
        %1216 = vmatprep.subr.mxu0 0.0
        %1217 = vmatpush1.msra.mxu0 0.0
        %1218 = vmatprep.subr.mxu0 0.0
        %1219 = vmatpush1.msra.mxu0 0.0
        %1220 = vmatprep.mubr.f32.mxu0 0.0
        %1221 = vmatmul.mubr.f32.gmra.mrb[0].mxu0 %v494
        %v1222 = vpop.f32.mrb[0].mxu0
        %v1223 = vadd.f32 0.0, %v1222
        %v1224 = vpop.f32.mrb[0].mxu0
        %1225 = vmatprep.mubr.f32.mxu0 0.0
        %1226 = vmatmul.mubr.f32.gmra.mrb[0].mxu0 %v497
        %v1227 = vpop.f32.mrb[0].mxu0
        %v1228 = vadd.f32 0.0, %v1227
        %v1229 = vpop.f32.mrb[0].mxu0
        %1230 = vmatprep.mubr.f32.mxu0 0.0
        %1231 = vmatmul.mubr.f32.gmra.mrb[0].mxu0 %v500
        %v1232 = vpop.f32.mrb[0].mxu0
        %v1233 = vadd.f32 0.0, %v1232
        %v1234 = vpop.f32.mrb[0].mxu0
        %1235 = vmatprep.mubr.f32.mxu0 0.0
        %1236 = vmatmul.mubr.f32.gmra.mrb[0].mxu0 %v503
        %v1237 = vpop.f32.mrb[0].mxu0
        %v1238 = vadd.f32 0.0, %v1237
        %v1239 = vpop.f32.mrb[0].mxu0
        %1240 = vdwg.mxu0
        %1241 = vmatprep.subr.mxu0 0.0
        %1242 = vmatpush1.msra.mxu0 %v1045
        %1243 = vmatprep.subr.mxu0 0.0
        %1244 = vmatpush1.msra.mxu0 %v1051
        %1245 = vmatprep.subr.mxu0 0.0
        %1246 = vmatpush1.msra.mxu0 %v1057
        %1247 = vmatprep.subr.mxu0 0.0
        %1248 = vmatpush1.msra.mxu0 %v1063
        %1249 = vmatprep.subr.mxu0 0.0
        %1250 = vmatpush1.msra.mxu0 0.0
        %1251 = vmatprep.subr.mxu0 0.0
        %1252 = vmatpush1.msra.mxu0 0.0
        %1253 = vmatprep.subr.mxu0 0.0
        %1254 = vmatpush1.msra.mxu0 0.0
        %1255 = vmatprep.subr.mxu0 0.0
        %1256 = vmatpush1.msra.mxu0 0.0
        %1257 = vmatprep.subr.mxu0 0.0
        %1258 = vmatpush1.msra.mxu0 0.0
        %1259 = vmatprep.subr.mxu0 0.0
        %1260 = vmatpush1.msra.mxu0 0.0
        %1261 = vmatprep.subr.mxu0 0.0
        %1262 = vmatpush1.msra.mxu0 0.0
        %1263 = vmatprep.subr.mxu0 0.0
        %1264 = vmatpush1.msra.mxu0 0.0
        %1265 = vmatprep.subr.mxu0 0.0
        %1266 = vmatpush1.msra.mxu0 0.0
        %1267 = vmatprep.subr.mxu0 0.0
        %1268 = vmatpush1.msra.mxu0 0.0
        %1269 = vmatprep.subr.mxu0 0.0
        %1270 = vmatpush1.msra.mxu0 0.0
        %1271 = vmatprep.subr.mxu0 0.0
        %1272 = vmatpush1.msra.mxu0 0.0
        %1273 = vmatprep.subr.mxu0 0.0
        %1274 = vmatpush1.msra.mxu0 0.0
        %1275 = vmatprep.subr.mxu0 0.0
        %1276 = vmatpush1.msra.mxu0 0.0
        %1277 = vmatprep.subr.mxu0 0.0
        %1278 = vmatpush1.msra.mxu0 0.0
        %1279 = vmatprep.subr.mxu0 0.0
        %1280 = vmatpush1.msra.mxu0 0.0
        %1281 = vmatprep.subr.mxu0 0.0
        %1282 = vmatpush1.msra.mxu0 0.0
        %1283 = vmatprep.subr.mxu0 0.0
        %1284 = vmatpush1.msra.mxu0 0.0
        %1285 = vmatprep.subr.mxu0 0.0
        %1286 = vmatpush1.msra.mxu0 0.0
        %1287 = vmatprep.subr.mxu0 0.0
        %1288 = vmatpush1.msra.mxu0 0.0
        %1289 = vmatprep.subr.mxu0 0.0
        %1290 = vmatpush1.msra.mxu0 0.0
        %1291 = vmatprep.subr.mxu0 0.0
        %1292 = vmatpush1.msra.mxu0 0.0
        %1293 = vmatprep.subr.mxu0 0.0
        %1294 = vmatpush1.msra.mxu0 0.0
        %1295 = vmatprep.subr.mxu0 0.0
        %1296 = vmatpush1.msra.mxu0 0.0
        %1297 = vmatprep.subr.mxu0 0.0
        %1298 = vmatpush1.msra.mxu0 0.0
        %1299 = vmatprep.subr.mxu0 0.0
        %1300 = vmatpush1.msra.mxu0 0.0
        %1301 = vmatprep.subr.mxu0 0.0
        %1302 = vmatpush1.msra.mxu0 0.0
        %1303 = vmatprep.subr.mxu0 0.0
        %1304 = vmatpush1.msra.mxu0 0.0
        %1305 = vmatprep.mubr.f32.mxu0 0.0
        %1306 = vmatmul.mubr.f32.gmra.mrb[0].mxu0 %v591
        %v1307 = vpop.f32.mrb[0].mxu0
        %v1308 = vadd.f32 %v1223, %v1307
        %v1309 = vpop.f32.mrb[0].mxu0
        %1310 = vmatprep.mubr.f32.mxu0 0.0
        %1311 = vmatmul.mubr.f32.gmra.mrb[0].mxu0 %v594
        %v1312 = vpop.f32.mrb[0].mxu0
        %v1313 = vadd.f32 %v1228, %v1312
        %v1314 = vpop.f32.mrb[0].mxu0
        %1315 = vmatprep.mubr.f32.mxu0 0.0
        %1316 = vmatmul.mubr.f32.gmra.mrb[0].mxu0 %v597
        %v1317 = vpop.f32.mrb[0].mxu0
        %v1318 = vadd.f32 %v1233, %v1317
        %v1319 = vpop.f32.mrb[0].mxu0
        %1320 = vmatprep.mubr.f32.mxu0 0.0
        %1321 = vmatmul.mubr.f32.gmra.mrb[0].mxu0 %v600
        %v1322 = vpop.f32.mrb[0].mxu0
        %v1323 = vadd.f32 %v1238, %v1322
        %v1324 = vpop.f32.mrb[0].mxu0
        %1325 = vdwg.mxu0
        %1326 = vmatprep.subr.mxu0 0.0
        %1327 = vmatpush1.msra.mxu0 %v1134
        %1328 = vmatprep.subr.mxu0 0.0
        %1329 = vmatpush1.msra.mxu0 %v1140
        %1330 = vmatprep.subr.mxu0 0.0
        %1331 = vmatpush1.msra.mxu0 %v1146
        %1332 = vmatprep.subr.mxu0 0.0
        %1333 = vmatpush1.msra.mxu0 %v1152
        %1334 = vmatprep.subr.mxu0 0.0
        %1335 = vmatpush1.msra.mxu0 0.0
        %1336 = vmatprep.subr.mxu0 0.0
        %1337 = vmatpush1.msra.mxu0 0.0
        %1338 = vmatprep.subr.mxu0 0.0
        %1339 = vmatpush1.msra.mxu0 0.0
        %1340 = vmatprep.subr.mxu0 0.0
        %1341 = vmatpush1.msra.mxu0 0.0
        %1342 = vmatprep.subr.mxu0 0.0
        %1343 = vmatpush1.msra.mxu0 0.0
        %1344 = vmatprep.subr.mxu0 0.0
        %1345 = vmatpush1.msra.mxu0 0.0
        %1346 = vmatprep.subr.mxu0 0.0
        %1347 = vmatpush1.msra.mxu0 0.0
        %1348 = vmatprep.subr.mxu0 0.0
        %1349 = vmatpush1.msra.mxu0 0.0
        %1350 = vmatprep.subr.mxu0 0.0
        %1351 = vmatpush1.msra.mxu0 0.0
        %1352 = vmatprep.subr.mxu0 0.0
        %1353 = vmatpush1.msra.mxu0 0.0
        %1354 = vmatprep.subr.mxu0 0.0
        %1355 = vmatpush1.msra.mxu0 0.0
        %1356 = vmatprep.subr.mxu0 0.0
        %1357 = vmatpush1.msra.mxu0 0.0
        %1358 = vmatprep.subr.mxu0 0.0
        %1359 = vmatpush1.msra.mxu0 0.0
        %1360 = vmatprep.subr.mxu0 0.0
        %1361 = vmatpush1.msra.mxu0 0.0
        %1362 = vmatprep.subr.mxu0 0.0
        %1363 = vmatpush1.msra.mxu0 0.0
        %1364 = vmatprep.subr.mxu0 0.0
        %1365 = vmatpush1.msra.mxu0 0.0
        %1366 = vmatprep.subr.mxu0 0.0
        %1367 = vmatpush1.msra.mxu0 0.0
        %1368 = vmatprep.subr.mxu0 0.0
        %1369 = vmatpush1.msra.mxu0 0.0
        %1370 = vmatprep.subr.mxu0 0.0
        %1371 = vmatpush1.msra.mxu0 0.0
        %1372 = vmatprep.subr.mxu0 0.0
        %1373 = vmatpush1.msra.mxu0 0.0
        %1374 = vmatprep.subr.mxu0 0.0
        %1375 = vmatpush1.msra.mxu0 0.0
        %1376 = vmatprep.subr.mxu0 0.0
        %1377 = vmatpush1.msra.mxu0 0.0
        %1378 = vmatprep.subr.mxu0 0.0
        %1379 = vmatpush1.msra.mxu0 0.0
        %1380 = vmatprep.subr.mxu0 0.0
        %1381 = vmatpush1.msra.mxu0 0.0
        %1382 = vmatprep.subr.mxu0 0.0
        %1383 = vmatpush1.msra.mxu0 0.0
        %1384 = vmatprep.subr.mxu0 0.0
        %1385 = vmatpush1.msra.mxu0 0.0
        %1386 = vmatprep.subr.mxu0 0.0
        %1387 = vmatpush1.msra.mxu0 0.0
        %1388 = vmatprep.subr.mxu0 0.0
        %1389 = vmatpush1.msra.mxu0 0.0
        %1390 = vmatprep.mubr.f32.mxu0 0.0
        %1391 = vmatmul.mubr.f32.gmra.mrb[0].mxu0 %v693
        %v1392 = vpop.f32.mrb[0].mxu0
        %v1393 = vadd.f32 0.0, %v1392
        %v1394 = vpop.f32.mrb[0].mxu0
        %1395 = vmatprep.mubr.f32.mxu0 0.0
        %1396 = vmatmul.mubr.f32.gmra.mrb[0].mxu0 %v696
        %v1397 = vpop.f32.mrb[0].mxu0
        %v1398 = vadd.f32 0.0, %v1397
        %v1399 = vpop.f32.mrb[0].mxu0
        %1400 = vmatprep.mubr.f32.mxu0 0.0
        %1401 = vmatmul.mubr.f32.gmra.mrb[0].mxu0 %v699
        %v1402 = vpop.f32.mrb[0].mxu0
        %v1403 = vadd.f32 0.0, %v1402
        %v1404 = vpop.f32.mrb[0].mxu0
        %1405 = vmatprep.mubr.f32.mxu0 0.0
        %1406 = vmatmul.mubr.f32.gmra.mrb[0].mxu0 %v702
        %v1407 = vpop.f32.mrb[0].mxu0
        %v1408 = vadd.f32 0.0, %v1407
        %v1409 = vpop.f32.mrb[0].mxu0
        %1410 = vdwg.mxu0
        %v1411 = vadd.f32 %v1308, %v1393
        %v1412 = vadd.f32 %v1313, %v1398
        %v1413 = vadd.f32 %v1318, %v1403
        %v1414 = vadd.f32 %v1323, %v1408
        %1415 = vmatprep.subr.mxu0 0.0
        %1416 = vmatpush1.msra.mxu0 %v1136
        %1417 = vmatprep.subr.mxu0 0.0
        %1418 = vmatpush1.msra.mxu0 %v1142
        %1419 = vmatprep.subr.mxu0 0.0
        %1420 = vmatpush1.msra.mxu0 %v1148
        %1421 = vmatprep.subr.mxu0 0.0
        %1422 = vmatpush1.msra.mxu0 %v1154
        %1423 = vmatprep.subr.mxu0 0.0
        %1424 = vmatpush1.msra.mxu0 0.0
        %1425 = vmatprep.subr.mxu0 0.0
        %1426 = vmatpush1.msra.mxu0 0.0
        %1427 = vmatprep.subr.mxu0 0.0
        %1428 = vmatpush1.msra.mxu0 0.0
        %1429 = vmatprep.subr.mxu0 0.0
        %1430 = vmatpush1.msra.mxu0 0.0
        %1431 = vmatprep.subr.mxu0 0.0
        %1432 = vmatpush1.msra.mxu0 0.0
        %1433 = vmatprep.subr.mxu0 0.0
        %1434 = vmatpush1.msra.mxu0 0.0
        %1435 = vmatprep.subr.mxu0 0.0
        %1436 = vmatpush1.msra.mxu0 0.0
        %1437 = vmatprep.subr.mxu0 0.0
        %1438 = vmatpush1.msra.mxu0 0.0
        %1439 = vmatprep.subr.mxu0 0.0
        %1440 = vmatpush1.msra.mxu0 0.0
        %1441 = vmatprep.subr.mxu0 0.0
        %1442 = vmatpush1.msra.mxu0 0.0
        %1443 = vmatprep.subr.mxu0 0.0
        %1444 = vmatpush1.msra.mxu0 0.0
        %1445 = vmatprep.subr.mxu0 0.0
        %1446 = vmatpush1.msra.mxu0 0.0
        %1447 = vmatprep.subr.mxu0 0.0
        %1448 = vmatpush1.msra.mxu0 0.0
        %1449 = vmatprep.subr.mxu0 0.0
        %1450 = vmatpush1.msra.mxu0 0.0
        %1451 = vmatprep.subr.mxu0 0.0
        %1452 = vmatpush1.msra.mxu0 0.0
        %1453 = vmatprep.subr.mxu0 0.0
        %1454 = vmatpush1.msra.mxu0 0.0
        %1455 = vmatprep.subr.mxu0 0.0
        %1456 = vmatpush1.msra.mxu0 0.0
        %1457 = vmatprep.subr.mxu0 0.0
        %1458 = vmatpush1.msra.mxu0 0.0
        %1459 = vmatprep.subr.mxu0 0.0
        %1460 = vmatpush1.msra.mxu0 0.0
        %1461 = vmatprep.subr.mxu0 0.0
        %1462 = vmatpush1.msra.mxu0 0.0
        %1463 = vmatprep.subr.mxu0 0.0
        %1464 = vmatpush1.msra.mxu0 0.0
        %1465 = vmatprep.subr.mxu0 0.0
        %1466 = vmatpush1.msra.mxu0 0.0
        %1467 = vmatprep.subr.mxu0 0.0
        %1468 = vmatpush1.msra.mxu0 0.0
        %1469 = vmatprep.subr.mxu0 0.0
        %1470 = vmatpush1.msra.mxu0 0.0
        %1471 = vmatprep.subr.mxu0 0.0
        %1472 = vmatpush1.msra.mxu0 0.0
        %1473 = vmatprep.subr.mxu0 0.0
        %1474 = vmatpush1.msra.mxu0 0.0
        %1475 = vmatprep.subr.mxu0 0.0
        %1476 = vmatpush1.msra.mxu0 0.0
        %1477 = vmatprep.subr.mxu0 0.0
        %1478 = vmatpush1.msra.mxu0 0.0
        %1479 = vmatprep.mubr.f32.mxu0 0.0
        %1480 = vmatmul.mubr.f32.gmra.mrb[0].mxu0 %v799
        %v1481 = vpop.f32.mrb[0].mxu0
        %v1482 = vadd.f32 0.0, %v1481
        %v1483 = vpop.f32.mrb[0].mxu0
        %1484 = vmatprep.mubr.f32.mxu0 0.0
        %1485 = vmatmul.mubr.f32.gmra.mrb[0].mxu0 %v802
        %v1486 = vpop.f32.mrb[0].mxu0
        %v1487 = vadd.f32 0.0, %v1486
        %v1488 = vpop.f32.mrb[0].mxu0
        %1489 = vmatprep.mubr.f32.mxu0 0.0
        %1490 = vmatmul.mubr.f32.gmra.mrb[0].mxu0 %v805
        %v1491 = vpop.f32.mrb[0].mxu0
        %v1492 = vadd.f32 0.0, %v1491
        %v1493 = vpop.f32.mrb[0].mxu0
        %1494 = vmatprep.mubr.f32.mxu0 0.0
        %1495 = vmatmul.mubr.f32.gmra.mrb[0].mxu0 %v808
        %v1496 = vpop.f32.mrb[0].mxu0
        %v1497 = vadd.f32 0.0, %v1496
        %v1498 = vpop.f32.mrb[0].mxu0
        %1499 = vdwg.mxu0
        %v1500 = vadd.f32 %v1411, %v1482
        %v1501 = vadd.f32 %v1412, %v1487
        %v1502 = vadd.f32 %v1413, %v1492
        %v1503 = vadd.f32 %v1414, %v1497
        %v1505 = vlaneseq
        %v1506 = vshrl.u32 %v1505, 7
        %v1507 = vsub.s32 0, %v1506
        %v1508 = vrot.slane %v977, %v1507
        %v1510 = vadd.f32 %v1500, %v1508
        %v1511 = vadd.f32 %v1501, %v1508
        %v1512 = vadd.f32 %v1502, %v1508
        %v1513 = vadd.f32 %v1503, %v1508
        %v1514 = vmax.f32 %v1510, 0.0
        %v1515 = vmax.f32 %v1511, 0.0
        %v1516 = vmax.f32 %v1512, 0.0
        %v1517 = vmax.f32 %v1513, 0.0
        %1518 = vst [vmem:[%s275] sm:$0xff] %v1514
        %1519 = vst [vmem:[%s275 + $0x8] sm:$0xff] %v1515
        %1520 = vst [vmem:[%s275 + $0x10] sm:$0xff] %v1516
        %1521 = vst [vmem:[%s275 + $0x18] sm:$0xff] %v1517
        %s1522 = sand.u32 %s161, 1
        %s1523 = scalar_lea.sflag [#allocation4], %s1522
        %s1524 = sand.u32 %s161, 1
        %s1525 = smul.addr %s1524, 32
        %s1526 = scalar_lea.vmem [#allocation7], %s1525
        // Predicated region
        $region53: #{tpu_custom_call.1} parent=43 // pred_check
          %p1527 = pneg %p171
        $region54: #{tpu_custom_call.1} parent=43 // pred_check_branch
          %1529 = sbr.rel (%p1527) target = $region56
        $region55: #{tpu_custom_call.1} parent=43 // pred_region
          %s1530 = smul.u32 4, %s22
          %s1532 = ssub.s32 512, 512
          %1533 = vsyncadd %s1523, %s1532
          %s1534 = smul.addr %s1530, 128
          %s1535 = scalar_lea.hbm %s6, %s1534
          %s1536 = sshll.u32 %s1526, 4
          %s1537 = int_to_ptr.vmem [resolvable:$true] %s1536
          %1542 = dma.vmem_to_hbm [thread:$0]  %s1537, 512, %s1535, %s1523, 128, 128, 8
        $region56: #{tpu_custom_call.1} parent=43 // pred_fallthru
          _
      $region44: #{tpu_custom_call.1} parent=5 // pred_fallthru
        _
      %p1543 = scmp.le.s32.totalorder 2, %s17
      // Predicated region
      $region57: #{tpu_custom_call.1} parent=5 // pred_check
        %p1544 = pneg %p1543
      $region58: #{tpu_custom_call.1} parent=5 // pred_check_branch
        %1546 = sbr.rel (%p1544) target = $region60
      $region59: #{tpu_custom_call.1} parent=5 // pred_region
        %s1547 = ssub.s32 %s17, 2
        // Predicated region
        $region61: #{tpu_custom_call.1} parent=59 // pred_check
          %p1548 = pneg %p177
        $region62: #{tpu_custom_call.1} parent=59 // pred_check_branch
          %1550 = sbr.rel (%p1548) target = $region64
        $region63: #{tpu_custom_call.1} parent=59 // pred_region
          %s1551 = sand.u32 %s162, 1
          %s1552 = scalar_lea.sflag [#allocation4], %s1551
          %s1553 = sand.u32 %s162, 1
          %s1554 = smul.addr %s1553, 32
          %s1555 = scalar_lea.vmem [#allocation7], %s1554
          %1556 = dma.done %s1552, 512
        $region64: #{tpu_custom_call.1} parent=59 // pred_fallthru
          _
      $region60: #{tpu_custom_call.1} parent=5 // pred_fallthru
        _
    $region6: #{tpu_custom_call.1} parent=1 // loop_footer
      %s21 = sadd.s32 1, %s17
    $region7: #{tpu_custom_call.1} parent=1 // loop_footer_branch
      %16 = sbr.rel target = $region3
    $region8: #{tpu_custom_call.1} parent=1 // loop_exit
      _
    %1557 = vsyncpa [#allocation3], 1
    %s1558 = scalar_lea.sflag [#allocation3], 1
    %1559 = vsyncpa %s1558, 1
    %1560 = vsyncpa [#allocation6], 1
    %1561 = vsyncpa [#allocation4], 1
    %s1562 = scalar_lea.sflag [#allocation4], 1
    %1563 = vsyncpa %s1562, 1

// kernel: tpu_custom_call.1
$region0: #{tpu_custom_call.1}
  #allocation0 [shape = 'u32[]', space=smem, size = 0x4, offset = 0x4, fixed_abs, tag = 'smem constant byte address 0x4 - core index']
  #allocation1 [shape = 'u32[144,128]{1,0:T(1,128)}', space=vmem, size = 0x12000, scoped, tag = 'internal scratch']
  %s0 = inlined_call_operand.hbm [shape: f32[4,32,32], index: 0, kind: input, shape index: {}]
  %s1 = inlined_call_operand.vmem [shape: f32[64,8], index: 1, kind: input, shape index: {}]
  %s2 = inlined_call_operand.vmem [shape: f32[8,512], index: 2, kind: input, shape index: {}]
  %s3 = inlined_call_operand.vmem [shape: f32[1,128], index: 3, kind: input, shape index: {}]
  %s4 = inlined_call_operand.hbm [shape: f32[128,512], index: 4, kind: input, shape index: {}]
  %s5 = inlined_call_operand.vmem [shape: f32[1,128], index: 5, kind: input, shape index: {}]
  %s6 = inlined_call_operand.hbm [shape: f32[64,128], index: 6, kind: output, shape index: {}]
  %s7 = sld [smem:[#allocation0]]
  $region65: #{tpu_custom_call.1} parent=0
    _
  %s9 = ssub.s32 1, %s7
  %s10 = scalar_select 0, %s9, %s7
  $region1: #{tpu_custom_call.1} parent=0
    #allocation2 [shape = 'u8[65536]{0}', space=vmem, size = 0x10000, scoped, tag = 'input window, operand 0, single buffered']
    #allocation3 [shape = 's32[2]{0}', space=sflag, size = 0x8, scoped, tag = 'scoped memory for tpu_custom_call.1']
    #allocation4 [shape = 's32[2]{0}', space=sflag, size = 0x8, scoped, tag = 'scoped memory for tpu_custom_call.1']
    #allocation5 [shape = 'u8[262144]{0}', space=vmem, size = 0x40000, scoped, tag = 'input window, operand 4, single buffered']
    #allocation6 [shape = 's32[1]{0}', space=sflag, size = 0x4, scoped, tag = 'scoped memory for tpu_custom_call.1']
    #allocation7 [shape = 'u8[32768]{0}', space=vmem, size = 0x8000, scoped, tag = 'output window, operand 0']
    %11 = vsyncpa [#allocation3], 0
    %12 = vsyncpa [#allocation6], 0
    %13 = vsyncpa [#allocation4], 0
    %s14 = scalar_lea.sflag [#allocation4], 1
    %15 = vsyncpa %s14, 0
    loop: start=0, step=1, limit=4
    $region2: #{tpu_custom_call.1} parent=1 // loop_pre_header
      _
    $region3: #{tpu_custom_call.1} parent=1 // loop_header
      %s17 = sphi 0, %s21
      %p18 = scmp.ge.s32.totalorder %s17, 4
      %s25 = sphi 0, %s25
      %s27 = sphi 0, %s25
      %s28 = sphi 0, %s27
      %s42 = sphi 0, %s28
      %s48 = sphi 0, %s50
      %s51 = sphi 0, %s48
      %s52 = sphi 0, %s51
      %s68 = sphi 0, %s52
      %s72 = sphi 0, %s72
      %s74 = sphi 0, %s72
      %s75 = sphi 0, %s74
      %s89 = sphi 0, %s75
      %s93 = sphi 0, %s93
      %s95 = sphi 0, %s93
      %s96 = sphi 0, %s95
      %s110 = sphi 0, %s96
      %s114 = sphi 0, %s114
      %s116 = sphi 0, %s114
      %s117 = sphi 0, %s116
      %s131 = sphi 0, %s117
      %s135 = sphi 0, %s135
      %s137 = sphi 0, %s135
      %s138 = sphi 0, %s137
      %s152 = sphi 0, %s138
      %s158 = sphi 0, %s160
      %s161 = sphi 0, %s158
      %s162 = sphi 0, %s161
      %s178 = sphi 0, %s162
    $region4: #{tpu_custom_call.1} parent=1 // loop_header_branch
      %20 = sbr.rel (%p18) target = $region8
    $region5: #{tpu_custom_call.1} parent=1 // loop_body
      %s22 = ssub.s32 %s17, 1
      %s23 = ssub.s32 %s17, 2
      %s24 = sadd.s32 %s17, 1
      %s26 = sadd.s32 %s25, 1
      %p29 = scmp.eq.s32.totalorder %s17, 1
      %p30 = scmp.ne.s32.totalorder %s25, %s27
      %p31 = scmp.eq.s32.totalorder %s17, 0
      %p32 = por %p30, %p31
      %p33 = scmp.ne.s32.totalorder %s25, %s27
      %p34 = scmp.eq.s32.totalorder %s22, 1
      %p35 = por %p33, %p34
      %p36 = scmp.ne.s32.totalorder %s27, %s28
      %p37 = scmp.eq.s32.totalorder %s22, 0
      %p38 = por %p36, %p37
      %p39 = scmp.ne.s32.totalorder %s27, %s28
      %p40 = scmp.eq.s32.totalorder %s23, 1
      %p41 = por %p39, %p40
      %p43 = scmp.ne.s32.totalorder %s28, %s42
      %p44 = scmp.eq.s32.totalorder %s23, 0
      %p45 = por %p43, %p44
      %s46 = ssub.s32 %s17, %s24
      %p47 = scmp.eq.s32.totalorder %s46, 0
      %s49 = sadd.s32 %s48, 1
      %s50 = scalar_select %p47, %s48, %s49
      %p53 = pneg %p47
      %p54 = scmp.eq.s32.totalorder %s17, 1
      %p55 = por %p53, %p54
      %p56 = scmp.ne.s32.totalorder %s48, %s51
      %p57 = scmp.eq.s32.totalorder %s17, 0
      %p58 = por %p56, %p57
      %p59 = scmp.ne.s32.totalorder %s48, %s51
      %p60 = scmp.eq.s32.totalorder %s22, 1
      %p61 = por %p59, %p60
      %p62 = scmp.ne.s32.totalorder %s51, %s52
      %p63 = scmp.eq.s32.totalorder %s22, 0
      %p64 = por %p62, %p63
      %p65 = scmp.ne.s32.totalorder %s51, %s52
      %p66 = scmp.eq.s32.totalorder %s23, 1
      %p67 = por %p65, %p66
      %p69 = scmp.ne.s32.totalorder %s52, %s68
      %p70 = scmp.eq.s32.totalorder %s23, 0
      %p71 = por %p69, %p70
      %s73 = sadd.s32 %s72, 1
      %p76 = scmp.eq.s32.totalorder %s17, 1
      %p77 = scmp.ne.s32.totalorder %s72, %s74
      %p78 = scmp.eq.s32.totalorder %s17, 0
      %p79 = por %p77, %p78
      %p80 = scmp.ne.s32.totalorder %s72, %s74
      %p81 = scmp.eq.s32.totalorder %s22, 1
      %p82 = por %p80, %p81
      %p83 = scmp.ne.s32.totalorder %s74, %s75
      %p84 = scmp.eq.s32.totalorder %s22, 0
      %p85 = por %p83, %p84
      %p86 = scmp.ne.s32.totalorder %s74, %s75
      %p87 = scmp.eq.s32.totalorder %s23, 1
      %p88 = por %p86, %p87
      %p90 = scmp.ne.s32.totalorder %s75, %s89
      %p91 = scmp.eq.s32.totalorder %s23, 0
      %p92 = por %p90, %p91
      %s94 = sadd.s32 %s93, 1
      %p97 = scmp.eq.s32.totalorder %s17, 1
      %p98 = scmp.ne.s32.totalorder %s93, %s95
      %p99 = scmp.eq.s32.totalorder %s17, 0
      %p100 = por %p98, %p99
      %p101 = scmp.ne.s32.totalorder %s93, %s95
      %p102 = scmp.eq.s32.totalorder %s22, 1
      %p103 = por %p101, %p102
      %p104 = scmp.ne.s32.totalorder %s95, %s96
      %p105 = scmp.eq.s32.totalorder %s22, 0
      %p106 = por %p104, %p105
      %p107 = scmp.ne.s32.totalorder %s95, %s96
      %p108 = scmp.eq.s32.totalorder %s23, 1
      %p109 = por %p107, %p108
      %p111 = scmp.ne.s32.totalorder %s96, %s110
      %p112 = scmp.eq.s32.totalorder %s23, 0
      %p113 = por %p111, %p112
      %s115 = sadd.s32 %s114, 1
      %p118 = scmp.eq.s32.totalorder %s17, 1
      %p119 = scmp.ne.s32.totalorder %s114, %s116
      %p120 = scmp.eq.s32.totalorder %s17, 0
      %p121 = por %p119, %p120
      %p122 = scmp.ne.s32.totalorder %s114, %s116
      %p123 = scmp.eq.s32.totalorder %s22, 1
      %p124 = por %p122, %p123
      %p125 = scmp.ne.s32.totalorder %s116, %s117
      %p126 = scmp.eq.s32.totalorder %s22, 0
      %p127 = por %p125, %p126
      %p128 = scmp.ne.s32.totalorder %s116, %s117
      %p129 = scmp.eq.s32.totalorder %s23, 1
      %p130 = por %p128, %p129
      %p132 = scmp.ne.s32.totalorder %s117, %s131
      %p133 = scmp.eq.s32.totalorder %s23, 0
      %p134 = por %p132, %p133
      %s136 = sadd.s32 %s135, 1
      %p139 = scmp.eq.s32.totalorder %s17, 1
      %p140 = scmp.ne.s32.totalorder %s135, %s137
      %p141 = scmp.eq.s32.totalorder %s17, 0
      %p142 = por %p140, %p141
      %p143 = scmp.ne.s32.totalorder %s135, %s137
      %p144 = scmp.eq.s32.totalorder %s22, 1
      %p145 = por %p143, %p144
      %p146 = scmp.ne.s32.totalorder %s137, %s138
      %p147 = scmp.eq.s32.totalorder %s22, 0
      %p148 = por %p146, %p147
      %p149 = scmp.ne.s32.totalorder %s137, %s138
      %p150 = scmp.eq.s32.totalorder %s23, 1
      %p151 = por %p149, %p150
      %p153 = scmp.ne.s32.totalorder %s138, %s152
      %p154 = scmp.eq.s32.totalorder %s23, 0
      %p155 = por %p153, %p154
      %s156 = ssub.s32 %s17, %s24
      %p157 = scmp.eq.s32.totalorder %s156, 0
      %s159 = sadd.s32 %s158, 1
      %s160 = scalar_select %p157, %s158, %s159
      %p163 = pneg %p157
      %p164 = scmp.eq.s32.totalorder %s17, 1
      %p165 = por %p163, %p164
      %p166 = scmp.ne.s32.totalorder %s158, %s161
      %p167 = scmp.eq.s32.totalorder %s17, 0
      %p168 = por %p166, %p167
      %p169 = scmp.ne.s32.totalorder %s158, %s161
      %p170 = scmp.eq.s32.totalorder %s22, 1
      %p171 = por %p169, %p170
      %p172 = scmp.ne.s32.totalorder %s161, %s162
      %p173 = scmp.eq.s32.totalorder %s22, 0
      %p174 = por %p172, %p173
      %p175 = scmp.ne.s32.totalorder %s161, %s162
      %p176 = scmp.eq.s32.totalorder %s23, 1
      %p177 = por %p175, %p176
      %p179 = scmp.ne.s32.totalorder %s162, %s178
      %p180 = scmp.eq.s32.totalorder %s23, 0
      %p181 = por %p179, %p180
      %p182 = scmp.le.s32.totalorder 1, %s17
      %p183 = scmp.lt.s32.totalorder %s17, 3
      %p184 = pnand %p182, %p183
      %p185 = pneg %p184
      // Predicated region
      $region9: #{tpu_custom_call.1} parent=5 // pred_check
        _
      $region10: #{tpu_custom_call.1} parent=5 // pred_check_branch
        %187 = sbr.rel (%p184) target = $region12
      $region11: #{tpu_custom_call.1} parent=5 // pred_region
        %s188 = ssub.s32 %s17, 1
        // Predicated region
        $region13: #{tpu_custom_call.1} parent=11 // pred_check
          %p189 = pneg %p38
        $region14: #{tpu_custom_call.1} parent=11 // pred_check_branch
          %191 = sbr.rel (%p189) target = $region16
        $region15: #{tpu_custom_call.1} parent=11 // pred_region
          %s193 = ssub.s32 2048, 2048
          %194 = vsyncadd [#allocation3], %s193
          %s195 = sshll.u32 [#allocation2], 4
          %s196 = int_to_ptr.vmem [resolvable:$true] %s195
          %201 = dma.hbm_to_vmem [thread:$0]  %s0, 2048, %s196, [#allocation3], 128, 128, 8
        $region16: #{tpu_custom_call.1} parent=11 // pred_fallthru
          _
        // Predicated region
        $region17: #{tpu_custom_call.1} parent=11 // pred_check
          %p202 = pneg %p85
        $region18: #{tpu_custom_call.1} parent=11 // pred_check_branch
          %204 = sbr.rel (%p202) target = $region20
        $region19: #{tpu_custom_call.1} parent=11 // pred_region
          _
        $region20: #{tpu_custom_call.1} parent=11 // pred_fallthru
          _
        // Predicated region
        $region21: #{tpu_custom_call.1} parent=11 // pred_check
          %p205 = pneg %p106
        $region22: #{tpu_custom_call.1} parent=11 // pred_check_branch
          %207 = sbr.rel (%p205) target = $region24
        $region23: #{tpu_custom_call.1} parent=11 // pred_region
          _
        $region24: #{tpu_custom_call.1} parent=11 // pred_fallthru
          _
        // Predicated region
        $region25: #{tpu_custom_call.1} parent=11 // pred_check
          %p208 = pneg %p127
        $region26: #{tpu_custom_call.1} parent=11 // pred_check_branch
          %210 = sbr.rel (%p208) target = $region28
        $region27: #{tpu_custom_call.1} parent=11 // pred_region
          %s212 = ssub.s32 8192, 8192
          %213 = vsyncadd [#allocation6], %s212
          %s214 = sshll.u32 [#allocation5], 4
          %s215 = int_to_ptr.vmem [resolvable:$true] %s214
          %220 = dma.hbm_to_vmem [thread:$0]  %s4, 8192, %s215, [#allocation6], 512, 512, 32
        $region28: #{tpu_custom_call.1} parent=11 // pred_fallthru
          _
        // Predicated region
        $region29: #{tpu_custom_call.1} parent=11 // pred_check
          %p221 = pneg %p148
        $region30: #{tpu_custom_call.1} parent=11 // pred_check_branch
          %223 = sbr.rel (%p221) target = $region32
        $region31: #{tpu_custom_call.1} parent=11 // pred_region
          _
        $region32: #{tpu_custom_call.1} parent=11 // pred_fallthru
          _
      $region12: #{tpu_custom_call.1} parent=5 // pred_fallthru
        _
      %p224 = scmp.lt.s32.totalorder %s17, 2
      // Predicated region
      $region33: #{tpu_custom_call.1} parent=5 // pred_check
        %p225 = pneg %p224
      $region34: #{tpu_custom_call.1} parent=5 // pred_check_branch
        %227 = sbr.rel (%p225) target = $region36
      $region35: #{tpu_custom_call.1} parent=5 // pred_region
        // Predicated region
        $region37: #{tpu_custom_call.1} parent=35 // pred_check
          %p228 = pneg %p58
        $region38: #{tpu_custom_call.1} parent=35 // pred_check_branch
          %230 = sbr.rel (%p228) target = $region40
        $region39: #{tpu_custom_call.1} parent=35 // pred_region
          %s231 = smul.u32 4, %s17
          %p232 = scmp.lt.s32.totalorder %s231, 7
          %s233 = scalar_select %p232, %s231, 7
          %s234 = smul.addr %s233, 8
          %s235 = scalar_lea.vmem %s1, %s234
          %s236 = smul.u32 4, %s17
        $region40: #{tpu_custom_call.1} parent=35 // pred_fallthru
          _
      $region36: #{tpu_custom_call.1} parent=5 // pred_fallthru
        _
      %p237 = scmp.le.s32.totalorder 1, %s17
      %p238 = scmp.lt.s32.totalorder %s17, 3
      %p239 = pnand %p237, %p238
      %p240 = pneg %p239
      // Predicated region
      $region41: #{tpu_custom_call.1} parent=5 // pred_check
        _
      $region42: #{tpu_custom_call.1} parent=5 // pred_check_branch
        %242 = sbr.rel (%p239) target = $region44
      $region43: #{tpu_custom_call.1} parent=5 // pred_region
        %s243 = ssub.s32 %s17, 1
        // Predicated region
        $region45: #{tpu_custom_call.1} parent=43 // pred_check
          %p244 = pneg %p38
        $region46: #{tpu_custom_call.1} parent=43 // pred_check_branch
          %246 = sbr.rel (%p244) target = $region48
        $region47: #{tpu_custom_call.1} parent=43 // pred_region
          %247 = dma.done [#allocation3], 2048
        $region48: #{tpu_custom_call.1} parent=43 // pred_fallthru
          _
        // Predicated region
        $region49: #{tpu_custom_call.1} parent=43 // pred_check
          %p248 = pneg %p127
        $region50: #{tpu_custom_call.1} parent=43 // pred_check_branch
          %250 = sbr.rel (%p248) target = $region52
        $region51: #{tpu_custom_call.1} parent=43 // pred_region
          %251 = dma.done [#allocation6], 8192
        $region52: #{tpu_custom_call.1} parent=43 // pred_fallthru
          _
        %p252 = pneg %p38
        %p253 = pneg %p35
        %s254 = smul.u32 4, %s22
        %p255 = scmp.lt.s32.totalorder %s254, 7
        %s256 = scalar_select %p255, %s254, 7
        %s257 = smul.addr %s256, 8
        %s258 = scalar_lea.vmem %s1, %s257
        %p259 = pneg %p64
        %p260 = pneg %p61
        %p261 = pneg %p85
        %p262 = pneg %p82
        %p263 = pneg %p106
        %p264 = pneg %p103
        %p265 = pneg %p127
        %p266 = pneg %p124
        %p267 = pneg %p148
        %p268 = pneg %p145
        %p269 = pneg %p174
        %p270 = pneg %p171
        %s271 = sand.u32 %s161, 1
        %s272 = scalar_lea.sflag [#allocation4], %s271
        %s273 = sand.u32 %s161, 1
        %s274 = smul.addr %s273, 32
        %s275 = scalar_lea.vmem [#allocation7], %s274
        %s276 = smul.u32 4, %s22
        %p277 = scmp.lt.s32.totalorder %s276, 7
        %s278 = scalar_select %p277, %s276, 7
        %s279 = smul.addr %s278, 8
        %s280 = scalar_lea.vmem %s1, %s279
        %s281 = smul.u32 4, %s22
        %s282 = smul.u32 4, %s22
        %v283 = vld [vmem:[%s280] sm:$0xff]
        %v284 = vld [vmem:[%s280 + $0x8] sm:$0xff]
        %v285 = vld [vmem:[%s280 + $0x10] sm:$0xff]
        %v286 = vld [vmem:[%s280 + $0x18] sm:$0xff]
        %v287 = vld [vmem:[%s2] sm:$0xff]
        %v288 = vld [vmem:[%s2 + $0x8] sm:$0xff]
        %v289 = vld [vmem:[%s2 + $0x10] sm:$0xff]
        %v290 = vld [vmem:[%s2 + $0x18] sm:$0xff]
        %v291 = vld [vmem:[%s3] sm:$0x1]
        %vm292 = vcmask 64512
        %v294 = vsel %vm292, %v283, 0
        %v297 = vsel %vm292, %v284, 0
        %v300 = vsel %vm292, %v285, 0
        %v303 = vsel %vm292, %v286, 0
        %305 = vmatprep.subr.mxu0 %v288
        %306 = vmatpush1.msra.mxu0 %v287
        %307 = vmatprep.subr.mxu0 0.0
        %308 = vmatpush1.msra.mxu0 0.0
        %309 = vmatprep.subr.mxu0 0.0
        %310 = vmatpush1.msra.mxu0 0.0
        %311 = vmatprep.subr.mxu0 0.0
        %312 = vmatpush1.msra.mxu0 0.0
        %313 = vmatprep.subr.mxu0 0.0
        %314 = vmatpush1.msra.mxu0 0.0
        %315 = vmatprep.subr.mxu0 0.0
        %316 = vmatpush1.msra.mxu0 0.0
        %317 = vmatprep.subr.mxu0 0.0
        %318 = vmatpush1.msra.mxu0 0.0
        %319 = vmatprep.subr.mxu0 0.0
        %320 = vmatpush1.msra.mxu0 0.0
        %321 = vmatprep.subr.mxu0 0.0
        %322 = vmatpush1.msra.mxu0 0.0
        %323 = vmatprep.subr.mxu0 0.0
        %324 = vmatpush1.msra.mxu0 0.0
        %325 = vmatprep.subr.mxu0 0.0
        %326 = vmatpush1.msra.mxu0 0.0
        %327 = vmatprep.subr.mxu0 0.0
        %328 = vmatpush1.msra.mxu0 0.0
        %329 = vmatprep.subr.mxu0 0.0
        %330 = vmatpush1.msra.mxu0 0.0
        %331 = vmatprep.subr.mxu0 0.0
        %332 = vmatpush1.msra.mxu0 0.0
        %333 = vmatprep.subr.mxu0 0.0
        %334 = vmatpush1.msra.mxu0 0.0
        %335 = vmatprep.subr.mxu0 0.0
        %336 = vmatpush1.msra.mxu0 0.0
        %337 = vmatprep.subr.mxu0 0.0
        %338 = vmatpush1.msra.mxu0 0.0
        %339 = vmatprep.subr.mxu0 0.0
        %340 = vmatpush1.msra.mxu0 0.0
        %341 = vmatprep.subr.mxu0 0.0
        %342 = vmatpush1.msra.mxu0 0.0
        %343 = vmatprep.subr.mxu0 0.0
        %344 = vmatpush1.msra.mxu0 0.0
        %345 = vmatprep.subr.mxu0 0.0
        %346 = vmatpush1.msra.mxu0 0.0
        %347 = vmatprep.subr.mxu0 0.0
        %348 = vmatpush1.msra.mxu0 0.0
        %349 = vmatprep.subr.mxu0 0.0
        %350 = vmatpush1.msra.mxu0 0.0
        %351 = vmatprep.subr.mxu0 0.0
        %352 = vmatpush1.msra.mxu0 0.0
        %353 = vmatprep.subr.mxu0 0.0
        %354 = vmatpush1.msra.mxu0 0.0
        %355 = vmatprep.subr.mxu0 0.0
        %356 = vmatpush1.msra.mxu0 0.0
        %357 = vmatprep.subr.mxu0 0.0
        %358 = vmatpush1.msra.mxu0 0.0
        %359 = vmatprep.subr.mxu0 0.0
        %360 = vmatpush1.msra.mxu0 0.0
        %361 = vmatprep.subr.mxu0 0.0
        %362 = vmatpush1.msra.mxu0 0.0
        %363 = vmatprep.subr.mxu0 0.0
        %364 = vmatpush1.msra.mxu0 0.0
        %365 = vmatprep.subr.mxu0 0.0
        %366 = vmatpush1.msra.mxu0 0.0
        %367 = vmatprep.subr.mxu0 0.0
        %368 = vmatpush1.msra.mxu0 0.0
        %369 = vmatprep.mubr.f32.mxu0 0.0
        %370 = vmatmul.mubr.f32.gmra.mrb[0].mxu0 %v294
        %v371 = vpop.f32.mrb[0].mxu0
        %v372 = vadd.f32 0.0, %v371
        %v373 = vpop.f32.mrb[0].mxu0
        %v374 = vadd.f32 0.0, %v373
        %375 = vmatprep.mubr.f32.mxu0 0.0
        %376 = vmatmul.mubr.f32.gmra.mrb[0].mxu0 %v297
        %v377 = vpop.f32.mrb[0].mxu0
        %v378 = vadd.f32 0.0, %v377
        %v379 = vpop.f32.mrb[0].mxu0
        %v380 = vadd.f32 0.0, %v379
        %381 = vmatprep.mubr.f32.mxu0 0.0
        %382 = vmatmul.mubr.f32.gmra.mrb[0].mxu0 %v300
        %v383 = vpop.f32.mrb[0].mxu0
        %v384 = vadd.f32 0.0, %v383
        %v385 = vpop.f32.mrb[0].mxu0
        %v386 = vadd.f32 0.0, %v385
        %387 = vmatprep.mubr.f32.mxu0 0.0
        %388 = vmatmul.mubr.f32.gmra.mrb[0].mxu0 %v303
        %v389 = vpop.f32.mrb[0].mxu0
        %v390 = vadd.f32 0.0, %v389
        %v391 = vpop.f32.mrb[0].mxu0
        %v392 = vadd.f32 0.0, %v391
        %393 = vdwg.mxu0
        %394 = vmatprep.subr.mxu0 %v290
        %395 = vmatpush1.msra.mxu0 %v289
        %396 = vmatprep.subr.mxu0 0.0
        %397 = vmatpush1.msra.mxu0 0.0
        %398 = vmatprep.subr.mxu0 0.0
        %399 = vmatpush1.msra.mxu0 0.0
        %400 = vmatprep.subr.mxu0 0.0
        %401 = vmatpush1.msra.mxu0 0.0
        %402 = vmatprep.subr.mxu0 0.0
        %403 = vmatpush1.msra.mxu0 0.0
        %404 = vmatprep.subr.mxu0 0.0
        %405 = vmatpush1.msra.mxu0 0.0
        %406 = vmatprep.subr.mxu0 0.0
        %407 = vmatpush1.msra.mxu0 0.0
        %408 = vmatprep.subr.mxu0 0.0
        %409 = vmatpush1.msra.mxu0 0.0
        %410 = vmatprep.subr.mxu0 0.0
        %411 = vmatpush1.msra.mxu0 0.0
        %412 = vmatprep.subr.mxu0 0.0
        %413 = vmatpush1.msra.mxu0 0.0
        %414 = vmatprep.subr.mxu0 0.0
        %415 = vmatpush1.msra.mxu0 0.0
        %416 = vmatprep.subr.mxu0 0.0
        %417 = vmatpush1.msra.mxu0 0.0
        %418 = vmatprep.subr.mxu0 0.0
        %419 = vmatpush1.msra.mxu0 0.0
        %420 = vmatprep.subr.mxu0 0.0
        %421 = vmatpush1.msra.mxu0 0.0
        %422 = vmatprep.subr.mxu0 0.0
        %423 = vmatpush1.msra.mxu0 0.0
        %424 = vmatprep.subr.mxu0 0.0
        %425 = vmatpush1.msra.mxu0 0.0
        %426 = vmatprep.subr.mxu0 0.0
        %427 = vmatpush1.msra.mxu0 0.0
        %428 = vmatprep.subr.mxu0 0.0
        %429 = vmatpush1.msra.mxu0 0.0
        %430 = vmatprep.subr.mxu0 0.0
        %431 = vmatpush1.msra.mxu0 0.0
        %432 = vmatprep.subr.mxu0 0.0
        %433 = vmatpush1.msra.mxu0 0.0
        %434 = vmatprep.subr.mxu0 0.0
        %435 = vmatpush1.msra.mxu0 0.0
        %436 = vmatprep.subr.mxu0 0.0
        %437 = vmatpush1.msra.mxu0 0.0
        %438 = vmatprep.subr.mxu0 0.0
        %439 = vmatpush1.msra.mxu0 0.0
        %440 = vmatprep.subr.mxu0 0.0
        %441 = vmatpush1.msra.mxu0 0.0
        %442 = vmatprep.subr.mxu0 0.0
        %443 = vmatpush1.msra.mxu0 0.0
        %444 = vmatprep.subr.mxu0 0.0
        %445 = vmatpush1.msra.mxu0 0.0
        %446 = vmatprep.subr.mxu0 0.0
        %447 = vmatpush1.msra.mxu0 0.0
        %448 = vmatprep.subr.mxu0 0.0
        %449 = vmatpush1.msra.mxu0 0.0
        %450 = vmatprep.subr.mxu0 0.0
        %451 = vmatpush1.msra.mxu0 0.0
        %452 = vmatprep.subr.mxu0 0.0
        %453 = vmatpush1.msra.mxu0 0.0
        %454 = vmatprep.subr.mxu0 0.0
        %455 = vmatpush1.msra.mxu0 0.0
        %456 = vmatprep.subr.mxu0 0.0
        %457 = vmatpush1.msra.mxu0 0.0
        %458 = vmatprep.mubr.f32.mxu0 0.0
        %459 = vmatmul.mubr.f32.gmra.mrb[0].mxu0 %v294
        %v460 = vpop.f32.mrb[0].mxu0
        %v461 = vadd.f32 0.0, %v460
        %v462 = vpop.f32.mrb[0].mxu0
        %v463 = vadd.f32 0.0, %v462
        %464 = vmatprep.mubr.f32.mxu0 0.0
        %465 = vmatmul.mubr.f32.gmra.mrb[0].mxu0 %v297
        %v466 = vpop.f32.mrb[0].mxu0
        %v467 = vadd.f32 0.0, %v466
        %v468 = vpop.f32.mrb[0].mxu0
        %v469 = vadd.f32 0.0, %v468
        %470 = vmatprep.mubr.f32.mxu0 0.0
        %471 = vmatmul.mubr.f32.gmra.mrb[0].mxu0 %v300
        %v472 = vpop.f32.mrb[0].mxu0
        %v473 = vadd.f32 0.0, %v472
        %v474 = vpop.f32.mrb[0].mxu0
        %v475 = vadd.f32 0.0, %v474
        %476 = vmatprep.mubr.f32.mxu0 0.0
        %477 = vmatmul.mubr.f32.gmra.mrb[0].mxu0 %v303
        %v478 = vpop.f32.mrb[0].mxu0
        %v479 = vadd.f32 0.0, %v478
        %v480 = vpop.f32.mrb[0].mxu0
        %v481 = vadd.f32 0.0, %v480
        %482 = vdwg.mxu0
        %v483 = vld [vmem:[#allocation2] sm:$0xff]
        %v484 = vld [vmem:[#allocation2 + $0x8] sm:$0xff]
        %v485 = vld [vmem:[#allocation2 + $0x10] sm:$0xff]
        %v486 = vld [vmem:[#allocation2 + $0x18] sm:$0xff]
        %s487 = scalar_lea.vmem [#allocation2], 32
        %v488 = vld [vmem:[%s487] sm:$0xff]
        %v489 = vld [vmem:[%s487 + $0x8] sm:$0xff]
        %v490 = vld [vmem:[%s487 + $0x10] sm:$0xff]
        %v491 = vld [vmem:[%s487 + $0x18] sm:$0xff]
        %vm492 = vcmask 261120
        %v494 = vsel %vm492, %v488, 0
        %v497 = vsel %vm492, %v489, 0
        %v500 = vsel %vm492, %v490, 0
        %v503 = vsel %vm492, %v491, 0
        %505 = vmatprep.subr.mxu0 0.0
        %506 = vmatpush1.msra.mxu0 %v374
        %507 = vmatprep.subr.mxu0 0.0
        %508 = vmatpush1.msra.mxu0 %v380
        %509 = vmatprep.subr.mxu0 0.0
        %510 = vmatpush1.msra.mxu0 %v386
        %511 = vmatprep.subr.mxu0 0.0
        %512 = vmatpush1.msra.mxu0 %v392
        %513 = vmatprep.subr.mxu0 0.0
        %514 = vmatpush1.msra.mxu0 0.0
        %515 = vmatprep.subr.mxu0 0.0
        %516 = vmatpush1.msra.mxu0 0.0
        %517 = vmatprep.subr.mxu0 0.0
        %518 = vmatpush1.msra.mxu0 0.0
        %519 = vmatprep.subr.mxu0 0.0
        %520 = vmatpush1.msra.mxu0 0.0
        %521 = vmatprep.subr.mxu0 0.0
        %522 = vmatpush1.msra.mxu0 0.0
        %523 = vmatprep.subr.mxu0 0.0
        %524 = vmatpush1.msra.mxu0 0.0
        %525 = vmatprep.subr.mxu0 0.0
        %526 = vmatpush1.msra.mxu0 0.0
        %527 = vmatprep.subr.mxu0 0.0
        %528 = vmatpush1.msra.mxu0 0.0
        %529 = vmatprep.subr.mxu0 0.0
        %530 = vmatpush1.msra.mxu0 0.0
        %531 = vmatprep.subr.mxu0 0.0
        %532 = vmatpush1.msra.mxu0 0.0
        %533 = vmatprep.subr.mxu0 0.0
        %534 = vmatpush1.msra.mxu0 0.0
        %535 = vmatprep.subr.mxu0 0.0
        %536 = vmatpush1.msra.mxu0 0.0
        %537 = vmatprep.subr.mxu0 0.0
        %538 = vmatpush1.msra.mxu0 0.0
        %539 = vmatprep.subr.mxu0 0.0
        %540 = vmatpush1.msra.mxu0 0.0
        %541 = vmatprep.subr.mxu0 0.0
        %542 = vmatpush1.msra.mxu0 0.0
        %543 = vmatprep.subr.mxu0 0.0
        %544 = vmatpush1.msra.mxu0 0.0
        %545 = vmatprep.subr.mxu0 0.0
        %546 = vmatpush1.msra.mxu0 0.0
        %547 = vmatprep.subr.mxu0 0.0
        %548 = vmatpush1.msra.mxu0 0.0
        %549 = vmatprep.subr.mxu0 0.0
        %550 = vmatpush1.msra.mxu0 0.0
        %551 = vmatprep.subr.mxu0 0.0
        %552 = vmatpush1.msra.mxu0 0.0
        %553 = vmatprep.subr.mxu0 0.0
        %554 = vmatpush1.msra.mxu0 0.0
        %555 = vmatprep.subr.mxu0 0.0
        %556 = vmatpush1.msra.mxu0 0.0
        %557 = vmatprep.subr.mxu0 0.0
        %558 = vmatpush1.msra.mxu0 0.0
        %559 = vmatprep.subr.mxu0 0.0
        %560 = vmatpush1.msra.mxu0 0.0
        %561 = vmatprep.subr.mxu0 0.0
        %562 = vmatpush1.msra.mxu0 0.0
        %563 = vmatprep.subr.mxu0 0.0
        %564 = vmatpush1.msra.mxu0 0.0
        %565 = vmatprep.subr.mxu0 0.0
        %566 = vmatpush1.msra.mxu0 0.0
        %567 = vmatprep.subr.mxu0 0.0
        %568 = vmatpush1.msra.mxu0 0.0
        %569 = vmatprep.mubr.f32.mxu0 0.0
        %570 = vmatmul.mubr.f32.gmra.mrb[0].mxu0 %v494
        %v571 = vpop.f32.mrb[0].mxu0
        %v572 = vadd.f32 0.0, %v571
        %v573 = vpop.f32.mrb[0].mxu0
        %574 = vmatprep.mubr.f32.mxu0 0.0
        %575 = vmatmul.mubr.f32.gmra.mrb[0].mxu0 %v497
        %v576 = vpop.f32.mrb[0].mxu0
        %v577 = vadd.f32 0.0, %v576
        %v578 = vpop.f32.mrb[0].mxu0
        %579 = vmatprep.mubr.f32.mxu0 0.0
        %580 = vmatmul.mubr.f32.gmra.mrb[0].mxu0 %v500
        %v581 = vpop.f32.mrb[0].mxu0
        %v582 = vadd.f32 0.0, %v581
        %v583 = vpop.f32.mrb[0].mxu0
        %584 = vmatprep.mubr.f32.mxu0 0.0
        %585 = vmatmul.mubr.f32.gmra.mrb[0].mxu0 %v503
        %v586 = vpop.f32.mrb[0].mxu0
        %v587 = vadd.f32 0.0, %v586
        %v588 = vpop.f32.mrb[0].mxu0
        %589 = vdwg.mxu0
        %v591 = vsel %vm492, %v483, 0
        %v594 = vsel %vm492, %v484, 0
        %v597 = vsel %vm492, %v485, 0
        %v600 = vsel %vm492, %v486, 0
        %602 = vmatprep.subr.mxu0 0.0
        %603 = vmatpush1.msra.mxu0 %v372
        %604 = vmatprep.subr.mxu0 0.0
        %605 = vmatpush1.msra.mxu0 %v378
        %606 = vmatprep.subr.mxu0 0.0
        %607 = vmatpush1.msra.mxu0 %v384
        %608 = vmatprep.subr.mxu0 0.0
        %609 = vmatpush1.msra.mxu0 %v390
        %610 = vmatprep.subr.mxu0 0.0
        %611 = vmatpush1.msra.mxu0 0.0
        %612 = vmatprep.subr.mxu0 0.0
        %613 = vmatpush1.msra.mxu0 0.0
        %614 = vmatprep.subr.mxu0 0.0
        %615 = vmatpush1.msra.mxu0 0.0
        %616 = vmatprep.subr.mxu0 0.0
        %617 = vmatpush1.msra.mxu0 0.0
        %618 = vmatprep.subr.mxu0 0.0
        %619 = vmatpush1.msra.mxu0 0.0
        %620 = vmatprep.subr.mxu0 0.0
        %621 = vmatpush1.msra.mxu0 0.0
        %622 = vmatprep.subr.mxu0 0.0
        %623 = vmatpush1.msra.mxu0 0.0
        %624 = vmatprep.subr.mxu0 0.0
        %625 = vmatpush1.msra.mxu0 0.0
        %626 = vmatprep.subr.mxu0 0.0
        %627 = vmatpush1.msra.mxu0 0.0
        %628 = vmatprep.subr.mxu0 0.0
        %629 = vmatpush1.msra.mxu0 0.0
        %630 = vmatprep.subr.mxu0 0.0
        %631 = vmatpush1.msra.mxu0 0.0
        %632 = vmatprep.subr.mxu0 0.0
        %633 = vmatpush1.msra.mxu0 0.0
        %634 = vmatprep.subr.mxu0 0.0
        %635 = vmatpush1.msra.mxu0 0.0
        %636 = vmatprep.subr.mxu0 0.0
        %637 = vmatpush1.msra.mxu0 0.0
        %638 = vmatprep.subr.mxu0 0.0
        %639 = vmatpush1.msra.mxu0 0.0
        %640 = vmatprep.subr.mxu0 0.0
        %641 = vmatpush1.msra.mxu0 0.0
        %642 = vmatprep.subr.mxu0 0.0
        %643 = vmatpush1.msra.mxu0 0.0
        %644 = vmatprep.subr.mxu0 0.0
        %645 = vmatpush1.msra.mxu0 0.0
        %646 = vmatprep.subr.mxu0 0.0
        %647 = vmatpush1.msra.mxu0 0.0
        %648 = vmatprep.subr.mxu0 0.0
        %649 = vmatpush1.msra.mxu0 0.0
        %650 = vmatprep.subr.mxu0 0.0
        %651 = vmatpush1.msra.mxu0 0.0
        %652 = vmatprep.subr.mxu0 0.0
        %653 = vmatpush1.msra.mxu0 0.0
        %654 = vmatprep.subr.mxu0 0.0
        %655 = vmatpush1.msra.mxu0 0.0
        %656 = vmatprep.subr.mxu0 0.0
        %657 = vmatpush1.msra.mxu0 0.0
        %658 = vmatprep.subr.mxu0 0.0
        %659 = vmatpush1.msra.mxu0 0.0
        %660 = vmatprep.subr.mxu0 0.0
        %661 = vmatpush1.msra.mxu0 0.0
        %662 = vmatprep.subr.mxu0 0.0
        %663 = vmatpush1.msra.mxu0 0.0
        %664 = vmatprep.subr.mxu0 0.0
        %665 = vmatpush1.msra.mxu0 0.0
        %666 = vmatprep.mubr.f32.mxu0 0.0
        %667 = vmatmul.mubr.f32.gmra.mrb[0].mxu0 %v591
        %v668 = vpop.f32.mrb[0].mxu0
        %v669 = vadd.f32 %v572, %v668
        %v670 = vpop.f32.mrb[0].mxu0
        %671 = vmatprep.mubr.f32.mxu0 0.0
        %672 = vmatmul.mubr.f32.gmra.mrb[0].mxu0 %v594
        %v673 = vpop.f32.mrb[0].mxu0
        %v674 = vadd.f32 %v577, %v673
        %v675 = vpop.f32.mrb[0].mxu0
        %676 = vmatprep.mubr.f32.mxu0 0.0
        %677 = vmatmul.mubr.f32.gmra.mrb[0].mxu0 %v597
        %v678 = vpop.f32.mrb[0].mxu0
        %v679 = vadd.f32 %v582, %v678
        %v680 = vpop.f32.mrb[0].mxu0
        %681 = vmatprep.mubr.f32.mxu0 0.0
        %682 = vmatmul.mubr.f32.gmra.mrb[0].mxu0 %v600
        %v683 = vpop.f32.mrb[0].mxu0
        %v684 = vadd.f32 %v587, %v683
        %v685 = vpop.f32.mrb[0].mxu0
        %686 = vdwg.mxu0
        %s687 = scalar_lea.vmem [#allocation2], 64
        %v688 = vld [vmem:[%s687] sm:$0xff]
        %v689 = vld [vmem:[%s687 + $0x8] sm:$0xff]
        %v690 = vld [vmem:[%s687 + $0x10] sm:$0xff]
        %v691 = vld [vmem:[%s687 + $0x18] sm:$0xff]
        %v693 = vsel %vm492, %v688, 0
        %v696 = vsel %vm492, %v689, 0
        %v699 = vsel %vm492, %v690, 0
        %v702 = vsel %vm492, %v691, 0
        %704 = vmatprep.subr.mxu0 0.0
        %705 = vmatpush1.msra.mxu0 %v461
        %706 = vmatprep.subr.mxu0 0.0
        %707 = vmatpush1.msra.mxu0 %v467
        %708 = vmatprep.subr.mxu0 0.0
        %709 = vmatpush1.msra.mxu0 %v473
        %710 = vmatprep.subr.mxu0 0.0
        %711 = vmatpush1.msra.mxu0 %v479
        %712 = vmatprep.subr.mxu0 0.0
        %713 = vmatpush1.msra.mxu0 0.0
        %714 = vmatprep.subr.mxu0 0.0
        %715 = vmatpush1.msra.mxu0 0.0
        %716 = vmatprep.subr.mxu0 0.0
        %717 = vmatpush1.msra.mxu0 0.0
        %718 = vmatprep.subr.mxu0 0.0
        %719 = vmatpush1.msra.mxu0 0.0
        %720 = vmatprep.subr.mxu0 0.0
        %721 = vmatpush1.msra.mxu0 0.0
        %722 = vmatprep.subr.mxu0 0.0
        %723 = vmatpush1.msra.mxu0 0.0
        %724 = vmatprep.subr.mxu0 0.0
        %725 = vmatpush1.msra.mxu0 0.0
        %726 = vmatprep.subr.mxu0 0.0
        %727 = vmatpush1.msra.mxu0 0.0
        %728 = vmatprep.subr.mxu0 0.0
        %729 = vmatpush1.msra.mxu0 0.0
        %730 = vmatprep.subr.mxu0 0.0
        %731 = vmatpush1.msra.mxu0 0.0
        %732 = vmatprep.subr.mxu0 0.0
        %733 = vmatpush1.msra.mxu0 0.0
        %734 = vmatprep.subr.mxu0 0.0
        %735 = vmatpush1.msra.mxu0 0.0
        %736 = vmatprep.subr.mxu0 0.0
        %737 = vmatpush1.msra.mxu0 0.0
        %738 = vmatprep.subr.mxu0 0.0
        %739 = vmatpush1.msra.mxu0 0.0
        %740 = vmatprep.subr.mxu0 0.0
        %741 = vmatpush1.msra.mxu0 0.0
        %742 = vmatprep.subr.mxu0 0.0
        %743 = vmatpush1.msra.mxu0 0.0
        %744 = vmatprep.subr.mxu0 0.0
        %745 = vmatpush1.msra.mxu0 0.0
        %746 = vmatprep.subr.mxu0 0.0
        %747 = vmatpush1.msra.mxu0 0.0
        %748 = vmatprep.subr.mxu0 0.0
        %749 = vmatpush1.msra.mxu0 0.0
        %750 = vmatprep.subr.mxu0 0.0
        %751 = vmatpush1.msra.mxu0 0.0
        %752 = vmatprep.subr.mxu0 0.0
        %753 = vmatpush1.msra.mxu0 0.0
        %754 = vmatprep.subr.mxu0 0.0
        %755 = vmatpush1.msra.mxu0 0.0
        %756 = vmatprep.subr.mxu0 0.0
        %757 = vmatpush1.msra.mxu0 0.0
        %758 = vmatprep.subr.mxu0 0.0
        %759 = vmatpush1.msra.mxu0 0.0
        %760 = vmatprep.subr.mxu0 0.0
        %761 = vmatpush1.msra.mxu0 0.0
        %762 = vmatprep.subr.mxu0 0.0
        %763 = vmatpush1.msra.mxu0 0.0
        %764 = vmatprep.subr.mxu0 0.0
        %765 = vmatpush1.msra.mxu0 0.0
        %766 = vmatprep.subr.mxu0 0.0
        %767 = vmatpush1.msra.mxu0 0.0
        %768 = vmatprep.mubr.f32.mxu0 0.0
        %769 = vmatmul.mubr.f32.gmra.mrb[0].mxu0 %v693
        %v770 = vpop.f32.mrb[0].mxu0
        %v771 = vadd.f32 0.0, %v770
        %v772 = vpop.f32.mrb[0].mxu0
        %773 = vmatprep.mubr.f32.mxu0 0.0
        %774 = vmatmul.mubr.f32.gmra.mrb[0].mxu0 %v696
        %v775 = vpop.f32.mrb[0].mxu0
        %v776 = vadd.f32 0.0, %v775
        %v777 = vpop.f32.mrb[0].mxu0
        %778 = vmatprep.mubr.f32.mxu0 0.0
        %779 = vmatmul.mubr.f32.gmra.mrb[0].mxu0 %v699
        %v780 = vpop.f32.mrb[0].mxu0
        %v781 = vadd.f32 0.0, %v780
        %v782 = vpop.f32.mrb[0].mxu0
        %783 = vmatprep.mubr.f32.mxu0 0.0
        %784 = vmatmul.mubr.f32.gmra.mrb[0].mxu0 %v702
        %v785 = vpop.f32.mrb[0].mxu0
        %v786 = vadd.f32 0.0, %v785
        %v787 = vpop.f32.mrb[0].mxu0
        %788 = vdwg.mxu0
        %v789 = vadd.f32 %v669, %v771
        %v790 = vadd.f32 %v674, %v776
        %v791 = vadd.f32 %v679, %v781
        %v792 = vadd.f32 %v684, %v786
        %s793 = scalar_lea.vmem [#allocation2], 96
        %v794 = vld [vmem:[%s793] sm:$0xff]
        %v795 = vld [vmem:[%s793 + $0x8] sm:$0xff]
        %v796 = vld [vmem:[%s793 + $0x10] sm:$0xff]
        %v797 = vld [vmem:[%s793 + $0x18] sm:$0xff]
        %v799 = vsel %vm492, %v794, 0
        %v802 = vsel %vm492, %v795, 0
        %v805 = vsel %vm492, %v796, 0
        %v808 = vsel %vm492, %v797, 0
        %810 = vmatprep.subr.mxu0 0.0
        %811 = vmatpush1.msra.mxu0 %v463
        %812 = vmatprep.subr.mxu0 0.0
        %813 = vmatpush1.msra.mxu0 %v469
        %814 = vmatprep.subr.mxu0 0.0
        %815 = vmatpush1.msra.mxu0 %v475
        %816 = vmatprep.subr.mxu0 0.0
        %817 = vmatpush1.msra.mxu0 %v481
        %818 = vmatprep.subr.mxu0 0.0
        %819 = vmatpush1.msra.mxu0 0.0
        %820 = vmatprep.subr.mxu0 0.0
        %821 = vmatpush1.msra.mxu0 0.0
        %822 = vmatprep.subr.mxu0 0.0
        %823 = vmatpush1.msra.mxu0 0.0
        %824 = vmatprep.subr.mxu0 0.0
        %825 = vmatpush1.msra.mxu0 0.0
        %826 = vmatprep.subr.mxu0 0.0
        %827 = vmatpush1.msra.mxu0 0.0
        %828 = vmatprep.subr.mxu0 0.0
        %829 = vmatpush1.msra.mxu0 0.0
        %830 = vmatprep.subr.mxu0 0.0
        %831 = vmatpush1.msra.mxu0 0.0
        %832 = vmatprep.subr.mxu0 0.0
        %833 = vmatpush1.msra.mxu0 0.0
        %834 = vmatprep.subr.mxu0 0.0
        %835 = vmatpush1.msra.mxu0 0.0
        %836 = vmatprep.subr.mxu0 0.0
        %837 = vmatpush1.msra.mxu0 0.0
        %838 = vmatprep.subr.mxu0 0.0
        %839 = vmatpush1.msra.mxu0 0.0
        %840 = vmatprep.subr.mxu0 0.0
        %841 = vmatpush1.msra.mxu0 0.0
        %842 = vmatprep.subr.mxu0 0.0
        %843 = vmatpush1.msra.mxu0 0.0
        %844 = vmatprep.subr.mxu0 0.0
        %845 = vmatpush1.msra.mxu0 0.0
        %846 = vmatprep.subr.mxu0 0.0
        %847 = vmatpush1.msra.mxu0 0.0
        %848 = vmatprep.subr.mxu0 0.0
        %849 = vmatpush1.msra.mxu0 0.0
        %850 = vmatprep.subr.mxu0 0.0
        %851 = vmatpush1.msra.mxu0 0.0
        %852 = vmatprep.subr.mxu0 0.0
        %853 = vmatpush1.msra.mxu0 0.0
        %854 = vmatprep.subr.mxu0 0.0
        %855 = vmatpush1.msra.mxu0 0.0
        %856 = vmatprep.subr.mxu0 0.0
        %857 = vmatpush1.msra.mxu0 0.0
        %858 = vmatprep.subr.mxu0 0.0
        %859 = vmatpush1.msra.mxu0 0.0
        %860 = vmatprep.subr.mxu0 0.0
        %861 = vmatpush1.msra.mxu0 0.0
        %862 = vmatprep.subr.mxu0 0.0
        %863 = vmatpush1.msra.mxu0 0.0
        %864 = vmatprep.subr.mxu0 0.0
        %865 = vmatpush1.msra.mxu0 0.0
        %866 = vmatprep.subr.mxu0 0.0
        %867 = vmatpush1.msra.mxu0 0.0
        %868 = vmatprep.subr.mxu0 0.0
        %869 = vmatpush1.msra.mxu0 0.0
        %870 = vmatprep.subr.mxu0 0.0
        %871 = vmatpush1.msra.mxu0 0.0
        %872 = vmatprep.subr.mxu0 0.0
        %873 = vmatpush1.msra.mxu0 0.0
        %874 = vmatprep.mubr.f32.mxu0 0.0
        %875 = vmatmul.mubr.f32.gmra.mrb[0].mxu0 %v799
        %v876 = vpop.f32.mrb[0].mxu0
        %v877 = vadd.f32 0.0, %v876
        %v878 = vpop.f32.mrb[0].mxu0
        %879 = vmatprep.mubr.f32.mxu0 0.0
        %880 = vmatmul.mubr.f32.gmra.mrb[0].mxu0 %v802
        %v881 = vpop.f32.mrb[0].mxu0
        %v882 = vadd.f32 0.0, %v881
        %v883 = vpop.f32.mrb[0].mxu0
        %884 = vmatprep.mubr.f32.mxu0 0.0
        %885 = vmatmul.mubr.f32.gmra.mrb[0].mxu0 %v805
        %v886 = vpop.f32.mrb[0].mxu0
        %v887 = vadd.f32 0.0, %v886
        %v888 = vpop.f32.mrb[0].mxu0
        %889 = vmatprep.mubr.f32.mxu0 0.0
        %890 = vmatmul.mubr.f32.gmra.mrb[0].mxu0 %v808
        %v891 = vpop.f32.mrb[0].mxu0
        %v892 = vadd.f32 0.0, %v891
        %v893 = vpop.f32.mrb[0].mxu0
        %894 = vdwg.mxu0
        %v895 = vadd.f32 %v789, %v877
        %v896 = vadd.f32 %v790, %v882
        %v897 = vadd.f32 %v791, %v887
        %v898 = vadd.f32 %v792, %v892
        %v900 = vlaneseq
        %v901 = vshrl.u32 %v900, 7
        %v902 = vsub.s32 0, %v901
        %v903 = vrot.slane %v291, %v902
        %v905 = vadd.f32 %v895, %v903
        %v906 = vadd.f32 %v896, %v903
        %v907 = vadd.f32 %v897, %v903
        %v908 = vadd.f32 %v898, %v903
        %v909 = vmax.f32 %v905, 0.0
        %v910 = vmax.f32 %v906, 0.0
        %v911 = vmax.f32 %v907, 0.0
        %v912 = vmax.f32 %v908, 0.0
        %v913 = vld [vmem:[#allocation5] sm:$0xff]
        %v914 = vld [vmem:[#allocation5 + $0x8] sm:$0xff]
        %v915 = vld [vmem:[#allocation5 + $0x10] sm:$0xff]
        %v916 = vld [vmem:[#allocation5 + $0x18] sm:$0xff]
        %v917 = vld [vmem:[#allocation5 + $0x20] sm:$0xff]
        %v918 = vld [vmem:[#allocation5 + $0x28] sm:$0xff]
        %v919 = vld [vmem:[#allocation5 + $0x30] sm:$0xff]
        %v920 = vld [vmem:[#allocation5 + $0x38] sm:$0xff]
        %v921 = vld [vmem:[#allocation5 + $0x40] sm:$0xff]
        %v922 = vld [vmem:[#allocation5 + $0x48] sm:$0xff]
        %v923 = vld [vmem:[#allocation5 + $0x50] sm:$0xff]
        %v924 = vld [vmem:[#allocation5 + $0x58] sm:$0xff]
        %v925 = vld [vmem:[#allocation5 + $0x60] sm:$0xff]
        %v926 = vld [vmem:[#allocation5 + $0x68] sm:$0xff]
        %v927 = vld [vmem:[#allocation5 + $0x70] sm:$0xff]
        %v928 = vld [vmem:[#allocation5 + $0x78] sm:$0xff]
        %v929 = vld [vmem:[#allocation5 + $0x80] sm:$0xff]
        %v930 = vld [vmem:[#allocation5 + $0x88] sm:$0xff]
        %v931 = vld [vmem:[#allocation5 + $0x90] sm:$0xff]
        %v932 = vld [vmem:[#allocation5 + $0x98] sm:$0xff]
        %v933 = vld [vmem:[#allocation5 + $0xa0] sm:$0xff]
        %v934 = vld [vmem:[#allocation5 + $0xa8] sm:$0xff]
        %v935 = vld [vmem:[#allocation5 + $0xb0] sm:$0xff]
        %v936 = vld [vmem:[#allocation5 + $0xb8] sm:$0xff]
        %v937 = vld [vmem:[#allocation5 + $0xc0] sm:$0xff]
        %v938 = vld [vmem:[#allocation5 + $0xc8] sm:$0xff]
        %v939 = vld [vmem:[#allocation5 + $0xd0] sm:$0xff]
        %v940 = vld [vmem:[#allocation5 + $0xd8] sm:$0xff]
        %v941 = vld [vmem:[#allocation5 + $0xe0] sm:$0xff]
        %v942 = vld [vmem:[#allocation5 + $0xe8] sm:$0xff]
        %v943 = vld [vmem:[#allocation5 + $0xf0] sm:$0xff]
        %v944 = vld [vmem:[#allocation5 + $0xf8] sm:$0xff]
        %v945 = vld [vmem:[#allocation5 + $0x100] sm:$0xff]
        %v946 = vld [vmem:[#allocation5 + $0x108] sm:$0xff]
        %v947 = vld [vmem:[#allocation5 + $0x110] sm:$0xff]
        %v948 = vld [vmem:[#allocation5 + $0x118] sm:$0xff]
        %v949 = vld [vmem:[#allocation5 + $0x120] sm:$0xff]
        %v950 = vld [vmem:[#allocation5 + $0x128] sm:$0xff]
        %v951 = vld [vmem:[#allocation5 + $0x130] sm:$0xff]
        %v952 = vld [vmem:[#allocation5 + $0x138] sm:$0xff]
        %v953 = vld [vmem:[#allocation5 + $0x140] sm:$0xff]
        %v954 = vld [vmem:[#allocation5 + $0x148] sm:$0xff]
        %v955 = vld [vmem:[#allocation5 + $0x150] sm:$0xff]
        %v956 = vld [vmem:[#allocation5 + $0x158] sm:$0xff]
        %v957 = vld [vmem:[#allocation5 + $0x160] sm:$0xff]
        %v958 = vld [vmem:[#allocation5 + $0x168] sm:$0xff]
        %v959 = vld [vmem:[#allocation5 + $0x170] sm:$0xff]
        %v960 = vld [vmem:[#allocation5 + $0x178] sm:$0xff]
        %v961 = vld [vmem:[#allocation5 + $0x180] sm:$0xff]
        %v962 = vld [vmem:[#allocation5 + $0x188] sm:$0xff]
        %v963 = vld [vmem:[#allocation5 + $0x190] sm:$0xff]
        %v964 = vld [vmem:[#allocation5 + $0x198] sm:$0xff]
        %v965 = vld [vmem:[#allocation5 + $0x1a0] sm:$0xff]
        %v966 = vld [vmem:[#allocation5 + $0x1a8] sm:$0xff]
        %v967 = vld [vmem:[#allocation5 + $0x1b0] sm:$0xff]
        %v968 = vld [vmem:[#allocation5 + $0x1b8] sm:$0xff]
        %v969 = vld [vmem:[#allocation5 + $0x1c0] sm:$0xff]
        %v970 = vld [vmem:[#allocation5 + $0x1c8] sm:$0xff]
        %v971 = vld [vmem:[#allocation5 + $0x1d0] sm:$0xff]
        %v972 = vld [vmem:[#allocation5 + $0x1d8] sm:$0xff]
        %v973 = vld [vmem:[#allocation5 + $0x1e0] sm:$0xff]
        %v974 = vld [vmem:[#allocation5 + $0x1e8] sm:$0xff]
        %v975 = vld [vmem:[#allocation5 + $0x1f0] sm:$0xff]
        %v976 = vld [vmem:[#allocation5 + $0x1f8] sm:$0xff]
        %v977 = vld [vmem:[%s5] sm:$0x1]
        %978 = vmatprep.subr.mxu0 %v914
        %979 = vmatpush1.msra.mxu0 %v913
        %980 = vmatprep.subr.mxu0 %v918
        %981 = vmatpush1.msra.mxu0 %v917
        %982 = vmatprep.subr.mxu0 %v922
        %983 = vmatpush1.msra.mxu0 %v921
        %984 = vmatprep.subr.mxu0 %v926
        %985 = vmatpush1.msra.mxu0 %v925
        %986 = vmatprep.subr.mxu0 %v930
        %987 = vmatpush1.msra.mxu0 %v929
        %988 = vmatprep.subr.mxu0 %v934
        %989 = vmatpush1.msra.mxu0 %v933
        %990 = vmatprep.subr.mxu0 %v938
        %991 = vmatpush1.msra.mxu0 %v937
        %992 = vmatprep.subr.mxu0 %v942
        %993 = vmatpush1.msra.mxu0 %v941
        %994 = vmatprep.subr.mxu0 %v946
        %995 = vmatpush1.msra.mxu0 %v945
        %996 = vmatprep.subr.mxu0 %v950
        %997 = vmatpush1.msra.mxu0 %v949
        %998 = vmatprep.subr.mxu0 %v954
        %999 = vmatpush1.msra.mxu0 %v953
        %1000 = vmatprep.subr.mxu0 %v958
        %1001 = vmatpush1.msra.mxu0 %v957
        %1002 = vmatprep.subr.mxu0 %v962
        %1003 = vmatpush1.msra.mxu0 %v961
        %1004 = vmatprep.subr.mxu0 %v966
        %1005 = vmatpush1.msra.mxu0 %v965
        %1006 = vmatprep.subr.mxu0 %v970
        %1007 = vmatpush1.msra.mxu0 %v969
        %1008 = vmatprep.subr.mxu0 %v974
        %1009 = vmatpush1.msra.mxu0 %v973
        %1010 = vmatprep.subr.mxu0 0.0
        %1011 = vmatpush1.msra.mxu0 0.0
        %1012 = vmatprep.subr.mxu0 0.0
        %1013 = vmatpush1.msra.mxu0 0.0
        %1014 = vmatprep.subr.mxu0 0.0
        %1015 = vmatpush1.msra.mxu0 0.0
        %1016 = vmatprep.subr.mxu0 0.0
        %1017 = vmatpush1.msra.mxu0 0.0
        %1018 = vmatprep.subr.mxu0 0.0
        %1019 = vmatpush1.msra.mxu0 0.0
        %1020 = vmatprep.subr.mxu0 0.0
        %1021 = vmatpush1.msra.mxu0 0.0
        %1022 = vmatprep.subr.mxu0 0.0
        %1023 = vmatpush1.msra.mxu0 0.0
        %1024 = vmatprep.subr.mxu0 0.0
        %1025 = vmatpush1.msra.mxu0 0.0
        %1026 = vmatprep.subr.mxu0 0.0
        %1027 = vmatpush1.msra.mxu0 0.0
        %1028 = vmatprep.subr.mxu0 0.0
        %1029 = vmatpush1.msra.mxu0 0.0
        %1030 = vmatprep.subr.mxu0 0.0
        %1031 = vmatpush1.msra.mxu0 0.0
        %1032 = vmatprep.subr.mxu0 0.0
        %1033 = vmatpush1.msra.mxu0 0.0
        %1034 = vmatprep.subr.mxu0 0.0
        %1035 = vmatpush1.msra.mxu0 0.0
        %1036 = vmatprep.subr.mxu0 0.0
        %1037 = vmatpush1.msra.mxu0 0.0
        %1038 = vmatprep.subr.mxu0 0.0
        %1039 = vmatpush1.msra.mxu0 0.0
        %1040 = vmatprep.subr.mxu0 0.0
        %1041 = vmatpush1.msra.mxu0 0.0
        %1042 = vmatprep.mubr.f32.mxu0 0.0
        %1043 = vmatmul.mubr.f32.gmra.mrb[0].mxu0 %v909
        %v1044 = vpop.f32.mrb[0].mxu0
        %v1045 = vadd.f32 0.0, %v1044
        %v1046 = vpop.f32.mrb[0].mxu0
        %v1047 = vadd.f32 0.0, %v1046
        %1048 = vmatprep.mubr.f32.mxu0 0.0
        %1049 = vmatmul.mubr.f32.gmra.mrb[0].mxu0 %v910
        %v1050 = vpop.f32.mrb[0].mxu0
        %v1051 = vadd.f32 0.0, %v1050
        %v1052 = vpop.f32.mrb[0].mxu0
        %v1053 = vadd.f32 0.0, %v1052
        %1054 = vmatprep.mubr.f32.mxu0 0.0
        %1055 = vmatmul.mubr.f32.gmra.mrb[0].mxu0 %v911
        %v1056 = vpop.f32.mrb[0].mxu0
        %v1057 = vadd.f32 0.0, %v1056
        %v1058 = vpop.f32.mrb[0].mxu0
        %v1059 = vadd.f32 0.0, %v1058
        %1060 = vmatprep.mubr.f32.mxu0 0.0
        %1061 = vmatmul.mubr.f32.gmra.mrb[0].mxu0 %v912
        %v1062 = vpop.f32.mrb[0].mxu0
        %v1063 = vadd.f32 0.0, %v1062
        %v1064 = vpop.f32.mrb[0].mxu0
        %v1065 = vadd.f32 0.0, %v1064
        %1066 = vdwg.mxu0
        %1067 = vmatprep.subr.mxu0 %v916
        %1068 = vmatpush1.msra.mxu0 %v915
        %1069 = vmatprep.subr.mxu0 %v920
        %1070 = vmatpush1.msra.mxu0 %v919
        %1071 = vmatprep.subr.mxu0 %v924
        %1072 = vmatpush1.msra.mxu0 %v923
        %1073 = vmatprep.subr.mxu0 %v928
        %1074 = vmatpush1.msra.mxu0 %v927
        %1075 = vmatprep.subr.mxu0 %v932
        %1076 = vmatpush1.msra.mxu0 %v931
        %1077 = vmatprep.subr.mxu0 %v936
        %1078 = vmatpush1.msra.mxu0 %v935
        %1079 = vmatprep.subr.mxu0 %v940
        %1080 = vmatpush1.msra.mxu0 %v939
        %1081 = vmatprep.subr.mxu0 %v944
        %1082 = vmatpush1.msra.mxu0 %v943
        %1083 = vmatprep.subr.mxu0 %v948
        %1084 = vmatpush1.msra.mxu0 %v947
        %1085 = vmatprep.subr.mxu0 %v952
        %1086 = vmatpush1.msra.mxu0 %v951
        %1087 = vmatprep.subr.mxu0 %v956
        %1088 = vmatpush1.msra.mxu0 %v955
        %1089 = vmatprep.subr.mxu0 %v960
        %1090 = vmatpush1.msra.mxu0 %v959
        %1091 = vmatprep.subr.mxu0 %v964
        %1092 = vmatpush1.msra.mxu0 %v963
        %1093 = vmatprep.subr.mxu0 %v968
        %1094 = vmatpush1.msra.mxu0 %v967
        %1095 = vmatprep.subr.mxu0 %v972
        %1096 = vmatpush1.msra.mxu0 %v971
        %1097 = vmatprep.subr.mxu0 %v976
        %1098 = vmatpush1.msra.mxu0 %v975
        %1099 = vmatprep.subr.mxu0 0.0
        %1100 = vmatpush1.msra.mxu0 0.0
        %1101 = vmatprep.subr.mxu0 0.0
        %1102 = vmatpush1.msra.mxu0 0.0
        %1103 = vmatprep.subr.mxu0 0.0
        %1104 = vmatpush1.msra.mxu0 0.0
        %1105 = vmatprep.subr.mxu0 0.0
        %1106 = vmatpush1.msra.mxu0 0.0
        %1107 = vmatprep.subr.mxu0 0.0
        %1108 = vmatpush1.msra.mxu0 0.0
        %1109 = vmatprep.subr.mxu0 0.0
        %1110 = vmatpush1.msra.mxu0 0.0
        %1111 = vmatprep.subr.mxu0 0.0
        %1112 = vmatpush1.msra.mxu0 0.0
        %1113 = vmatprep.subr.mxu0 0.0
        %1114 = vmatpush1.msra.mxu0 0.0
        %1115 = vmatprep.subr.mxu0 0.0
        %1116 = vmatpush1.msra.mxu0 0.0
        %1117 = vmatprep.subr.mxu0 0.0
        %1118 = vmatpush1.msra.mxu0 0.0
        %1119 = vmatprep.subr.mxu0 0.0
        %1120 = vmatpush1.msra.mxu0 0.0
        %1121 = vmatprep.subr.mxu0 0.0
        %1122 = vmatpush1.msra.mxu0 0.0
        %1123 = vmatprep.subr.mxu0 0.0
        %1124 = vmatpush1.msra.mxu0 0.0
        %1125 = vmatprep.subr.mxu0 0.0
        %1126 = vmatpush1.msra.mxu0 0.0
        %1127 = vmatprep.subr.mxu0 0.0
        %1128 = vmatpush1.msra.mxu0 0.0
        %1129 = vmatprep.subr.mxu0 0.0
        %1130 = vmatpush1.msra.mxu0 0.0
        %1131 = vmatprep.mubr.f32.mxu0 0.0
        %1132 = vmatmul.mubr.f32.gmra.mrb[0].mxu0 %v909
        %v1133 = vpop.f32.mrb[0].mxu0
        %v1134 = vadd.f32 0.0, %v1133
        %v1135 = vpop.f32.mrb[0].mxu0
        %v1136 = vadd.f32 0.0, %v1135
        %1137 = vmatprep.mubr.f32.mxu0 0.0
        %1138 = vmatmul.mubr.f32.gmra.mrb[0].mxu0 %v910
        %v1139 = vpop.f32.mrb[0].mxu0
        %v1140 = vadd.f32 0.0, %v1139
        %v1141 = vpop.f32.mrb[0].mxu0
        %v1142 = vadd.f32 0.0, %v1141
        %1143 = vmatprep.mubr.f32.mxu0 0.0
        %1144 = vmatmul.mubr.f32.gmra.mrb[0].mxu0 %v911
        %v1145 = vpop.f32.mrb[0].mxu0
        %v1146 = vadd.f32 0.0, %v1145
        %v1147 = vpop.f32.mrb[0].mxu0
        %v1148 = vadd.f32 0.0, %v1147
        %1149 = vmatprep.mubr.f32.mxu0 0.0
        %1150 = vmatmul.mubr.f32.gmra.mrb[0].mxu0 %v912
        %v1151 = vpop.f32.mrb[0].mxu0
        %v1152 = vadd.f32 0.0, %v1151
        %v1153 = vpop.f32.mrb[0].mxu0
        %v1154 = vadd.f32 0.0, %v1153
        %1155 = vdwg.mxu0
        %1156 = vmatprep.subr.mxu0 0.0
        %1157 = vmatpush1.msra.mxu0 %v1047
        %1158 = vmatprep.subr.mxu0 0.0
        %1159 = vmatpush1.msra.mxu0 %v1053
        %1160 = vmatprep.subr.mxu0 0.0
        %1161 = vmatpush1.msra.mxu0 %v1059
        %1162 = vmatprep.subr.mxu0 0.0
        %1163 = vmatpush1.msra.mxu0 %v1065
        %1164 = vmatprep.subr.mxu0 0.0
        %1165 = vmatpush1.msra.mxu0 0.0
        %1166 = vmatprep.subr.mxu0 0.0
        %1167 = vmatpush1.msra.mxu0 0.0
        %1168 = vmatprep.subr.mxu0 0.0
        %1169 = vmatpush1.msra.mxu0 0.0
        %1170 = vmatprep.subr.mxu0 0.0
        %1171 = vmatpush1.msra.mxu0 0.0
        %1172 = vmatprep.subr.mxu0 0.0
        %1173 = vmatpush1.msra.mxu0 0.0
        %1174 = vmatprep.subr.mxu0 0.0
        %1175 = vmatpush1.msra.mxu0 0.0
        %1176 = vmatprep.subr.mxu0 0.0
        %1177 = vmatpush1.msra.mxu0 0.0
        %1178 = vmatprep.subr.mxu0 0.0
        %1179 = vmatpush1.msra.mxu0 0.0
        %1180 = vmatprep.subr.mxu0 0.0
        %1181 = vmatpush1.msra.mxu0 0.0
        %1182 = vmatprep.subr.mxu0 0.0
        %1183 = vmatpush1.msra.mxu0 0.0
        %1184 = vmatprep.subr.mxu0 0.0
        %1185 = vmatpush1.msra.mxu0 0.0
        %1186 = vmatprep.subr.mxu0 0.0
        %1187 = vmatpush1.msra.mxu0 0.0
        %1188 = vmatprep.subr.mxu0 0.0
        %1189 = vmatpush1.msra.mxu0 0.0
        %1190 = vmatprep.subr.mxu0 0.0
        %1191 = vmatpush1.msra.mxu0 0.0
        %1192 = vmatprep.subr.mxu0 0.0
        %1193 = vmatpush1.msra.mxu0 0.0
        %1194 = vmatprep.subr.mxu0 0.0
        %1195 = vmatpush1.msra.mxu0 0.0
        %1196 = vmatprep.subr.mxu0 0.0
        %1197 = vmatpush1.msra.mxu0 0.0
        %1198 = vmatprep.subr.mxu0 0.0
        %1199 = vmatpush1.msra.mxu0 0.0
        %1200 = vmatprep.subr.mxu0 0.0
        %1201 = vmatpush1.msra.mxu0 0.0
        %1202 = vmatprep.subr.mxu0 0.0
        %1203 = vmatpush1.msra.mxu0 0.0
        %1204 = vmatprep.subr.mxu0 0.0
        %1205 = vmatpush1.msra.mxu0 0.0
        %1206 = vmatprep.subr.mxu0 0.0
        %1207 = vmatpush1.msra.mxu0 0.0
        %1208 = vmatprep.subr.mxu0 0.0
        %1209 = vmatpush1.msra.mxu0 0.0
        %1210 = vmatprep.subr.mxu0 0.0
        %1211 = vmatpush1.msra.mxu0 0.0
        %1212 = vmatprep.subr.mxu0 0.0
        %1213 = vmatpush1.msra.mxu0 0.0
        %1214 = vmatprep.subr.mxu0 0.0
        %1215 = vmatpush1.msra.mxu0 0.0
        %1216 = vmatprep.subr.mxu0 0.0
        %1217 = vmatpush1.msra.mxu0 0.0
        %1218 = vmatprep.subr.mxu0 0.0
        %1219 = vmatpush1.msra.mxu0 0.0
        %1220 = vmatprep.mubr.f32.mxu0 0.0
        %1221 = vmatmul.mubr.f32.gmra.mrb[0].mxu0 %v494
        %v1222 = vpop.f32.mrb[0].mxu0
        %v1223 = vadd.f32 0.0, %v1222
        %v1224 = vpop.f32.mrb[0].mxu0
        %1225 = vmatprep.mubr.f32.mxu0 0.0
        %1226 = vmatmul.mubr.f32.gmra.mrb[0].mxu0 %v497
        %v1227 = vpop.f32.mrb[0].mxu0
        %v1228 = vadd.f32 0.0, %v1227
        %v1229 = vpop.f32.mrb[0].mxu0
        %1230 = vmatprep.mubr.f32.mxu0 0.0
        %1231 = vmatmul.mubr.f32.gmra.mrb[0].mxu0 %v500
        %v1232 = vpop.f32.mrb[0].mxu0
        %v1233 = vadd.f32 0.0, %v1232
        %v1234 = vpop.f32.mrb[0].mxu0
        %1235 = vmatprep.mubr.f32.mxu0 0.0
        %1236 = vmatmul.mubr.f32.gmra.mrb[0].mxu0 %v503
        %v1237 = vpop.f32.mrb[0].mxu0
        %v1238 = vadd.f32 0.0, %v1237
        %v1239 = vpop.f32.mrb[0].mxu0
        %1240 = vdwg.mxu0
        %1241 = vmatprep.subr.mxu0 0.0
        %1242 = vmatpush1.msra.mxu0 %v1045
        %1243 = vmatprep.subr.mxu0 0.0
        %1244 = vmatpush1.msra.mxu0 %v1051
        %1245 = vmatprep.subr.mxu0 0.0
        %1246 = vmatpush1.msra.mxu0 %v1057
        %1247 = vmatprep.subr.mxu0 0.0
        %1248 = vmatpush1.msra.mxu0 %v1063
        %1249 = vmatprep.subr.mxu0 0.0
        %1250 = vmatpush1.msra.mxu0 0.0
        %1251 = vmatprep.subr.mxu0 0.0
        %1252 = vmatpush1.msra.mxu0 0.0
        %1253 = vmatprep.subr.mxu0 0.0
        %1254 = vmatpush1.msra.mxu0 0.0
        %1255 = vmatprep.subr.mxu0 0.0
        %1256 = vmatpush1.msra.mxu0 0.0
        %1257 = vmatprep.subr.mxu0 0.0
        %1258 = vmatpush1.msra.mxu0 0.0
        %1259 = vmatprep.subr.mxu0 0.0
        %1260 = vmatpush1.msra.mxu0 0.0
        %1261 = vmatprep.subr.mxu0 0.0
        %1262 = vmatpush1.msra.mxu0 0.0
        %1263 = vmatprep.subr.mxu0 0.0
        %1264 = vmatpush1.msra.mxu0 0.0
        %1265 = vmatprep.subr.mxu0 0.0
        %1266 = vmatpush1.msra.mxu0 0.0
        %1267 = vmatprep.subr.mxu0 0.0
        %1268 = vmatpush1.msra.mxu0 0.0
        %1269 = vmatprep.subr.mxu0 0.0
        %1270 = vmatpush1.msra.mxu0 0.0
        %1271 = vmatprep.subr.mxu0 0.0
        %1272 = vmatpush1.msra.mxu0 0.0
        %1273 = vmatprep.subr.mxu0 0.0
        %1274 = vmatpush1.msra.mxu0 0.0
        %1275 = vmatprep.subr.mxu0 0.0
        %1276 = vmatpush1.msra.mxu0 0.0
        %1277 = vmatprep.subr.mxu0 0.0
        %1278 = vmatpush1.msra.mxu0 0.0
        %1279 = vmatprep.subr.mxu0 0.0
        %1280 = vmatpush1.msra.mxu0 0.0
        %1281 = vmatprep.subr.mxu0 0.0
        %1282 = vmatpush1.msra.mxu0 0.0
        %1283 = vmatprep.subr.mxu0 0.0
        %1284 = vmatpush1.msra.mxu0 0.0
        %1285 = vmatprep.subr.mxu0 0.0
        %1286 = vmatpush1.msra.mxu0 0.0
        %1287 = vmatprep.subr.mxu0 0.0
        %1288 = vmatpush1.msra.mxu0 0.0
        %1289 = vmatprep.subr.mxu0 0.0
        %1290 = vmatpush1.msra.mxu0 0.0
        %1291 = vmatprep.subr.mxu0 0.0
        %1292 = vmatpush1.msra.mxu0 0.0
        %1293 = vmatprep.subr.mxu0 0.0
        %1294 = vmatpush1.msra.mxu0 0.0
        %1295 = vmatprep.subr.mxu0 0.0
        %1296 = vmatpush1.msra.mxu0 0.0
        %1297 = vmatprep.subr.mxu0 0.0
        %1298 = vmatpush1.msra.mxu0 0.0
        %1299 = vmatprep.subr.mxu0 0.0
        %1300 = vmatpush1.msra.mxu0 0.0
        %1301 = vmatprep.subr.mxu0 0.0
        %1302 = vmatpush1.msra.mxu0 0.0
        %1303 = vmatprep.subr.mxu0 0.0
        %1304 = vmatpush1.msra.mxu0 0.0
        %1305 = vmatprep.mubr.f32.mxu0 0.0
        %1306 = vmatmul.mubr.f32.gmra.mrb[0].mxu0 %v591
        %v1307 = vpop.f32.mrb[0].mxu0
        %v1308 = vadd.f32 %v1223, %v1307
        %v1309 = vpop.f32.mrb[0].mxu0
        %1310 = vmatprep.mubr.f32.mxu0 0.0
        %1311 = vmatmul.mubr.f32.gmra.mrb[0].mxu0 %v594
        %v1312 = vpop.f32.mrb[0].mxu0
        %v1313 = vadd.f32 %v1228, %v1312
        %v1314 = vpop.f32.mrb[0].mxu0
        %1315 = vmatprep.mubr.f32.mxu0 0.0
        %1316 = vmatmul.mubr.f32.gmra.mrb[0].mxu0 %v597
        %v1317 = vpop.f32.mrb[0].mxu0
        %v1318 = vadd.f32 %v1233, %v1317
        %v1319 = vpop.f32.mrb[0].mxu0
        %1320 = vmatprep.mubr.f32.mxu0 0.0
        %1321 = vmatmul.mubr.f32.gmra.mrb[0].mxu0 %v600
        %v1322 = vpop.f32.mrb[0].mxu0
        %v1323 = vadd.f32 %v1238, %v1322
        %v1324 = vpop.f32.mrb[0].mxu0
        %1325 = vdwg.mxu0
        %1326 = vmatprep.subr.mxu0 0.0
        %1327 = vmatpush1.msra.mxu0 %v1134
        %1328 = vmatprep.subr.mxu0 0.0
        %1329 = vmatpush1.msra.mxu0 %v1140
        %1330 = vmatprep.subr.mxu0 0.0
        %1331 = vmatpush1.msra.mxu0 %v1146
        %1332 = vmatprep.subr.mxu0 0.0
        %1333 = vmatpush1.msra.mxu0 %v1152
        %1334 = vmatprep.subr.mxu0 0.0
        %1335 = vmatpush1.msra.mxu0 0.0
        %1336 = vmatprep.subr.mxu0 0.0
        %1337 = vmatpush1.msra.mxu0 0.0
        %1338 = vmatprep.subr.mxu0 0.0
        %1339 = vmatpush1.msra.mxu0 0.0
        %1340 = vmatprep.subr.mxu0 0.0
        %1341 = vmatpush1.msra.mxu0 0.0
        %1342 = vmatprep.subr.mxu0 0.0
        %1343 = vmatpush1.msra.mxu0 0.0
        %1344 = vmatprep.subr.mxu0 0.0
        %1345 = vmatpush1.msra.mxu0 0.0
        %1346 = vmatprep.subr.mxu0 0.0
        %1347 = vmatpush1.msra.mxu0 0.0
        %1348 = vmatprep.subr.mxu0 0.0
        %1349 = vmatpush1.msra.mxu0 0.0
        %1350 = vmatprep.subr.mxu0 0.0
        %1351 = vmatpush1.msra.mxu0 0.0
        %1352 = vmatprep.subr.mxu0 0.0
        %1353 = vmatpush1.msra.mxu0 0.0
        %1354 = vmatprep.subr.mxu0 0.0
        %1355 = vmatpush1.msra.mxu0 0.0
        %1356 = vmatprep.subr.mxu0 0.0
        %1357 = vmatpush1.msra.mxu0 0.0
        %1358 = vmatprep.subr.mxu0 0.0
        %1359 = vmatpush1.msra.mxu0 0.0
        %1360 = vmatprep.subr.mxu0 0.0
        %1361 = vmatpush1.msra.mxu0 0.0
        %1362 = vmatprep.subr.mxu0 0.0
        %1363 = vmatpush1.msra.mxu0 0.0
        %1364 = vmatprep.subr.mxu0 0.0
        %1365 = vmatpush1.msra.mxu0 0.0
        %1366 = vmatprep.subr.mxu0 0.0
        %1367 = vmatpush1.msra.mxu0 0.0
        %1368 = vmatprep.subr.mxu0 0.0
        %1369 = vmatpush1.msra.mxu0 0.0
        %1370 = vmatprep.subr.mxu0 0.0
        %1371 = vmatpush1.msra.mxu0 0.0
        %1372 = vmatprep.subr.mxu0 0.0
        %1373 = vmatpush1.msra.mxu0 0.0
        %1374 = vmatprep.subr.mxu0 0.0
        %1375 = vmatpush1.msra.mxu0 0.0
        %1376 = vmatprep.subr.mxu0 0.0
        %1377 = vmatpush1.msra.mxu0 0.0
        %1378 = vmatprep.subr.mxu0 0.0
        %1379 = vmatpush1.msra.mxu0 0.0
        %1380 = vmatprep.subr.mxu0 0.0
        %1381 = vmatpush1.msra.mxu0 0.0
        %1382 = vmatprep.subr.mxu0 0.0
        %1383 = vmatpush1.msra.mxu0 0.0
        %1384 = vmatprep.subr.mxu0 0.0
        %1385 = vmatpush1.msra.mxu0 0.0
        %1386 = vmatprep.subr.mxu0 0.0
        %1387 = vmatpush1.msra.mxu0 0.0
        %1388 = vmatprep.subr.mxu0 0.0
        %1389 = vmatpush1.msra.mxu0 0.0
        %1390 = vmatprep.mubr.f32.mxu0 0.0
        %1391 = vmatmul.mubr.f32.gmra.mrb[0].mxu0 %v693
        %v1392 = vpop.f32.mrb[0].mxu0
        %v1393 = vadd.f32 0.0, %v1392
        %v1394 = vpop.f32.mrb[0].mxu0
        %1395 = vmatprep.mubr.f32.mxu0 0.0
        %1396 = vmatmul.mubr.f32.gmra.mrb[0].mxu0 %v696
        %v1397 = vpop.f32.mrb[0].mxu0
        %v1398 = vadd.f32 0.0, %v1397
        %v1399 = vpop.f32.mrb[0].mxu0
        %1400 = vmatprep.mubr.f32.mxu0 0.0
        %1401 = vmatmul.mubr.f32.gmra.mrb[0].mxu0 %v699
        %v1402 = vpop.f32.mrb[0].mxu0
        %v1403 = vadd.f32 0.0, %v1402
        %v1404 = vpop.f32.mrb[0].mxu0
        %1405 = vmatprep.mubr.f32.mxu0 0.0
        %1406 = vmatmul.mubr.f32.gmra.mrb[0].mxu0 %v702
        %v1407 = vpop.f32.mrb[0].mxu0
        %v1408 = vadd.f32 0.0, %v1407
        %v1409 = vpop.f32.mrb[0].mxu0
        %1410 = vdwg.mxu0
        %v1411 = vadd.f32 %v1308, %v1393
        %v1412 = vadd.f32 %v1313, %v1398
        %v1413 = vadd.f32 %v1318, %v1403
        %v1414 = vadd.f32 %v1323, %v1408
        %1415 = vmatprep.subr.mxu0 0.0
        %1416 = vmatpush1.msra.mxu0 %v1136
        %1417 = vmatprep.subr.mxu0 0.0
        %1418 = vmatpush1.msra.mxu0 %v1142
        %1419 = vmatprep.subr.mxu0 0.0
        %1420 = vmatpush1.msra.mxu0 %v1148
        %1421 = vmatprep.subr.mxu0 0.0
        %1422 = vmatpush1.msra.mxu0 %v1154
        %1423 = vmatprep.subr.mxu0 0.0
        %1424 = vmatpush1.msra.mxu0 0.0
        %1425 = vmatprep.subr.mxu0 0.0
        %1426 = vmatpush1.msra.mxu0 0.0
        %1427 = vmatprep.subr.mxu0 0.0
        %1428 = vmatpush1.msra.mxu0 0.0
        %1429 = vmatprep.subr.mxu0 0.0
        %1430 = vmatpush1.msra.mxu0 0.0
        %1431 = vmatprep.subr.mxu0 0.0
        %1432 = vmatpush1.msra.mxu0 0.0
        %1433 = vmatprep.subr.mxu0 0.0
        %1434 = vmatpush1.msra.mxu0 0.0
        %1435 = vmatprep.subr.mxu0 0.0
        %1436 = vmatpush1.msra.mxu0 0.0
        %1437 = vmatprep.subr.mxu0 0.0
        %1438 = vmatpush1.msra.mxu0 0.0
        %1439 = vmatprep.subr.mxu0 0.0
        %1440 = vmatpush1.msra.mxu0 0.0
        %1441 = vmatprep.subr.mxu0 0.0
        %1442 = vmatpush1.msra.mxu0 0.0
        %1443 = vmatprep.subr.mxu0 0.0
        %1444 = vmatpush1.msra.mxu0 0.0
        %1445 = vmatprep.subr.mxu0 0.0
        %1446 = vmatpush1.msra.mxu0 0.0
        %1447 = vmatprep.subr.mxu0 0.0
        %1448 = vmatpush1.msra.mxu0 0.0
        %1449 = vmatprep.subr.mxu0 0.0
        %1450 = vmatpush1.msra.mxu0 0.0
        %1451 = vmatprep.subr.mxu0 0.0
        %1452 = vmatpush1.msra.mxu0 0.0
        %1453 = vmatprep.subr.mxu0 0.0
        %1454 = vmatpush1.msra.mxu0 0.0
        %1455 = vmatprep.subr.mxu0 0.0
        %1456 = vmatpush1.msra.mxu0 0.0
        %1457 = vmatprep.subr.mxu0 0.0
        %1458 = vmatpush1.msra.mxu0 0.0
        %1459 = vmatprep.subr.mxu0 0.0
        %1460 = vmatpush1.msra.mxu0 0.0
        %1461 = vmatprep.subr.mxu0 0.0
        %1462 = vmatpush1.msra.mxu0 0.0
        %1463 = vmatprep.subr.mxu0 0.0
        %1464 = vmatpush1.msra.mxu0 0.0
        %1465 = vmatprep.subr.mxu0 0.0
        %1466 = vmatpush1.msra.mxu0 0.0
        %1467 = vmatprep.subr.mxu0 0.0
        %1468 = vmatpush1.msra.mxu0 0.0
        %1469 = vmatprep.subr.mxu0 0.0
        %1470 = vmatpush1.msra.mxu0 0.0
        %1471 = vmatprep.subr.mxu0 0.0
        %1472 = vmatpush1.msra.mxu0 0.0
        %1473 = vmatprep.subr.mxu0 0.0
        %1474 = vmatpush1.msra.mxu0 0.0
        %1475 = vmatprep.subr.mxu0 0.0
        %1476 = vmatpush1.msra.mxu0 0.0
        %1477 = vmatprep.subr.mxu0 0.0
        %1478 = vmatpush1.msra.mxu0 0.0
        %1479 = vmatprep.mubr.f32.mxu0 0.0
        %1480 = vmatmul.mubr.f32.gmra.mrb[0].mxu0 %v799
        %v1481 = vpop.f32.mrb[0].mxu0
        %v1482 = vadd.f32 0.0, %v1481
        %v1483 = vpop.f32.mrb[0].mxu0
        %1484 = vmatprep.mubr.f32.mxu0 0.0
        %1485 = vmatmul.mubr.f32.gmra.mrb[0].mxu0 %v802
        %v1486 = vpop.f32.mrb[0].mxu0
        %v1487 = vadd.f32 0.0, %v1486
        %v1488 = vpop.f32.mrb[0].mxu0
        %1489 = vmatprep.mubr.f32.mxu0 0.0
        %1490 = vmatmul.mubr.f32.gmra.mrb[0].mxu0 %v805
        %v1491 = vpop.f32.mrb[0].mxu0
        %v1492 = vadd.f32 0.0, %v1491
        %v1493 = vpop.f32.mrb[0].mxu0
        %1494 = vmatprep.mubr.f32.mxu0 0.0
        %1495 = vmatmul.mubr.f32.gmra.mrb[0].mxu0 %v808
        %v1496 = vpop.f32.mrb[0].mxu0
        %v1497 = vadd.f32 0.0, %v1496
        %v1498 = vpop.f32.mrb[0].mxu0
        %1499 = vdwg.mxu0
        %v1500 = vadd.f32 %v1411, %v1482
        %v1501 = vadd.f32 %v1412, %v1487
        %v1502 = vadd.f32 %v1413, %v1492
        %v1503 = vadd.f32 %v1414, %v1497
        %v1505 = vlaneseq
        %v1506 = vshrl.u32 %v1505, 7
        %v1507 = vsub.s32 0, %v1506
        %v1508 = vrot.slane %v977, %v1507
        %v1510 = vadd.f32 %v1500, %v1508
        %v1511 = vadd.f32 %v1501, %v1508
        %v1512 = vadd.f32 %v1502, %v1508
        %v1513 = vadd.f32 %v1503, %v1508
        %v1514 = vmax.f32 %v1510, 0.0
        %v1515 = vmax.f32 %v1511, 0.0
        %v1516 = vmax.f32 %v1512, 0.0
        %v1517 = vmax.f32 %v1513, 0.0
        %1518 = vst [vmem:[%s275] sm:$0xff] %v1514
        %1519 = vst [vmem:[%s275 + $0x8] sm:$0xff] %v1515
        %1520 = vst [vmem:[%s275 + $0x10] sm:$0xff] %v1516
        %1521 = vst [vmem:[%s275 + $0x18] sm:$0xff] %v1517
        %s1522 = sand.u32 %s161, 1
        %s1523 = scalar_lea.sflag [#allocation4], %s1522
        %s1524 = sand.u32 %s161, 1
        %s1525 = smul.addr %s1524, 32
        %s1526 = scalar_lea.vmem [#allocation7], %s1525
        // Predicated region
        $region53: #{tpu_custom_call.1} parent=43 // pred_check
          %p1527 = pneg %p171
        $region54: #{tpu_custom_call.1} parent=43 // pred_check_branch
          %1529 = sbr.rel (%p1527) target = $region56
        $region55: #{tpu_custom_call.1} parent=43 // pred_region
          %s1530 = smul.u32 4, %s22
          %s1532 = ssub.s32 512, 512
          %1533 = vsyncadd %s1523, %s1532
          %s1534 = smul.addr %s1530, 128
          %s1535 = scalar_lea.hbm %s6, %s1534
          %s1536 = sshll.u32 %s1526, 4
          %s1537 = int_to_ptr.vmem [resolvable:$true] %s1536
          %1542 = dma.vmem_to_hbm [thread:$0]  %s1537, 512, %s1535, %s1523, 128, 128, 8
        $region56: #{tpu_custom_call.1} parent=43 // pred_fallthru
          _
      $region44: #{tpu_custom_call.1} parent=5 // pred_fallthru
        _
      %p1543 = scmp.le.s32.totalorder 2, %s17
      // Predicated region
      $region57: #{tpu_custom_call.1} parent=5 // pred_check
        %p1544 = pneg %p1543
      $region58: #{tpu_custom_call.1} parent=5 // pred_check_branch
        %1546 = sbr.rel (%p1544) target = $region60
      $region59: #{tpu_custom_call.1} parent=5 // pred_region
        %s1547 = ssub.s32 %s17, 2
        // Predicated region
        $region61: #{tpu_custom_call.1} parent=59 // pred_check
          %p1548 = pneg %p177
        $region62: #{tpu_custom_call.1} parent=59 // pred_check_branch
          %1550 = sbr.rel (%p1548) target = $region64
        $region63: #{tpu_custom_call.1} parent=59 // pred_region
          %s1551 = sand.u32 %s162, 1
          %s1552 = scalar_lea.sflag [#allocation4], %s1551
          %s1553 = sand.u32 %s162, 1
          %s1554 = smul.addr %s1553, 32
          %s1555 = scalar_lea.vmem [#allocation7], %s1554
          %1556 = dma.done %s1552, 512
        $region64: #{tpu_custom_call.1} parent=59 // pred_fallthru
          _
      $region60: #{tpu_custom_call.1} parent=5 // pred_fallthru
        _
    $region6: #{tpu_custom_call.1} parent=1 // loop_footer
      %s21 = sadd.s32 1, %s17
    $region7: #{tpu_custom_call.1} parent=1 // loop_footer_branch
      %16 = sbr.rel target = $region3
    $region8: #{tpu_custom_call.1} parent=1 // loop_exit
      _
    %1557 = vsyncpa [#allocation3], 1
    %s1558 = scalar_lea.sflag [#allocation3], 1
    %1559 = vsyncpa %s1558, 1
    %1560 = vsyncpa [#allocation6], 1
    %1561 = vsyncpa [#allocation4], 1
    %s1562 = scalar_lea.sflag [#allocation4], 1
    %1563 = vsyncpa %s1562, 1

</llo_original>
